<compile_context>
chip_gen: v7x
topology: tpu7x:2x2x1
jax: 0.10.0
libtpu: 0.0.40
codegen_flags: <defaults>
</compile_context>

<pallas_src>
import numpy as np
import jax
import jax.numpy as jnp
from jax.experimental import pallas as pl
from jax.experimental.pallas import tpu as pltpu

# ----------------------- configuration (module hyper-params) -----------------
B = 2            # batch
IN_C = 4         # in_c
OUT_C = 8        # out_c
HEAD_N = 4       # head_n
CH = OUT_C // HEAD_N   # per-head output channels of each ARFSA
S = 16           # fm_sz == H == W
HS = S // 2      # pooled spatial size


# ----------------------------- Pallas kernel ----------------------------------
def arf_fused_kernel(x_ref, pos_ref, mask_ref, gath_ref,
                     selje_ref, seljo_ref, selie_ref, selio_ref,
                     wb_ref, bb_ref, w1_ref, b1_ref, w2_ref, b2_ref,
                     o_ref):
    xs = x_ref[0]          # (IN_C*S, S)  channel-stacked input maps
    pos = pos_ref[...]     # (OUT_C*S, S) positional code tiled per channel
    mask = mask_ref[...]   # (OUT_C*S, OUT_C*S) block-diagonal 0/1 mask
    gath = gath_ref[...]   # (OUT_C*S, S) vertical tile of I16

    # residual branch: botneck 1x1 conv == one matmul with kron-expanded W
    x0 = jnp.dot(wb_ref[...], xs,
                 preferred_element_type=jnp.float32) + bb_ref[...]   # (128,16)

    def mhsa(feat, w_ref, b_ref):
        # q/k/v 1x1 convs of all 4 heads in a single MXU matmul
        proj = jnp.dot(w_ref[...], feat,
                       preferred_element_type=jnp.float32) + b_ref[...]  # (384,16)
        q = proj[0 * OUT_C * S:1 * OUT_C * S]        # (128,16)
        k = proj[1 * OUT_C * S:2 * OUT_C * S]
        v = proj[2 * OUT_C * S:3 * OUT_C * S]
        kp = k + pos
        # all channels' q @ (k+pos)^T in one 128x16x128 MXU pass; cross-channel
        # blocks are discarded by the mask + gather matmul below.
        att_full = jax.lax.dot_general(
            q, kp, (((1,), (1,)), ((), ())),
            preferred_element_type=jnp.float32)                     # (128,128)
        att = jnp.dot(att_full * mask, gath,
                      preferred_element_type=jnp.float32)           # (128,16)
        # softmax over each channel's full 16*16 map (PyTorch dim=2 view).
        # A single global shift is mathematically identical and keeps exp()
        # in range for any reasonable input.
        m = jnp.max(jnp.max(att, axis=1, keepdims=True), axis=0, keepdims=True)
        e = jnp.exp(att - m)
        denom = jnp.sum(jnp.dot(mask, e, preferred_element_type=jnp.float32),
                        axis=1, keepdims=True)       # (128,1) per-channel sum
        return (e * pl.reciprocal(denom, approx=True)) * v

    y = mhsa(xs, w1_ref, b1_ref)
    y = mhsa(y, w2_ref, b2_ref)
    y = y + x0                                       # (OUT_C*S, S)

    # fused 2x2 stride-2 max-pool via 0/1 selection matmuls (no reshapes)
    yj = jnp.maximum(
        jnp.dot(y, selje_ref[...], preferred_element_type=jnp.float32),
        jnp.dot(y, seljo_ref[...], preferred_element_type=jnp.float32))   # (128,8)
    pooled = jnp.maximum(
        jnp.dot(selie_ref[...], yj, preferred_element_type=jnp.float32),
        jnp.dot(selio_ref[...], yj, preferred_element_type=jnp.float32))  # (64,8)
    o_ref[0] = pooled


# ------------------------------- wrapper --------------------------------------
def _kron_expand(w2d):
    """kron(W, I_S): (o, i) -> (o*S, i*S) so the 1x1 conv on channel-stacked
    (C*S, S) slabs becomes a plain matmul."""
    return np.kron(np.asarray(w2d, np.float32),
                   np.eye(S, dtype=np.float32)).astype(np.float32)


def pack_constants(params, pos):
    def pack_layer(wq, bq, wk, bk, wv, bv):
        w = np.concatenate([np.asarray(wq, np.float32).reshape(OUT_C, -1),
                            np.asarray(wk, np.float32).reshape(OUT_C, -1),
                            np.asarray(wv, np.float32).reshape(OUT_C, -1)], axis=0)
        b = np.concatenate([np.asarray(bq, np.float32).reshape(-1),
                            np.asarray(bk, np.float32).reshape(-1),
                            np.asarray(bv, np.float32).reshape(-1)])
        return _kron_expand(w), np.repeat(b, S)[:, None].astype(np.float32)

    w1e, b1e = pack_layer(params["wq1"], params["bq1"], params["wk1"],
                          params["bk1"], params["wv1"], params["bv1"])
    w2e, b2e = pack_layer(params["wq2"], params["bq2"], params["wk2"],
                          params["bk2"], params["wv2"], params["bv2"])
    wbe = _kron_expand(np.asarray(params["wb"], np.float32))
    bbe = np.repeat(np.asarray(params["bb"], np.float32), S)[:, None].astype(np.float32)

    pos_t = np.tile(np.asarray(pos, np.float32), (OUT_C, 1))          # (128,16)
    grp = np.arange(OUT_C * S) // S
    mask = (grp[:, None] == grp[None, :]).astype(np.float32)          # (128,128)
    gath = np.tile(np.eye(S, dtype=np.float32), (OUT_C, 1))           # (128,16)

    selje = np.zeros((S, HS), np.float32)
    selje[2 * np.arange(HS), np.arange(HS)] = 1.0
    seljo = np.zeros((S, HS), np.float32)
    seljo[2 * np.arange(HS) + 1, np.arange(HS)] = 1.0
    rows = np.arange(OUT_C * HS)
    c_idx, p_idx = rows // HS, rows % HS
    selie = np.zeros((OUT_C * HS, OUT_C * S), np.float32)
    selie[rows, c_idx * S + 2 * p_idx] = 1.0
    selio = np.zeros((OUT_C * HS, OUT_C * S), np.float32)
    selio[rows, c_idx * S + 2 * p_idx + 1] = 1.0

    vals = [pos_t, mask, gath, selje, seljo, selie, selio,
            wbe, bbe, w1e, b1e, w2e, b2e]
    return [jnp.asarray(v) for v in vals]


def arf_bottleneck_transformer(x, pos, params):
    b_ = x.shape[0]
    consts = pack_constants(params, pos)
    x_stacked = x.reshape(b_, IN_C * S, S)            # free metadata reshape

    const_specs = [pl.BlockSpec(c.shape, lambda b: (0, 0)) for c in consts]

    out = pl.pallas_call(
        arf_fused_kernel,
        out_shape=jax.ShapeDtypeStruct((b_, OUT_C * HS, HS), jnp.float32),
        grid=(b_,),
        in_specs=[pl.BlockSpec((1, IN_C * S, S), lambda b: (b, 0, 0))]
                 + const_specs,
        out_specs=pl.BlockSpec((1, OUT_C * HS, HS), lambda b: (b, 0, 0)),
        compiler_params=pltpu.CompilerParams(
            dimension_semantics=("parallel",)),
    )(x_stacked, *consts)

    return out.reshape(b_, OUT_C, HS, HS)             # free metadata reshape


# ------------------------- parameters & pos code ------------------------------
def make_pos_code(fm_sz):
    vals = []
    for i in range(fm_sz):
        a = 1.0 / (10000.0 ** ((i // 2) / fm_sz))
        vals.append(np.sin(a) if i % 2 == 0 else np.cos(a))
    v = np.asarray(vals, dtype=np.float32)
    return v[None, :] + v[:, None]           # (fm_sz, fm_sz), same for all c/heads


def init_params(key):
    ks = jax.random.split(key, 14)

    def w(k, shape, scale=0.2):
        return scale * jax.random.normal(k, shape, dtype=jnp.float32)

    return {
        "wb":  w(ks[0], (OUT_C, IN_C)),
        "bb":  w(ks[1], (OUT_C,), 0.05),
        "wq1": w(ks[2], (HEAD_N, CH, IN_C)),
        "bq1": w(ks[3], (HEAD_N, CH), 0.05),
        "wk1": w(ks[4], (HEAD_N, CH, IN_C)),
        "bk1": w(ks[5], (HEAD_N, CH), 0.05),
        "wv1": w(ks[6], (HEAD_N, CH, IN_C)),
        "bv1": w(ks[7], (HEAD_N, CH), 0.05),
        "wq2": w(ks[8], (HEAD_N, CH, OUT_C)),
        "bq2": w(ks[9], (HEAD_N, CH), 0.05),
        "wk2": w(ks[10], (HEAD_N, CH, OUT_C)),
        "bk2": w(ks[11], (HEAD_N, CH), 0.05),
        "wv2": w(ks[12], (HEAD_N, CH, OUT_C)),
        "bv2": w(ks[13], (HEAD_N, CH), 0.05),
    }


# ----------------------------- pure numpy reference ---------------------------
def ref_forward(x, p, pos):
    def conv1x1(t, w, b):
        return np.einsum("oc,bchw->bohw", w, t) + b[None, :, None, None]

    def sa(t, wq, bq, wk, bk, wv, bv):
        q = conv1x1(t, wq, bq)
        k = conv1x1(t, wk, bk)
        v = conv1x1(t, wv, bv)
        att = (np.einsum("bciw,bcjw->bcij", q, k)
               + np.einsum("bciw,jw->bcij", q, pos))
        b_, c_, s_, _ = att.shape
        a = att.reshape(b_, c_, s_ * s_)
        a = a - a.max(axis=2, keepdims=True)
        e = np.exp(a)
        sm = (e / e.sum(axis=2, keepdims=True)).reshape(att.shape)
        return sm * v

    def mhsa(t, Wq, Bq, Wk, Bk, Wv, Bv):
        return np.concatenate(
            [sa(t, Wq[h], Bq[h], Wk[h], Bk[h], Wv[h], Bv[h])
             for h in range(HEAD_N)], axis=1)

    x0 = conv1x1(x, p["wb"], p["bb"])
    y = mhsa(x, p["wq1"], p["bq1"], p["wk1"], p["bk1"], p["wv1"], p["bv1"])
    y = mhsa(y, p["wq2"], p["bq2"], p["wk2"], p["bk2"], p["wv2"], p["bv2"])
    y = y + x0
    b_, c_, s_, _ = y.shape
    return y.reshape(b_, c_, s_ // 2, 2, s_ // 2, 2).max(axis=(3, 5))


# ----------------------------------- main --------------------------------------
if __name__ == "__main__":
    key = jax.random.PRNGKey(0)
    kx, kp = jax.random.split(key)

    x = jax.random.normal(kx, (B, IN_C, S, S), dtype=jnp.float32)
    params = init_params(kp)
    pos = jnp.asarray(make_pos_code(S), dtype=jnp.float32)

    out = arf_bottleneck_transformer(x, pos, params)
    out = jax.block_until_ready(out)

    ref = ref_forward(np.asarray(x, np.float32),
                      {k: np.asarray(v, np.float32) for k, v in params.items()},
                      np.asarray(pos, np.float32))

    assert out.shape == (B, OUT_C, S // 2, S // 2)
    np.testing.assert_allclose(np.asarray(out), ref, rtol=2e-2, atol=2e-3)
    print("KERNEL_OK")
</pallas_src>

<mosaic_0001>
module attributes {stable_mosaic.version = 11 : i64} {
  func.func @arf_fused_kernel(%arg0: i32, %arg1: memref<1x64x16xf32, #tpu.memory_space<vmem>>, %arg2: memref<128x16xf32, #tpu.memory_space<vmem>>, %arg3: memref<128x128xf32, #tpu.memory_space<vmem>>, %arg4: memref<128x16xf32, #tpu.memory_space<vmem>>, %arg5: memref<16x8xf32, #tpu.memory_space<vmem>>, %arg6: memref<16x8xf32, #tpu.memory_space<vmem>>, %arg7: memref<64x128xf32, #tpu.memory_space<vmem>>, %arg8: memref<64x128xf32, #tpu.memory_space<vmem>>, %arg9: memref<128x64xf32, #tpu.memory_space<vmem>>, %arg10: memref<128x1xf32, #tpu.memory_space<vmem>>, %arg11: memref<384x64xf32, #tpu.memory_space<vmem>>, %arg12: memref<384x1xf32, #tpu.memory_space<vmem>>, %arg13: memref<384x128xf32, #tpu.memory_space<vmem>>, %arg14: memref<384x1xf32, #tpu.memory_space<vmem>>, %arg15: memref<1x64x8xf32, #tpu.memory_space<vmem>>) attributes {dimension_semantics = [#tpu.dimension_semantics<parallel>], iteration_bounds = array<i64: 2>, scalar_prefetch = 0 : i64, scratch_operands = 0 : i64, tpu.core_type = #tpu.core_type<tc>, window_params = [{transform_indices = @transform_0, window_bounds = array<i64: 1, 64, 16>}, {pipeline_mode = #tpu.pipeline_mode<synchronous>, transform_indices = @transform_1, window_bounds = array<i64: 128, 16>}, {pipeline_mode = #tpu.pipeline_mode<synchronous>, transform_indices = @transform_2, window_bounds = array<i64: 128, 128>}, {pipeline_mode = #tpu.pipeline_mode<synchronous>, transform_indices = @transform_3, window_bounds = array<i64: 128, 16>}, {pipeline_mode = #tpu.pipeline_mode<synchronous>, transform_indices = @transform_4, window_bounds = array<i64: 16, 8>}, {pipeline_mode = #tpu.pipeline_mode<synchronous>, transform_indices = @transform_5, window_bounds = array<i64: 16, 8>}, {pipeline_mode = #tpu.pipeline_mode<synchronous>, transform_indices = @transform_6, window_bounds = array<i64: 64, 128>}, {pipeline_mode = #tpu.pipeline_mode<synchronous>, transform_indices = @transform_7, window_bounds = array<i64: 64, 128>}, {pipeline_mode = #tpu.pipeline_mode<synchronous>, transform_indices = @transform_8, window_bounds = array<i64: 128, 64>}, {pipeline_mode = #tpu.pipeline_mode<synchronous>, transform_indices = @transform_9, window_bounds = array<i64: 128, 1>}, {pipeline_mode = #tpu.pipeline_mode<synchronous>, transform_indices = @transform_10, window_bounds = array<i64: 384, 64>}, {pipeline_mode = #tpu.pipeline_mode<synchronous>, transform_indices = @transform_11, window_bounds = array<i64: 384, 1>}, {pipeline_mode = #tpu.pipeline_mode<synchronous>, transform_indices = @transform_12, window_bounds = array<i64: 384, 128>}, {pipeline_mode = #tpu.pipeline_mode<synchronous>, transform_indices = @transform_13, window_bounds = array<i64: 384, 1>}, {transform_indices = @transform_14, window_bounds = array<i64: 1, 64, 8>}]} {
    %c0 = arith.constant 0 : index
    %c0_0 = arith.constant 0 : index
    %c0_1 = arith.constant 0 : index
    %0 = vector.load %arg1[%c0, %c0_0, %c0_1] : memref<1x64x16xf32, #tpu.memory_space<vmem>>, vector<1x64x16xf32>
    %1 = vector.shape_cast %0 : vector<1x64x16xf32> to vector<64x16xf32>
    %c0_2 = arith.constant 0 : index
    %c0_3 = arith.constant 0 : index
    %2 = vector.load %arg2[%c0_2, %c0_3] : memref<128x16xf32, #tpu.memory_space<vmem>>, vector<128x16xf32>
    %c0_4 = arith.constant 0 : index
    %c0_5 = arith.constant 0 : index
    %3 = vector.load %arg3[%c0_4, %c0_5] : memref<128x128xf32, #tpu.memory_space<vmem>>, vector<128x128xf32>
    %c0_6 = arith.constant 0 : index
    %c0_7 = arith.constant 0 : index
    %4 = vector.load %arg4[%c0_6, %c0_7] : memref<128x16xf32, #tpu.memory_space<vmem>>, vector<128x16xf32>
    %c0_8 = arith.constant 0 : index
    %c0_9 = arith.constant 0 : index
    %5 = vector.load %arg9[%c0_8, %c0_9] : memref<128x64xf32, #tpu.memory_space<vmem>>, vector<128x64xf32>
    %cst = arith.constant dense<0.000000e+00> : vector<128x16xf32>
    %6 = tpu.matmul %5, %1, %cst {dimension_numbers = #tpu.dot_dimension_numbers<[1], [0], [0], [1], [0, 0, 1, 1], [], []>} : vector<128x64xf32>, vector<64x16xf32>, vector<128x16xf32> -> vector<128x16xf32>
    %c0_10 = arith.constant 0 : index
    %c0_11 = arith.constant 0 : index
    %7 = vector.load %arg10[%c0_10, %c0_11] : memref<128x1xf32, #tpu.memory_space<vmem>>, vector<128x1xf32>
    %8 = vector.broadcast %7 : vector<128x1xf32> to vector<128x16xf32>
    %9 = arith.addf %6, %8 : vector<128x16xf32>
    %c0_12 = arith.constant 0 : index
    %c0_13 = arith.constant 0 : index
    %10 = vector.load %arg11[%c0_12, %c0_13] : memref<384x64xf32, #tpu.memory_space<vmem>>, vector<384x64xf32>
    %cst_14 = arith.constant dense<0.000000e+00> : vector<384x16xf32>
    %11 = tpu.matmul %10, %1, %cst_14 {dimension_numbers = #tpu.dot_dimension_numbers<[1], [0], [0], [1], [0, 0, 1, 1], [], []>} : vector<384x64xf32>, vector<64x16xf32>, vector<384x16xf32> -> vector<384x16xf32>
    %c0_15 = arith.constant 0 : index
    %c0_16 = arith.constant 0 : index
    %12 = vector.load %arg12[%c0_15, %c0_16] : memref<384x1xf32, #tpu.memory_space<vmem>>, vector<384x1xf32>
    %13 = vector.broadcast %12 : vector<384x1xf32> to vector<384x16xf32>
    %14 = arith.addf %11, %13 : vector<384x16xf32>
    %15 = vector.extract_strided_slice %14 {offsets = [0, 0], sizes = [128, 16], strides = [1, 1]} : vector<384x16xf32> to vector<128x16xf32>
    %16 = vector.extract_strided_slice %14 {offsets = [128, 0], sizes = [128, 16], strides = [1, 1]} : vector<384x16xf32> to vector<128x16xf32>
    %17 = vector.extract_strided_slice %14 {offsets = [256, 0], sizes = [128, 16], strides = [1, 1]} : vector<384x16xf32> to vector<128x16xf32>
    %18 = arith.addf %16, %2 : vector<128x16xf32>
    %cst_17 = arith.constant dense<0.000000e+00> : vector<128x128xf32>
    %19 = tpu.matmul %15, %18, %cst_17 {dimension_numbers = #tpu.dot_dimension_numbers<[1], [1], [0], [0], [0, 0, 1, 0], [], []>} : vector<128x16xf32>, vector<128x16xf32>, vector<128x128xf32> -> vector<128x128xf32>
    %20 = arith.mulf %19, %3 : vector<128x128xf32>
    %cst_18 = arith.constant dense<0.000000e+00> : vector<128x16xf32>
    %21 = tpu.matmul %20, %4, %cst_18 {dimension_numbers = #tpu.dot_dimension_numbers<[1], [0], [0], [1], [0, 0, 1, 1], [], []>} : vector<128x128xf32>, vector<128x16xf32>, vector<128x16xf32> -> vector<128x16xf32>
    %cst_19 = arith.constant dense<0xFF800000> : vector<128xf32>
    %22 = vector.multi_reduction <maximumf>, %21, %cst_19 [1] : vector<128x16xf32> to vector<128xf32>
    %23 = vector.shape_cast %22 : vector<128xf32> to vector<128x1xf32>
    %cst_20 = arith.constant dense<0xFF800000> : vector<1xf32>
    %24 = vector.multi_reduction <maximumf>, %23, %cst_20 [0] : vector<128x1xf32> to vector<1xf32>
    %25 = vector.shape_cast %24 : vector<1xf32> to vector<1x1xf32>
    %26 = vector.broadcast %25 : vector<1x1xf32> to vector<128x16xf32>
    %27 = arith.subf %21, %26 : vector<128x16xf32>
    %28 = math.exp %27 : vector<128x16xf32>
    %cst_21 = arith.constant dense<0.000000e+00> : vector<128x16xf32>
    %29 = tpu.matmul %3, %28, %cst_21 {dimension_numbers = #tpu.dot_dimension_numbers<[1], [0], [0], [1], [0, 0, 1, 1], [], []>} : vector<128x128xf32>, vector<128x16xf32>, vector<128x16xf32> -> vector<128x16xf32>
    %cst_22 = arith.constant dense<0.000000e+00> : vector<128xf32>
    %30 = vector.multi_reduction <add>, %29, %cst_22 [1] : vector<128x16xf32> to vector<128xf32>
    %31 = vector.shape_cast %30 : vector<128xf32> to vector<128x1xf32>
    %32 = tpu.reciprocal %31 {approx = true} : vector<128x1xf32> -> vector<128x1xf32>
    %33 = vector.broadcast %32 : vector<128x1xf32> to vector<128x16xf32>
    %34 = arith.mulf %28, %33 : vector<128x16xf32>
    %35 = arith.mulf %34, %17 : vector<128x16xf32>
    %c0_23 = arith.constant 0 : index
    %c0_24 = arith.constant 0 : index
    %36 = vector.load %arg13[%c0_23, %c0_24] : memref<384x128xf32, #tpu.memory_space<vmem>>, vector<384x128xf32>
    %cst_25 = arith.constant dense<0.000000e+00> : vector<384x16xf32>
    %37 = tpu.matmul %36, %35, %cst_25 {dimension_numbers = #tpu.dot_dimension_numbers<[1], [0], [0], [1], [0, 0, 1, 1], [], []>} : vector<384x128xf32>, vector<128x16xf32>, vector<384x16xf32> -> vector<384x16xf32>
    %c0_26 = arith.constant 0 : index
    %c0_27 = arith.constant 0 : index
    %38 = vector.load %arg14[%c0_26, %c0_27] : memref<384x1xf32, #tpu.memory_space<vmem>>, vector<384x1xf32>
    %39 = vector.broadcast %38 : vector<384x1xf32> to vector<384x16xf32>
    %40 = arith.addf %37, %39 : vector<384x16xf32>
    %41 = vector.extract_strided_slice %40 {offsets = [0, 0], sizes = [128, 16], strides = [1, 1]} : vector<384x16xf32> to vector<128x16xf32>
    %42 = vector.extract_strided_slice %40 {offsets = [128, 0], sizes = [128, 16], strides = [1, 1]} : vector<384x16xf32> to vector<128x16xf32>
    %43 = vector.extract_strided_slice %40 {offsets = [256, 0], sizes = [128, 16], strides = [1, 1]} : vector<384x16xf32> to vector<128x16xf32>
    %44 = arith.addf %42, %2 : vector<128x16xf32>
    %cst_28 = arith.constant dense<0.000000e+00> : vector<128x128xf32>
    %45 = tpu.matmul %41, %44, %cst_28 {dimension_numbers = #tpu.dot_dimension_numbers<[1], [1], [0], [0], [0, 0, 1, 0], [], []>} : vector<128x16xf32>, vector<128x16xf32>, vector<128x128xf32> -> vector<128x128xf32>
    %46 = arith.mulf %45, %3 : vector<128x128xf32>
    %cst_29 = arith.constant dense<0.000000e+00> : vector<128x16xf32>
    %47 = tpu.matmul %46, %4, %cst_29 {dimension_numbers = #tpu.dot_dimension_numbers<[1], [0], [0], [1], [0, 0, 1, 1], [], []>} : vector<128x128xf32>, vector<128x16xf32>, vector<128x16xf32> -> vector<128x16xf32>
    %cst_30 = arith.constant dense<0xFF800000> : vector<128xf32>
    %48 = vector.multi_reduction <maximumf>, %47, %cst_30 [1] : vector<128x16xf32> to vector<128xf32>
    %49 = vector.shape_cast %48 : vector<128xf32> to vector<128x1xf32>
    %cst_31 = arith.constant dense<0xFF800000> : vector<1xf32>
    %50 = vector.multi_reduction <maximumf>, %49, %cst_31 [0] : vector<128x1xf32> to vector<1xf32>
    %51 = vector.shape_cast %50 : vector<1xf32> to vector<1x1xf32>
    %52 = vector.broadcast %51 : vector<1x1xf32> to vector<128x16xf32>
    %53 = arith.subf %47, %52 : vector<128x16xf32>
    %54 = math.exp %53 : vector<128x16xf32>
    %cst_32 = arith.constant dense<0.000000e+00> : vector<128x16xf32>
    %55 = tpu.matmul %3, %54, %cst_32 {dimension_numbers = #tpu.dot_dimension_numbers<[1], [0], [0], [1], [0, 0, 1, 1], [], []>} : vector<128x128xf32>, vector<128x16xf32>, vector<128x16xf32> -> vector<128x16xf32>
    %cst_33 = arith.constant dense<0.000000e+00> : vector<128xf32>
    %56 = vector.multi_reduction <add>, %55, %cst_33 [1] : vector<128x16xf32> to vector<128xf32>
    %57 = vector.shape_cast %56 : vector<128xf32> to vector<128x1xf32>
    %58 = tpu.reciprocal %57 {approx = true} : vector<128x1xf32> -> vector<128x1xf32>
    %59 = vector.broadcast %58 : vector<128x1xf32> to vector<128x16xf32>
    %60 = arith.mulf %54, %59 : vector<128x16xf32>
    %61 = arith.mulf %60, %43 : vector<128x16xf32>
    %62 = arith.addf %61, %9 : vector<128x16xf32>
    %c0_34 = arith.constant 0 : index
    %c0_35 = arith.constant 0 : index
    %63 = vector.load %arg5[%c0_34, %c0_35] : memref<16x8xf32, #tpu.memory_space<vmem>>, vector<16x8xf32>
    %cst_36 = arith.constant dense<0.000000e+00> : vector<128x8xf32>
    %64 = tpu.matmul %62, %63, %cst_36 {dimension_numbers = #tpu.dot_dimension_numbers<[1], [0], [0], [1], [0, 0, 1, 1], [], []>} : vector<128x16xf32>, vector<16x8xf32>, vector<128x8xf32> -> vector<128x8xf32>
    %c0_37 = arith.constant 0 : index
    %c0_38 = arith.constant 0 : index
    %65 = vector.load %arg6[%c0_37, %c0_38] : memref<16x8xf32, #tpu.memory_space<vmem>>, vector<16x8xf32>
    %cst_39 = arith.constant dense<0.000000e+00> : vector<128x8xf32>
    %66 = tpu.matmul %62, %65, %cst_39 {dimension_numbers = #tpu.dot_dimension_numbers<[1], [0], [0], [1], [0, 0, 1, 1], [], []>} : vector<128x16xf32>, vector<16x8xf32>, vector<128x8xf32> -> vector<128x8xf32>
    %67 = arith.maximumf %64, %66 : vector<128x8xf32>
    %c0_40 = arith.constant 0 : index
    %c0_41 = arith.constant 0 : index
    %68 = vector.load %arg7[%c0_40, %c0_41] : memref<64x128xf32, #tpu.memory_space<vmem>>, vector<64x128xf32>
    %cst_42 = arith.constant dense<0.000000e+00> : vector<64x8xf32>
    %69 = tpu.matmul %68, %67, %cst_42 {dimension_numbers = #tpu.dot_dimension_numbers<[1], [0], [0], [1], [0, 0, 1, 1], [], []>} : vector<64x128xf32>, vector<128x8xf32>, vector<64x8xf32> -> vector<64x8xf32>
    %c0_43 = arith.constant 0 : index
    %c0_44 = arith.constant 0 : index
    %70 = vector.load %arg8[%c0_43, %c0_44] : memref<64x128xf32, #tpu.memory_space<vmem>>, vector<64x128xf32>
    %cst_45 = arith.constant dense<0.000000e+00> : vector<64x8xf32>
    %71 = tpu.matmul %70, %67, %cst_45 {dimension_numbers = #tpu.dot_dimension_numbers<[1], [0], [0], [1], [0, 0, 1, 1], [], []>} : vector<64x128xf32>, vector<128x8xf32>, vector<64x8xf32> -> vector<64x8xf32>
    %72 = arith.maximumf %69, %71 : vector<64x8xf32>
    %c0_46 = arith.constant 0 : index
    %c0_47 = arith.constant 0 : index
    %c0_48 = arith.constant 0 : index
    %73 = vector.load %arg15[%c0_46, %c0_47, %c0_48] : memref<1x64x8xf32, #tpu.memory_space<vmem>>, vector<1x64x8xf32>
    %74 = vector.shape_cast %73 : vector<1x64x8xf32> to vector<64x8xf32>
    %75 = vector.shape_cast %72 : vector<64x8xf32> to vector<1x64x8xf32>
    tpu.vector_store %arg15[%c0_46, %c0_47, %c0_48], %75 {strides = array<i32>} : memref<1x64x8xf32, #tpu.memory_space<vmem>>, vector<1x64x8xf32>,
    return
  }
  func.func @transform_0(%arg0: i32) -> (i32, i32, i32) {
    %c0_i32 = arith.constant 0 : i32
    %c0_i32_0 = arith.constant 0 : i32
    %c0_i32_1 = arith.constant 0 : i32
    return %arg0, %c0_i32, %c0_i32_0 : i32, i32, i32
  }
  func.func @transform_1(%arg0: i32) -> (i32, i32) {
    %c0_i32 = arith.constant 0 : i32
    %c0_i32_0 = arith.constant 0 : i32
    %c0_i32_1 = arith.constant 0 : i32
    return %c0_i32, %c0_i32_0 : i32, i32
  }
  func.func @transform_2(%arg0: i32) -> (i32, i32) {
    %c0_i32 = arith.constant 0 : i32
    %c0_i32_0 = arith.constant 0 : i32
    %c0_i32_1 = arith.constant 0 : i32
    return %c0_i32, %c0_i32_0 : i32, i32
  }
  func.func @transform_3(%arg0: i32) -> (i32, i32) {
    %c0_i32 = arith.constant 0 : i32
    %c0_i32_0 = arith.constant 0 : i32
    %c0_i32_1 = arith.constant 0 : i32
    return %c0_i32, %c0_i32_0 : i32, i32
  }
  func.func @transform_4(%arg0: i32) -> (i32, i32) {
    %c0_i32 = arith.constant 0 : i32
    %c0_i32_0 = arith.constant 0 : i32
    %c0_i32_1 = arith.constant 0 : i32
    return %c0_i32, %c0_i32_0 : i32, i32
  }
  func.func @transform_5(%arg0: i32) -> (i32, i32) {
    %c0_i32 = arith.constant 0 : i32
    %c0_i32_0 = arith.constant 0 : i32
    %c0_i32_1 = arith.constant 0 : i32
    return %c0_i32, %c0_i32_0 : i32, i32
  }
  func.func @transform_6(%arg0: i32) -> (i32, i32) {
    %c0_i32 = arith.constant 0 : i32
    %c0_i32_0 = arith.constant 0 : i32
    %c0_i32_1 = arith.constant 0 : i32
    return %c0_i32, %c0_i32_0 : i32, i32
  }
  func.func @transform_7(%arg0: i32) -> (i32, i32) {
    %c0_i32 = arith.constant 0 : i32
    %c0_i32_0 = arith.constant 0 : i32
    %c0_i32_1 = arith.constant 0 : i32
    return %c0_i32, %c0_i32_0 : i32, i32
  }
  func.func @transform_8(%arg0: i32) -> (i32, i32) {
    %c0_i32 = arith.constant 0 : i32
    %c0_i32_0 = arith.constant 0 : i32
    %c0_i32_1 = arith.constant 0 : i32
    return %c0_i32, %c0_i32_0 : i32, i32
  }
  func.func @transform_9(%arg0: i32) -> (i32, i32) {
    %c0_i32 = arith.constant 0 : i32
    %c0_i32_0 = arith.constant 0 : i32
    %c0_i32_1 = arith.constant 0 : i32
    return %c0_i32, %c0_i32_0 : i32, i32
  }
  func.func @transform_10(%arg0: i32) -> (i32, i32) {
    %c0_i32 = arith.constant 0 : i32
    %c0_i32_0 = arith.constant 0 : i32
    %c0_i32_1 = arith.constant 0 : i32
    return %c0_i32, %c0_i32_0 : i32, i32
  }
  func.func @transform_11(%arg0: i32) -> (i32, i32) {
    %c0_i32 = arith.constant 0 : i32
    %c0_i32_0 = arith.constant 0 : i32
    %c0_i32_1 = arith.constant 0 : i32
    return %c0_i32, %c0_i32_0 : i32, i32
  }
  func.func @transform_12(%arg0: i32) -> (i32, i32) {
    %c0_i32 = arith.constant 0 : i32
    %c0_i32_0 = arith.constant 0 : i32
    %c0_i32_1 = arith.constant 0 : i32
    return %c0_i32, %c0_i32_0 : i32, i32
  }
  func.func @transform_13(%arg0: i32) -> (i32, i32) {
    %c0_i32 = arith.constant 0 : i32
    %c0_i32_0 = arith.constant 0 : i32
    %c0_i32_1 = arith.constant 0 : i32
    return %c0_i32, %c0_i32_0 : i32, i32
  }
  func.func @transform_14(%arg0: i32) -> (i32, i32, i32) {
    %c0_i32 = arith.constant 0 : i32
    %c0_i32_0 = arith.constant 0 : i32
    %c0_i32_1 = arith.constant 0 : i32
    return %arg0, %c0_i32, %c0_i32_0 : i32, i32, i32
  }
}

</mosaic_0001>

<llo_original>
// kernel: tpu_custom_call.1
$region0: #{tpu_custom_call.1}
  #allocation0 [shape = 'u32[]', space=smem, size = 0x4, offset = 0x4, fixed_abs, tag = 'smem constant byte address 0x4 - core index']
  #allocation1 [shape = 'u32[144,128]{1,0:T(1,128)}', space=vmem, size = 0x12000, scoped, tag = 'internal scratch']
  %s0 = inlined_call_operand.vmem [shape: f32[2,64,16], index: 0, kind: input, shape index: {}]
  %s1 = inlined_call_operand.vmem [shape: f32[128,16], index: 1, kind: input, shape index: {}]
  %s2 = inlined_call_operand.vmem [shape: f32[128,128], index: 2, kind: input, shape index: {}]
  %s3 = inlined_call_operand.vmem [shape: f32[128,16], index: 3, kind: input, shape index: {}]
  %s4 = inlined_call_operand.vmem [shape: f32[16,8], index: 4, kind: input, shape index: {}]
  %s5 = inlined_call_operand.vmem [shape: f32[16,8], index: 5, kind: input, shape index: {}]
  %s6 = inlined_call_operand.vmem [shape: f32[64,128], index: 6, kind: input, shape index: {}]
  %s7 = inlined_call_operand.vmem [shape: f32[64,128], index: 7, kind: input, shape index: {}]
  %s8 = inlined_call_operand.vmem [shape: f32[128,64], index: 8, kind: input, shape index: {}]
  %s9 = inlined_call_operand.vmem [shape: f32[128,1], index: 9, kind: input, shape index: {}]
  %s10 = inlined_call_operand.vmem [shape: f32[384,64], index: 10, kind: input, shape index: {}]
  %s11 = inlined_call_operand.vmem [shape: f32[384,1], index: 11, kind: input, shape index: {}]
  %s12 = inlined_call_operand.vmem [shape: f32[384,128], index: 12, kind: input, shape index: {}]
  %s13 = inlined_call_operand.vmem [shape: f32[384,1], index: 13, kind: input, shape index: {}]
  %s14 = inlined_call_operand.vmem [shape: f32[2,64,8], index: 14, kind: output, shape index: {}]
  %s15 = sld [smem:[#allocation0]]
  $region89: #{tpu_custom_call.1} parent=0
    _
  %s17 = ssub.s32 1, %s15
  %s18 = scalar_select 0, %s17, %s15
  loop: start=0, step=1, limit=4
  $region2: #{tpu_custom_call.1} parent=0 // loop_pre_header
    _
  $region3: #{tpu_custom_call.1} parent=0 // loop_header
    %s20 = sphi 0, %s24
    %p21 = scmp.ge.s32.totalorder %s20, 4
    %s30 = sphi 0, %s32
    %s33 = sphi 0, %s30
    %s34 = sphi 0, %s33
    %s50 = sphi 0, %s34
    %s54 = sphi 0, %s54
    %s56 = sphi 0, %s54
    %s57 = sphi 0, %s56
    %s71 = sphi 0, %s57
    %s75 = sphi 0, %s75
    %s77 = sphi 0, %s75
    %s78 = sphi 0, %s77
    %s92 = sphi 0, %s78
    %s96 = sphi 0, %s96
    %s98 = sphi 0, %s96
    %s99 = sphi 0, %s98
    %s113 = sphi 0, %s99
    %s117 = sphi 0, %s117
    %s119 = sphi 0, %s117
    %s120 = sphi 0, %s119
    %s134 = sphi 0, %s120
    %s138 = sphi 0, %s138
    %s140 = sphi 0, %s138
    %s141 = sphi 0, %s140
    %s155 = sphi 0, %s141
    %s159 = sphi 0, %s159
    %s161 = sphi 0, %s159
    %s162 = sphi 0, %s161
    %s176 = sphi 0, %s162
    %s180 = sphi 0, %s180
    %s182 = sphi 0, %s180
    %s183 = sphi 0, %s182
    %s197 = sphi 0, %s183
    %s201 = sphi 0, %s201
    %s203 = sphi 0, %s201
    %s204 = sphi 0, %s203
    %s218 = sphi 0, %s204
    %s222 = sphi 0, %s222
    %s224 = sphi 0, %s222
    %s225 = sphi 0, %s224
    %s239 = sphi 0, %s225
    %s243 = sphi 0, %s243
    %s245 = sphi 0, %s243
    %s246 = sphi 0, %s245
    %s260 = sphi 0, %s246
    %s264 = sphi 0, %s264
    %s266 = sphi 0, %s264
    %s267 = sphi 0, %s266
    %s281 = sphi 0, %s267
    %s285 = sphi 0, %s285
    %s287 = sphi 0, %s285
    %s288 = sphi 0, %s287
    %s302 = sphi 0, %s288
    %s306 = sphi 0, %s306
    %s308 = sphi 0, %s306
    %s309 = sphi 0, %s308
    %s323 = sphi 0, %s309
    %s329 = sphi 0, %s331
    %s332 = sphi 0, %s329
    %s333 = sphi 0, %s332
    %s349 = sphi 0, %s333
  $region4: #{tpu_custom_call.1} parent=0 // loop_header_branch
    %23 = sbr.rel (%p21) target = $region8
  $region5: #{tpu_custom_call.1} parent=0 // loop_body
    %s25 = ssub.s32 %s20, 1
    %s26 = ssub.s32 %s20, 2
    %s27 = sadd.s32 %s20, 1
    %s28 = ssub.s32 %s20, %s27
    %p29 = scmp.eq.s32.totalorder %s28, 0
    %s31 = sadd.s32 %s30, 1
    %s32 = scalar_select %p29, %s30, %s31
    %p35 = pneg %p29
    %p36 = scmp.eq.s32.totalorder %s20, 1
    %p37 = por %p35, %p36
    %p38 = scmp.ne.s32.totalorder %s30, %s33
    %p39 = scmp.eq.s32.totalorder %s20, 0
    %p40 = por %p38, %p39
    %p41 = scmp.ne.s32.totalorder %s30, %s33
    %p42 = scmp.eq.s32.totalorder %s25, 1
    %p43 = por %p41, %p42
    %p44 = scmp.ne.s32.totalorder %s33, %s34
    %p45 = scmp.eq.s32.totalorder %s25, 0
    %p46 = por %p44, %p45
    %p47 = scmp.ne.s32.totalorder %s33, %s34
    %p48 = scmp.eq.s32.totalorder %s26, 1
    %p49 = por %p47, %p48
    %p51 = scmp.ne.s32.totalorder %s34, %s50
    %p52 = scmp.eq.s32.totalorder %s26, 0
    %p53 = por %p51, %p52
    %s55 = sadd.s32 %s54, 1
    %p58 = scmp.eq.s32.totalorder %s20, 1
    %p59 = scmp.ne.s32.totalorder %s54, %s56
    %p60 = scmp.eq.s32.totalorder %s20, 0
    %p61 = por %p59, %p60
    %p62 = scmp.ne.s32.totalorder %s54, %s56
    %p63 = scmp.eq.s32.totalorder %s25, 1
    %p64 = por %p62, %p63
    %p65 = scmp.ne.s32.totalorder %s56, %s57
    %p66 = scmp.eq.s32.totalorder %s25, 0
    %p67 = por %p65, %p66
    %p68 = scmp.ne.s32.totalorder %s56, %s57
    %p69 = scmp.eq.s32.totalorder %s26, 1
    %p70 = por %p68, %p69
    %p72 = scmp.ne.s32.totalorder %s57, %s71
    %p73 = scmp.eq.s32.totalorder %s26, 0
    %p74 = por %p72, %p73
    %s76 = sadd.s32 %s75, 1
    %p79 = scmp.eq.s32.totalorder %s20, 1
    %p80 = scmp.ne.s32.totalorder %s75, %s77
    %p81 = scmp.eq.s32.totalorder %s20, 0
    %p82 = por %p80, %p81
    %p83 = scmp.ne.s32.totalorder %s75, %s77
    %p84 = scmp.eq.s32.totalorder %s25, 1
    %p85 = por %p83, %p84
    %p86 = scmp.ne.s32.totalorder %s77, %s78
    %p87 = scmp.eq.s32.totalorder %s25, 0
    %p88 = por %p86, %p87
    %p89 = scmp.ne.s32.totalorder %s77, %s78
    %p90 = scmp.eq.s32.totalorder %s26, 1
    %p91 = por %p89, %p90
    %p93 = scmp.ne.s32.totalorder %s78, %s92
    %p94 = scmp.eq.s32.totalorder %s26, 0
    %p95 = por %p93, %p94
    %s97 = sadd.s32 %s96, 1
    %p100 = scmp.eq.s32.totalorder %s20, 1
    %p101 = scmp.ne.s32.totalorder %s96, %s98
    %p102 = scmp.eq.s32.totalorder %s20, 0
    %p103 = por %p101, %p102
    %p104 = scmp.ne.s32.totalorder %s96, %s98
    %p105 = scmp.eq.s32.totalorder %s25, 1
    %p106 = por %p104, %p105
    %p107 = scmp.ne.s32.totalorder %s98, %s99
    %p108 = scmp.eq.s32.totalorder %s25, 0
    %p109 = por %p107, %p108
    %p110 = scmp.ne.s32.totalorder %s98, %s99
    %p111 = scmp.eq.s32.totalorder %s26, 1
    %p112 = por %p110, %p111
    %p114 = scmp.ne.s32.totalorder %s99, %s113
    %p115 = scmp.eq.s32.totalorder %s26, 0
    %p116 = por %p114, %p115
    %s118 = sadd.s32 %s117, 1
    %p121 = scmp.eq.s32.totalorder %s20, 1
    %p122 = scmp.ne.s32.totalorder %s117, %s119
    %p123 = scmp.eq.s32.totalorder %s20, 0
    %p124 = por %p122, %p123
    %p125 = scmp.ne.s32.totalorder %s117, %s119
    %p126 = scmp.eq.s32.totalorder %s25, 1
    %p127 = por %p125, %p126
    %p128 = scmp.ne.s32.totalorder %s119, %s120
    %p129 = scmp.eq.s32.totalorder %s25, 0
    %p130 = por %p128, %p129
    %p131 = scmp.ne.s32.totalorder %s119, %s120
    %p132 = scmp.eq.s32.totalorder %s26, 1
    %p133 = por %p131, %p132
    %p135 = scmp.ne.s32.totalorder %s120, %s134
    %p136 = scmp.eq.s32.totalorder %s26, 0
    %p137 = por %p135, %p136
    %s139 = sadd.s32 %s138, 1
    %p142 = scmp.eq.s32.totalorder %s20, 1
    %p143 = scmp.ne.s32.totalorder %s138, %s140
    %p144 = scmp.eq.s32.totalorder %s20, 0
    %p145 = por %p143, %p144
    %p146 = scmp.ne.s32.totalorder %s138, %s140
    %p147 = scmp.eq.s32.totalorder %s25, 1
    %p148 = por %p146, %p147
    %p149 = scmp.ne.s32.totalorder %s140, %s141
    %p150 = scmp.eq.s32.totalorder %s25, 0
    %p151 = por %p149, %p150
    %p152 = scmp.ne.s32.totalorder %s140, %s141
    %p153 = scmp.eq.s32.totalorder %s26, 1
    %p154 = por %p152, %p153
    %p156 = scmp.ne.s32.totalorder %s141, %s155
    %p157 = scmp.eq.s32.totalorder %s26, 0
    %p158 = por %p156, %p157
    %s160 = sadd.s32 %s159, 1
    %p163 = scmp.eq.s32.totalorder %s20, 1
    %p164 = scmp.ne.s32.totalorder %s159, %s161
    %p165 = scmp.eq.s32.totalorder %s20, 0
    %p166 = por %p164, %p165
    %p167 = scmp.ne.s32.totalorder %s159, %s161
    %p168 = scmp.eq.s32.totalorder %s25, 1
    %p169 = por %p167, %p168
    %p170 = scmp.ne.s32.totalorder %s161, %s162
    %p171 = scmp.eq.s32.totalorder %s25, 0
    %p172 = por %p170, %p171
    %p173 = scmp.ne.s32.totalorder %s161, %s162
    %p174 = scmp.eq.s32.totalorder %s26, 1
    %p175 = por %p173, %p174
    %p177 = scmp.ne.s32.totalorder %s162, %s176
    %p178 = scmp.eq.s32.totalorder %s26, 0
    %p179 = por %p177, %p178
    %s181 = sadd.s32 %s180, 1
    %p184 = scmp.eq.s32.totalorder %s20, 1
    %p185 = scmp.ne.s32.totalorder %s180, %s182
    %p186 = scmp.eq.s32.totalorder %s20, 0
    %p187 = por %p185, %p186
    %p188 = scmp.ne.s32.totalorder %s180, %s182
    %p189 = scmp.eq.s32.totalorder %s25, 1
    %p190 = por %p188, %p189
    %p191 = scmp.ne.s32.totalorder %s182, %s183
    %p192 = scmp.eq.s32.totalorder %s25, 0
    %p193 = por %p191, %p192
    %p194 = scmp.ne.s32.totalorder %s182, %s183
    %p195 = scmp.eq.s32.totalorder %s26, 1
    %p196 = por %p194, %p195
    %p198 = scmp.ne.s32.totalorder %s183, %s197
    %p199 = scmp.eq.s32.totalorder %s26, 0
    %p200 = por %p198, %p199
    %s202 = sadd.s32 %s201, 1
    %p205 = scmp.eq.s32.totalorder %s20, 1
    %p206 = scmp.ne.s32.totalorder %s201, %s203
    %p207 = scmp.eq.s32.totalorder %s20, 0
    %p208 = por %p206, %p207
    %p209 = scmp.ne.s32.totalorder %s201, %s203
    %p210 = scmp.eq.s32.totalorder %s25, 1
    %p211 = por %p209, %p210
    %p212 = scmp.ne.s32.totalorder %s203, %s204
    %p213 = scmp.eq.s32.totalorder %s25, 0
    %p214 = por %p212, %p213
    %p215 = scmp.ne.s32.totalorder %s203, %s204
    %p216 = scmp.eq.s32.totalorder %s26, 1
    %p217 = por %p215, %p216
    %p219 = scmp.ne.s32.totalorder %s204, %s218
    %p220 = scmp.eq.s32.totalorder %s26, 0
    %p221 = por %p219, %p220
    %s223 = sadd.s32 %s222, 1
    %p226 = scmp.eq.s32.totalorder %s20, 1
    %p227 = scmp.ne.s32.totalorder %s222, %s224
    %p228 = scmp.eq.s32.totalorder %s20, 0
    %p229 = por %p227, %p228
    %p230 = scmp.ne.s32.totalorder %s222, %s224
    %p231 = scmp.eq.s32.totalorder %s25, 1
    %p232 = por %p230, %p231
    %p233 = scmp.ne.s32.totalorder %s224, %s225
    %p234 = scmp.eq.s32.totalorder %s25, 0
    %p235 = por %p233, %p234
    %p236 = scmp.ne.s32.totalorder %s224, %s225
    %p237 = scmp.eq.s32.totalorder %s26, 1
    %p238 = por %p236, %p237
    %p240 = scmp.ne.s32.totalorder %s225, %s239
    %p241 = scmp.eq.s32.totalorder %s26, 0
    %p242 = por %p240, %p241
    %s244 = sadd.s32 %s243, 1
    %p247 = scmp.eq.s32.totalorder %s20, 1
    %p248 = scmp.ne.s32.totalorder %s243, %s245
    %p249 = scmp.eq.s32.totalorder %s20, 0
    %p250 = por %p248, %p249
    %p251 = scmp.ne.s32.totalorder %s243, %s245
    %p252 = scmp.eq.s32.totalorder %s25, 1
    %p253 = por %p251, %p252
    %p254 = scmp.ne.s32.totalorder %s245, %s246
    %p255 = scmp.eq.s32.totalorder %s25, 0
    %p256 = por %p254, %p255
    %p257 = scmp.ne.s32.totalorder %s245, %s246
    %p258 = scmp.eq.s32.totalorder %s26, 1
    %p259 = por %p257, %p258
    %p261 = scmp.ne.s32.totalorder %s246, %s260
    %p262 = scmp.eq.s32.totalorder %s26, 0
    %p263 = por %p261, %p262
    %s265 = sadd.s32 %s264, 1
    %p268 = scmp.eq.s32.totalorder %s20, 1
    %p269 = scmp.ne.s32.totalorder %s264, %s266
    %p270 = scmp.eq.s32.totalorder %s20, 0
    %p271 = por %p269, %p270
    %p272 = scmp.ne.s32.totalorder %s264, %s266
    %p273 = scmp.eq.s32.totalorder %s25, 1
    %p274 = por %p272, %p273
    %p275 = scmp.ne.s32.totalorder %s266, %s267
    %p276 = scmp.eq.s32.totalorder %s25, 0
    %p277 = por %p275, %p276
    %p278 = scmp.ne.s32.totalorder %s266, %s267
    %p279 = scmp.eq.s32.totalorder %s26, 1
    %p280 = por %p278, %p279
    %p282 = scmp.ne.s32.totalorder %s267, %s281
    %p283 = scmp.eq.s32.totalorder %s26, 0
    %p284 = por %p282, %p283
    %s286 = sadd.s32 %s285, 1
    %p289 = scmp.eq.s32.totalorder %s20, 1
    %p290 = scmp.ne.s32.totalorder %s285, %s287
    %p291 = scmp.eq.s32.totalorder %s20, 0
    %p292 = por %p290, %p291
    %p293 = scmp.ne.s32.totalorder %s285, %s287
    %p294 = scmp.eq.s32.totalorder %s25, 1
    %p295 = por %p293, %p294
    %p296 = scmp.ne.s32.totalorder %s287, %s288
    %p297 = scmp.eq.s32.totalorder %s25, 0
    %p298 = por %p296, %p297
    %p299 = scmp.ne.s32.totalorder %s287, %s288
    %p300 = scmp.eq.s32.totalorder %s26, 1
    %p301 = por %p299, %p300
    %p303 = scmp.ne.s32.totalorder %s288, %s302
    %p304 = scmp.eq.s32.totalorder %s26, 0
    %p305 = por %p303, %p304
    %s307 = sadd.s32 %s306, 1
    %p310 = scmp.eq.s32.totalorder %s20, 1
    %p311 = scmp.ne.s32.totalorder %s306, %s308
    %p312 = scmp.eq.s32.totalorder %s20, 0
    %p313 = por %p311, %p312
    %p314 = scmp.ne.s32.totalorder %s306, %s308
    %p315 = scmp.eq.s32.totalorder %s25, 1
    %p316 = por %p314, %p315
    %p317 = scmp.ne.s32.totalorder %s308, %s309
    %p318 = scmp.eq.s32.totalorder %s25, 0
    %p319 = por %p317, %p318
    %p320 = scmp.ne.s32.totalorder %s308, %s309
    %p321 = scmp.eq.s32.totalorder %s26, 1
    %p322 = por %p320, %p321
    %p324 = scmp.ne.s32.totalorder %s309, %s323
    %p325 = scmp.eq.s32.totalorder %s26, 0
    %p326 = por %p324, %p325
    %s327 = ssub.s32 %s20, %s27
    %p328 = scmp.eq.s32.totalorder %s327, 0
    %s330 = sadd.s32 %s329, 1
    %s331 = scalar_select %p328, %s329, %s330
    %p334 = pneg %p328
    %p335 = scmp.eq.s32.totalorder %s20, 1
    %p336 = por %p334, %p335
    %p337 = scmp.ne.s32.totalorder %s329, %s332
    %p338 = scmp.eq.s32.totalorder %s20, 0
    %p339 = por %p337, %p338
    %p340 = scmp.ne.s32.totalorder %s329, %s332
    %p341 = scmp.eq.s32.totalorder %s25, 1
    %p342 = por %p340, %p341
    %p343 = scmp.ne.s32.totalorder %s332, %s333
    %p344 = scmp.eq.s32.totalorder %s25, 0
    %p345 = por %p343, %p344
    %p346 = scmp.ne.s32.totalorder %s332, %s333
    %p347 = scmp.eq.s32.totalorder %s26, 1
    %p348 = por %p346, %p347
    %p350 = scmp.ne.s32.totalorder %s333, %s349
    %p351 = scmp.eq.s32.totalorder %s26, 0
    %p352 = por %p350, %p351
    %p353 = scmp.le.s32.totalorder 1, %s20
    %p354 = scmp.lt.s32.totalorder %s20, 3
    %p355 = pnand %p353, %p354
    %p356 = pneg %p355
    // Predicated region
    $region9: #{tpu_custom_call.1} parent=5 // pred_check
      _
    $region10: #{tpu_custom_call.1} parent=5 // pred_check_branch
      %358 = sbr.rel (%p355) target = $region12
    $region11: #{tpu_custom_call.1} parent=5 // pred_region
      %s359 = ssub.s32 %s20, 1
      // Predicated region
      $region13: #{tpu_custom_call.1} parent=11 // pred_check
        %p360 = pneg %p67
      $region14: #{tpu_custom_call.1} parent=11 // pred_check_branch
        %362 = sbr.rel (%p360) target = $region16
      $region15: #{tpu_custom_call.1} parent=11 // pred_region
        _
      $region16: #{tpu_custom_call.1} parent=11 // pred_fallthru
        _
      // Predicated region
      $region17: #{tpu_custom_call.1} parent=11 // pred_check
        %p363 = pneg %p88
      $region18: #{tpu_custom_call.1} parent=11 // pred_check_branch
        %365 = sbr.rel (%p363) target = $region20
      $region19: #{tpu_custom_call.1} parent=11 // pred_region
        _
      $region20: #{tpu_custom_call.1} parent=11 // pred_fallthru
        _
      // Predicated region
      $region21: #{tpu_custom_call.1} parent=11 // pred_check
        %p366 = pneg %p109
      $region22: #{tpu_custom_call.1} parent=11 // pred_check_branch
        %368 = sbr.rel (%p366) target = $region24
      $region23: #{tpu_custom_call.1} parent=11 // pred_region
        _
      $region24: #{tpu_custom_call.1} parent=11 // pred_fallthru
        _
      // Predicated region
      $region25: #{tpu_custom_call.1} parent=11 // pred_check
        %p369 = pneg %p130
      $region26: #{tpu_custom_call.1} parent=11 // pred_check_branch
        %371 = sbr.rel (%p369) target = $region28
      $region27: #{tpu_custom_call.1} parent=11 // pred_region
        _
      $region28: #{tpu_custom_call.1} parent=11 // pred_fallthru
        _
      // Predicated region
      $region29: #{tpu_custom_call.1} parent=11 // pred_check
        %p372 = pneg %p151
      $region30: #{tpu_custom_call.1} parent=11 // pred_check_branch
        %374 = sbr.rel (%p372) target = $region32
      $region31: #{tpu_custom_call.1} parent=11 // pred_region
        _
      $region32: #{tpu_custom_call.1} parent=11 // pred_fallthru
        _
      // Predicated region
      $region33: #{tpu_custom_call.1} parent=11 // pred_check
        %p375 = pneg %p172
      $region34: #{tpu_custom_call.1} parent=11 // pred_check_branch
        %377 = sbr.rel (%p375) target = $region36
      $region35: #{tpu_custom_call.1} parent=11 // pred_region
        _
      $region36: #{tpu_custom_call.1} parent=11 // pred_fallthru
        _
      // Predicated region
      $region37: #{tpu_custom_call.1} parent=11 // pred_check
        %p378 = pneg %p193
      $region38: #{tpu_custom_call.1} parent=11 // pred_check_branch
        %380 = sbr.rel (%p378) target = $region40
      $region39: #{tpu_custom_call.1} parent=11 // pred_region
        _
      $region40: #{tpu_custom_call.1} parent=11 // pred_fallthru
        _
      // Predicated region
      $region41: #{tpu_custom_call.1} parent=11 // pred_check
        %p381 = pneg %p214
      $region42: #{tpu_custom_call.1} parent=11 // pred_check_branch
        %383 = sbr.rel (%p381) target = $region44
      $region43: #{tpu_custom_call.1} parent=11 // pred_region
        _
      $region44: #{tpu_custom_call.1} parent=11 // pred_fallthru
        _
      // Predicated region
      $region45: #{tpu_custom_call.1} parent=11 // pred_check
        %p384 = pneg %p235
      $region46: #{tpu_custom_call.1} parent=11 // pred_check_branch
        %386 = sbr.rel (%p384) target = $region48
      $region47: #{tpu_custom_call.1} parent=11 // pred_region
        _
      $region48: #{tpu_custom_call.1} parent=11 // pred_fallthru
        _
      // Predicated region
      $region49: #{tpu_custom_call.1} parent=11 // pred_check
        %p387 = pneg %p256
      $region50: #{tpu_custom_call.1} parent=11 // pred_check_branch
        %389 = sbr.rel (%p387) target = $region52
      $region51: #{tpu_custom_call.1} parent=11 // pred_region
        _
      $region52: #{tpu_custom_call.1} parent=11 // pred_fallthru
        _
      // Predicated region
      $region53: #{tpu_custom_call.1} parent=11 // pred_check
        %p390 = pneg %p277
      $region54: #{tpu_custom_call.1} parent=11 // pred_check_branch
        %392 = sbr.rel (%p390) target = $region56
      $region55: #{tpu_custom_call.1} parent=11 // pred_region
        _
      $region56: #{tpu_custom_call.1} parent=11 // pred_fallthru
        _
      // Predicated region
      $region57: #{tpu_custom_call.1} parent=11 // pred_check
        %p393 = pneg %p298
      $region58: #{tpu_custom_call.1} parent=11 // pred_check_branch
        %395 = sbr.rel (%p393) target = $region60
      $region59: #{tpu_custom_call.1} parent=11 // pred_region
        _
      $region60: #{tpu_custom_call.1} parent=11 // pred_fallthru
        _
      // Predicated region
      $region61: #{tpu_custom_call.1} parent=11 // pred_check
        %p396 = pneg %p319
      $region62: #{tpu_custom_call.1} parent=11 // pred_check_branch
        %398 = sbr.rel (%p396) target = $region64
      $region63: #{tpu_custom_call.1} parent=11 // pred_region
        _
      $region64: #{tpu_custom_call.1} parent=11 // pred_fallthru
        _
    $region12: #{tpu_custom_call.1} parent=5 // pred_fallthru
      _
    %p399 = scmp.lt.s32.totalorder %s20, 2
    // Predicated region
    $region65: #{tpu_custom_call.1} parent=5 // pred_check
      %p400 = pneg %p399
    $region66: #{tpu_custom_call.1} parent=5 // pred_check_branch
      %402 = sbr.rel (%p400) target = $region68
    $region67: #{tpu_custom_call.1} parent=5 // pred_region
      // Predicated region
      $region69: #{tpu_custom_call.1} parent=67 // pred_check
        %p403 = pneg %p40
      $region70: #{tpu_custom_call.1} parent=67 // pred_check_branch
        %405 = sbr.rel (%p403) target = $region72
      $region71: #{tpu_custom_call.1} parent=67 // pred_region
        %p406 = scmp.lt.s32.totalorder %s20, 1
        %s407 = scalar_select %p406, %s20, 1
        %s408 = smul.addr %s407, 8
        %s409 = smul.addr %s408, 8
        %s410 = scalar_lea.vmem %s0, %s409
      $region72: #{tpu_custom_call.1} parent=67 // pred_fallthru
        _
    $region68: #{tpu_custom_call.1} parent=5 // pred_fallthru
      _
    %p411 = scmp.le.s32.totalorder 1, %s20
    %p412 = scmp.lt.s32.totalorder %s20, 3
    %p413 = pnand %p411, %p412
    %p414 = pneg %p413
    // Predicated region
    $region73: #{tpu_custom_call.1} parent=5 // pred_check
      _
    $region74: #{tpu_custom_call.1} parent=5 // pred_check_branch
      %416 = sbr.rel (%p413) target = $region76
    $region75: #{tpu_custom_call.1} parent=5 // pred_region
      %s417 = ssub.s32 %s20, 1
      %p418 = scmp.lt.s32.totalorder %s25, 1
      %s419 = scalar_select %p418, %s25, 1
      %s420 = smul.addr %s419, 8
      %s421 = smul.addr %s420, 8
      %s422 = scalar_lea.vmem %s0, %s421
      %p423 = pneg %p46
      %p424 = pneg %p43
      %p425 = pneg %p67
      %p426 = pneg %p64
      %p427 = pneg %p88
      %p428 = pneg %p85
      %p429 = pneg %p109
      %p430 = pneg %p106
      %p431 = pneg %p130
      %p432 = pneg %p127
      %p433 = pneg %p151
      %p434 = pneg %p148
      %p435 = pneg %p172
      %p436 = pneg %p169
      %p437 = pneg %p193
      %p438 = pneg %p190
      %p439 = pneg %p214
      %p440 = pneg %p211
      %p441 = pneg %p235
      %p442 = pneg %p232
      %p443 = pneg %p256
      %p444 = pneg %p253
      %p445 = pneg %p277
      %p446 = pneg %p274
      %p447 = pneg %p298
      %p448 = pneg %p295
      %p449 = pneg %p319
      %p450 = pneg %p316
      %p451 = pneg %p345
      %p452 = pneg %p342
      %p453 = scmp.lt.s32.totalorder %s25, 1
      %s454 = scalar_select %p453, %s25, 1
      %s455 = smul.addr %s454, 8
      %s456 = smul.addr %s455, 8
      %s457 = scalar_lea.vmem %s14, %s456
      %p458 = scmp.lt.s32.totalorder %s25, 1
      %s459 = scalar_select %p458, %s25, 1
      %s460 = smul.addr %s459, 8
      %s461 = smul.addr %s460, 8
      %s462 = scalar_lea.vmem %s0, %s461
      %p463 = scmp.lt.s32.totalorder %s25, 1
      %s464 = scalar_select %p463, %s25, 1
      %s465 = smul.addr %s464, 8
      %s466 = smul.addr %s465, 8
      %s467 = scalar_lea.vmem %s14, %s466
      %v468 = vld [vmem:[%s462] sm:$0xff]
      %v469 = vld [vmem:[%s462 + $0x8] sm:$0xff]
      %v470 = vld [vmem:[%s462 + $0x10] sm:$0xff]
      %v471 = vld [vmem:[%s462 + $0x18] sm:$0xff]
      %v472 = vld [vmem:[%s462 + $0x20] sm:$0xff]
      %v473 = vld [vmem:[%s462 + $0x28] sm:$0xff]
      %v474 = vld [vmem:[%s462 + $0x30] sm:$0xff]
      %v475 = vld [vmem:[%s462 + $0x38] sm:$0xff]
      %v476 = vld [vmem:[%s1] sm:$0xff]
      %v477 = vld [vmem:[%s1 + $0x8] sm:$0xff]
      %v478 = vld [vmem:[%s1 + $0x10] sm:$0xff]
      %v479 = vld [vmem:[%s1 + $0x18] sm:$0xff]
      %v480 = vld [vmem:[%s1 + $0x20] sm:$0xff]
      %v481 = vld [vmem:[%s1 + $0x28] sm:$0xff]
      %v482 = vld [vmem:[%s1 + $0x30] sm:$0xff]
      %v483 = vld [vmem:[%s1 + $0x38] sm:$0xff]
      %v484 = vld [vmem:[%s1 + $0x40] sm:$0xff]
      %v485 = vld [vmem:[%s1 + $0x48] sm:$0xff]
      %v486 = vld [vmem:[%s1 + $0x50] sm:$0xff]
      %v487 = vld [vmem:[%s1 + $0x58] sm:$0xff]
      %v488 = vld [vmem:[%s1 + $0x60] sm:$0xff]
      %v489 = vld [vmem:[%s1 + $0x68] sm:$0xff]
      %v490 = vld [vmem:[%s1 + $0x70] sm:$0xff]
      %v491 = vld [vmem:[%s1 + $0x78] sm:$0xff]
      %v492 = vld [vmem:[%s2] sm:$0xff]
      %v493 = vld [vmem:[%s2 + $0x8] sm:$0xff]
      %v494 = vld [vmem:[%s2 + $0x10] sm:$0xff]
      %v495 = vld [vmem:[%s2 + $0x18] sm:$0xff]
      %v496 = vld [vmem:[%s2 + $0x20] sm:$0xff]
      %v497 = vld [vmem:[%s2 + $0x28] sm:$0xff]
      %v498 = vld [vmem:[%s2 + $0x30] sm:$0xff]
      %v499 = vld [vmem:[%s2 + $0x38] sm:$0xff]
      %v500 = vld [vmem:[%s2 + $0x40] sm:$0xff]
      %v501 = vld [vmem:[%s2 + $0x48] sm:$0xff]
      %v502 = vld [vmem:[%s2 + $0x50] sm:$0xff]
      %v503 = vld [vmem:[%s2 + $0x58] sm:$0xff]
      %v504 = vld [vmem:[%s2 + $0x60] sm:$0xff]
      %v505 = vld [vmem:[%s2 + $0x68] sm:$0xff]
      %v506 = vld [vmem:[%s2 + $0x70] sm:$0xff]
      %v507 = vld [vmem:[%s2 + $0x78] sm:$0xff]
      %v508 = vld [vmem:[%s3] sm:$0xff]
      %v509 = vld [vmem:[%s3 + $0x8] sm:$0xff]
      %v510 = vld [vmem:[%s3 + $0x10] sm:$0xff]
      %v511 = vld [vmem:[%s3 + $0x18] sm:$0xff]
      %v512 = vld [vmem:[%s3 + $0x20] sm:$0xff]
      %v513 = vld [vmem:[%s3 + $0x28] sm:$0xff]
      %v514 = vld [vmem:[%s3 + $0x30] sm:$0xff]
      %v515 = vld [vmem:[%s3 + $0x38] sm:$0xff]
      %v516 = vld [vmem:[%s3 + $0x40] sm:$0xff]
      %v517 = vld [vmem:[%s3 + $0x48] sm:$0xff]
      %v518 = vld [vmem:[%s3 + $0x50] sm:$0xff]
      %v519 = vld [vmem:[%s3 + $0x58] sm:$0xff]
      %v520 = vld [vmem:[%s3 + $0x60] sm:$0xff]
      %v521 = vld [vmem:[%s3 + $0x68] sm:$0xff]
      %v522 = vld [vmem:[%s3 + $0x70] sm:$0xff]
      %v523 = vld [vmem:[%s3 + $0x78] sm:$0xff]
      %v524 = vld [vmem:[%s8] sm:$0xff]
      %v525 = vld [vmem:[%s8 + $0x8] sm:$0xff]
      %v526 = vld [vmem:[%s8 + $0x10] sm:$0xff]
      %v527 = vld [vmem:[%s8 + $0x18] sm:$0xff]
      %v528 = vld [vmem:[%s8 + $0x20] sm:$0xff]
      %v529 = vld [vmem:[%s8 + $0x28] sm:$0xff]
      %v530 = vld [vmem:[%s8 + $0x30] sm:$0xff]
      %v531 = vld [vmem:[%s8 + $0x38] sm:$0xff]
      %v532 = vld [vmem:[%s8 + $0x40] sm:$0xff]
      %v533 = vld [vmem:[%s8 + $0x48] sm:$0xff]
      %v534 = vld [vmem:[%s8 + $0x50] sm:$0xff]
      %v535 = vld [vmem:[%s8 + $0x58] sm:$0xff]
      %v536 = vld [vmem:[%s8 + $0x60] sm:$0xff]
      %v537 = vld [vmem:[%s8 + $0x68] sm:$0xff]
      %v538 = vld [vmem:[%s8 + $0x70] sm:$0xff]
      %v539 = vld [vmem:[%s8 + $0x78] sm:$0xff]
      %v540 = vld [vmem:[%s9] sm:$0xff]
      %v541 = vld [vmem:[%s9 + $0x8] sm:$0xff]
      %v542 = vld [vmem:[%s9 + $0x10] sm:$0xff]
      %v543 = vld [vmem:[%s9 + $0x18] sm:$0xff]
      %v544 = vld [vmem:[%s9 + $0x20] sm:$0xff]
      %v545 = vld [vmem:[%s9 + $0x28] sm:$0xff]
      %v546 = vld [vmem:[%s9 + $0x30] sm:$0xff]
      %v547 = vld [vmem:[%s9 + $0x38] sm:$0xff]
      %v548 = vld [vmem:[%s9 + $0x40] sm:$0xff]
      %v549 = vld [vmem:[%s9 + $0x48] sm:$0xff]
      %v550 = vld [vmem:[%s9 + $0x50] sm:$0xff]
      %v551 = vld [vmem:[%s9 + $0x58] sm:$0xff]
      %v552 = vld [vmem:[%s9 + $0x60] sm:$0xff]
      %v553 = vld [vmem:[%s9 + $0x68] sm:$0xff]
      %v554 = vld [vmem:[%s9 + $0x70] sm:$0xff]
      %v555 = vld [vmem:[%s9 + $0x78] sm:$0xff]
      %557 = vset.pattern.permute.xlu0 0
      %558 = vperm.xlu0 %557, %v540
      %v559 = vpop.permute.xlu0 %558
      %562 = vset.pattern.permute.xlu0 0
      %563 = vperm.xlu0 %562, %v541
      %v564 = vpop.permute.xlu0 %563
      %567 = vset.pattern.permute.xlu0 0
      %568 = vperm.xlu0 %567, %v542
      %v569 = vpop.permute.xlu0 %568
      %572 = vset.pattern.permute.xlu0 0
      %573 = vperm.xlu0 %572, %v543
      %v574 = vpop.permute.xlu0 %573
      %577 = vset.pattern.permute.xlu0 0
      %578 = vperm.xlu0 %577, %v544
      %v579 = vpop.permute.xlu0 %578
      %582 = vset.pattern.permute.xlu0 0
      %583 = vperm.xlu0 %582, %v545
      %v584 = vpop.permute.xlu0 %583
      %587 = vset.pattern.permute.xlu0 0
      %588 = vperm.xlu0 %587, %v546
      %v589 = vpop.permute.xlu0 %588
      %592 = vset.pattern.permute.xlu0 0
      %593 = vperm.xlu0 %592, %v547
      %v594 = vpop.permute.xlu0 %593
      %597 = vset.pattern.permute.xlu0 0
      %598 = vperm.xlu0 %597, %v548
      %v599 = vpop.permute.xlu0 %598
      %602 = vset.pattern.permute.xlu0 0
      %603 = vperm.xlu0 %602, %v549
      %v604 = vpop.permute.xlu0 %603
      %607 = vset.pattern.permute.xlu0 0
      %608 = vperm.xlu0 %607, %v550
      %v609 = vpop.permute.xlu0 %608
      %612 = vset.pattern.permute.xlu0 0
      %613 = vperm.xlu0 %612, %v551
      %v614 = vpop.permute.xlu0 %613
      %617 = vset.pattern.permute.xlu0 0
      %618 = vperm.xlu0 %617, %v552
      %v619 = vpop.permute.xlu0 %618
      %622 = vset.pattern.permute.xlu0 0
      %623 = vperm.xlu0 %622, %v553
      %v624 = vpop.permute.xlu0 %623
      %627 = vset.pattern.permute.xlu0 0
      %628 = vperm.xlu0 %627, %v554
      %v629 = vpop.permute.xlu0 %628
      %632 = vset.pattern.permute.xlu0 0
      %633 = vperm.xlu0 %632, %v555
      %v634 = vpop.permute.xlu0 %633
      %vm636 = vcmask 523264
      %v638 = vsel %vm636, %v524, 0
      %v641 = vsel %vm636, %v525, 0
      %v644 = vsel %vm636, %v526, 0
      %v647 = vsel %vm636, %v527, 0
      %v650 = vsel %vm636, %v528, 0
      %v653 = vsel %vm636, %v529, 0
      %v656 = vsel %vm636, %v530, 0
      %v659 = vsel %vm636, %v531, 0
      %v662 = vsel %vm636, %v532, 0
      %v665 = vsel %vm636, %v533, 0
      %v668 = vsel %vm636, %v534, 0
      %v671 = vsel %vm636, %v535, 0
      %v674 = vsel %vm636, %v536, 0
      %v677 = vsel %vm636, %v537, 0
      %v680 = vsel %vm636, %v538, 0
      %v683 = vsel %vm636, %v539, 0
      %685 = vmatprep.subr.mxu0 0.0
      %686 = vmatpush1.msra.mxu0 %v468
      %687 = vmatprep.subr.mxu0 0.0
      %688 = vmatpush1.msra.mxu0 %v469
      %689 = vmatprep.subr.mxu0 0.0
      %690 = vmatpush1.msra.mxu0 %v470
      %691 = vmatprep.subr.mxu0 0.0
      %692 = vmatpush1.msra.mxu0 %v471
      %693 = vmatprep.subr.mxu0 0.0
      %694 = vmatpush1.msra.mxu0 %v472
      %695 = vmatprep.subr.mxu0 0.0
      %696 = vmatpush1.msra.mxu0 %v473
      %697 = vmatprep.subr.mxu0 0.0
      %698 = vmatpush1.msra.mxu0 %v474
      %699 = vmatprep.subr.mxu0 0.0
      %700 = vmatpush1.msra.mxu0 %v475
      %701 = vmatprep.subr.mxu0 0.0
      %702 = vmatpush1.msra.mxu0 0.0
      %703 = vmatprep.subr.mxu0 0.0
      %704 = vmatpush1.msra.mxu0 0.0
      %705 = vmatprep.subr.mxu0 0.0
      %706 = vmatpush1.msra.mxu0 0.0
      %707 = vmatprep.subr.mxu0 0.0
      %708 = vmatpush1.msra.mxu0 0.0
      %709 = vmatprep.subr.mxu0 0.0
      %710 = vmatpush1.msra.mxu0 0.0
      %711 = vmatprep.subr.mxu0 0.0
      %712 = vmatpush1.msra.mxu0 0.0
      %713 = vmatprep.subr.mxu0 0.0
      %714 = vmatpush1.msra.mxu0 0.0
      %715 = vmatprep.subr.mxu0 0.0
      %716 = vmatpush1.msra.mxu0 0.0
      %717 = vmatprep.subr.mxu0 0.0
      %718 = vmatpush1.msra.mxu0 0.0
      %719 = vmatprep.subr.mxu0 0.0
      %720 = vmatpush1.msra.mxu0 0.0
      %721 = vmatprep.subr.mxu0 0.0
      %722 = vmatpush1.msra.mxu0 0.0
      %723 = vmatprep.subr.mxu0 0.0
      %724 = vmatpush1.msra.mxu0 0.0
      %725 = vmatprep.subr.mxu0 0.0
      %726 = vmatpush1.msra.mxu0 0.0
      %727 = vmatprep.subr.mxu0 0.0
      %728 = vmatpush1.msra.mxu0 0.0
      %729 = vmatprep.subr.mxu0 0.0
      %730 = vmatpush1.msra.mxu0 0.0
      %731 = vmatprep.subr.mxu0 0.0
      %732 = vmatpush1.msra.mxu0 0.0
      %733 = vmatprep.subr.mxu0 0.0
      %734 = vmatpush1.msra.mxu0 0.0
      %735 = vmatprep.subr.mxu0 0.0
      %736 = vmatpush1.msra.mxu0 0.0
      %737 = vmatprep.subr.mxu0 0.0
      %738 = vmatpush1.msra.mxu0 0.0
      %739 = vmatprep.subr.mxu0 0.0
      %740 = vmatpush1.msra.mxu0 0.0
      %741 = vmatprep.subr.mxu0 0.0
      %742 = vmatpush1.msra.mxu0 0.0
      %743 = vmatprep.subr.mxu0 0.0
      %744 = vmatpush1.msra.mxu0 0.0
      %745 = vmatprep.subr.mxu0 0.0
      %746 = vmatpush1.msra.mxu0 0.0
      %747 = vmatprep.subr.mxu0 0.0
      %748 = vmatpush1.msra.mxu0 0.0
      %749 = vmatprep.mubr.f32.mxu0 0.0
      %750 = vmatmul.mubr.f32.gmra.mrb[0].mxu0 %v638
      %v751 = vpop.f32.mrb[0].mxu0
      %v752 = vadd.f32 %v559, %v751
      %v753 = vpop.f32.mrb[0].mxu0
      %754 = vmatprep.mubr.f32.mxu0 0.0
      %755 = vmatmul.mubr.f32.gmra.mrb[0].mxu0 %v641
      %v756 = vpop.f32.mrb[0].mxu0
      %v757 = vadd.f32 %v564, %v756
      %v758 = vpop.f32.mrb[0].mxu0
      %759 = vmatprep.mubr.f32.mxu0 0.0
      %760 = vmatmul.mubr.f32.gmra.mrb[0].mxu0 %v644
      %v761 = vpop.f32.mrb[0].mxu0
      %v762 = vadd.f32 %v569, %v761
      %v763 = vpop.f32.mrb[0].mxu0
      %764 = vmatprep.mubr.f32.mxu0 0.0
      %765 = vmatmul.mubr.f32.gmra.mrb[0].mxu0 %v647
      %v766 = vpop.f32.mrb[0].mxu0
      %v767 = vadd.f32 %v574, %v766
      %v768 = vpop.f32.mrb[0].mxu0
      %769 = vmatprep.mubr.f32.mxu0 0.0
      %770 = vmatmul.mubr.f32.gmra.mrb[0].mxu0 %v650
      %v771 = vpop.f32.mrb[0].mxu0
      %v772 = vadd.f32 %v579, %v771
      %v773 = vpop.f32.mrb[0].mxu0
      %774 = vmatprep.mubr.f32.mxu0 0.0
      %775 = vmatmul.mubr.f32.gmra.mrb[0].mxu0 %v653
      %v776 = vpop.f32.mrb[0].mxu0
      %v777 = vadd.f32 %v584, %v776
      %v778 = vpop.f32.mrb[0].mxu0
      %779 = vmatprep.mubr.f32.mxu0 0.0
      %780 = vmatmul.mubr.f32.gmra.mrb[0].mxu0 %v656
      %v781 = vpop.f32.mrb[0].mxu0
      %v782 = vadd.f32 %v589, %v781
      %v783 = vpop.f32.mrb[0].mxu0
      %784 = vmatprep.mubr.f32.mxu0 0.0
      %785 = vmatmul.mubr.f32.gmra.mrb[0].mxu0 %v659
      %v786 = vpop.f32.mrb[0].mxu0
      %v787 = vadd.f32 %v594, %v786
      %v788 = vpop.f32.mrb[0].mxu0
      %789 = vmatprep.mubr.f32.mxu0 0.0
      %790 = vmatmul.mubr.f32.gmra.mrb[0].mxu0 %v662
      %v791 = vpop.f32.mrb[0].mxu0
      %v792 = vadd.f32 %v599, %v791
      %v793 = vpop.f32.mrb[0].mxu0
      %794 = vmatprep.mubr.f32.mxu0 0.0
      %795 = vmatmul.mubr.f32.gmra.mrb[0].mxu0 %v665
      %v796 = vpop.f32.mrb[0].mxu0
      %v797 = vadd.f32 %v604, %v796
      %v798 = vpop.f32.mrb[0].mxu0
      %799 = vmatprep.mubr.f32.mxu0 0.0
      %800 = vmatmul.mubr.f32.gmra.mrb[0].mxu0 %v668
      %v801 = vpop.f32.mrb[0].mxu0
      %v802 = vadd.f32 %v609, %v801
      %v803 = vpop.f32.mrb[0].mxu0
      %804 = vmatprep.mubr.f32.mxu0 0.0
      %805 = vmatmul.mubr.f32.gmra.mrb[0].mxu0 %v671
      %v806 = vpop.f32.mrb[0].mxu0
      %v807 = vadd.f32 %v614, %v806
      %v808 = vpop.f32.mrb[0].mxu0
      %809 = vmatprep.mubr.f32.mxu0 0.0
      %810 = vmatmul.mubr.f32.gmra.mrb[0].mxu0 %v674
      %v811 = vpop.f32.mrb[0].mxu0
      %v812 = vadd.f32 %v619, %v811
      %v813 = vpop.f32.mrb[0].mxu0
      %814 = vmatprep.mubr.f32.mxu0 0.0
      %815 = vmatmul.mubr.f32.gmra.mrb[0].mxu0 %v677
      %v816 = vpop.f32.mrb[0].mxu0
      %v817 = vadd.f32 %v624, %v816
      %v818 = vpop.f32.mrb[0].mxu0
      %819 = vmatprep.mubr.f32.mxu0 0.0
      %820 = vmatmul.mubr.f32.gmra.mrb[0].mxu0 %v680
      %v821 = vpop.f32.mrb[0].mxu0
      %v822 = vadd.f32 %v629, %v821
      %v823 = vpop.f32.mrb[0].mxu0
      %824 = vmatprep.mubr.f32.mxu0 0.0
      %825 = vmatmul.mubr.f32.gmra.mrb[0].mxu0 %v683
      %v826 = vpop.f32.mrb[0].mxu0
      %v827 = vadd.f32 %v634, %v826
      %v828 = vpop.f32.mrb[0].mxu0
      %829 = vdwg.mxu0
      %v830 = vld [vmem:[%s10] sm:$0xff]
      %v831 = vld [vmem:[%s10 + $0x8] sm:$0xff]
      %v832 = vld [vmem:[%s10 + $0x10] sm:$0xff]
      %v833 = vld [vmem:[%s10 + $0x18] sm:$0xff]
      %v834 = vld [vmem:[%s10 + $0x20] sm:$0xff]
      %v835 = vld [vmem:[%s10 + $0x28] sm:$0xff]
      %v836 = vld [vmem:[%s10 + $0x30] sm:$0xff]
      %v837 = vld [vmem:[%s10 + $0x38] sm:$0xff]
      %v838 = vld [vmem:[%s10 + $0x40] sm:$0xff]
      %v839 = vld [vmem:[%s10 + $0x48] sm:$0xff]
      %v840 = vld [vmem:[%s10 + $0x50] sm:$0xff]
      %v841 = vld [vmem:[%s10 + $0x58] sm:$0xff]
      %v842 = vld [vmem:[%s10 + $0x60] sm:$0xff]
      %v843 = vld [vmem:[%s10 + $0x68] sm:$0xff]
      %v844 = vld [vmem:[%s10 + $0x70] sm:$0xff]
      %v845 = vld [vmem:[%s10 + $0x78] sm:$0xff]
      %v846 = vld [vmem:[%s10 + $0x80] sm:$0xff]
      %v847 = vld [vmem:[%s10 + $0x88] sm:$0xff]
      %v848 = vld [vmem:[%s10 + $0x90] sm:$0xff]
      %v849 = vld [vmem:[%s10 + $0x98] sm:$0xff]
      %v850 = vld [vmem:[%s10 + $0xa0] sm:$0xff]
      %v851 = vld [vmem:[%s10 + $0xa8] sm:$0xff]
      %v852 = vld [vmem:[%s10 + $0xb0] sm:$0xff]
      %v853 = vld [vmem:[%s10 + $0xb8] sm:$0xff]
      %v854 = vld [vmem:[%s10 + $0xc0] sm:$0xff]
      %v855 = vld [vmem:[%s10 + $0xc8] sm:$0xff]
      %v856 = vld [vmem:[%s10 + $0xd0] sm:$0xff]
      %v857 = vld [vmem:[%s10 + $0xd8] sm:$0xff]
      %v858 = vld [vmem:[%s10 + $0xe0] sm:$0xff]
      %v859 = vld [vmem:[%s10 + $0xe8] sm:$0xff]
      %v860 = vld [vmem:[%s10 + $0xf0] sm:$0xff]
      %v861 = vld [vmem:[%s10 + $0xf8] sm:$0xff]
      %v862 = vld [vmem:[%s10 + $0x100] sm:$0xff]
      %v863 = vld [vmem:[%s10 + $0x108] sm:$0xff]
      %v864 = vld [vmem:[%s10 + $0x110] sm:$0xff]
      %v865 = vld [vmem:[%s10 + $0x118] sm:$0xff]
      %v866 = vld [vmem:[%s10 + $0x120] sm:$0xff]
      %v867 = vld [vmem:[%s10 + $0x128] sm:$0xff]
      %v868 = vld [vmem:[%s10 + $0x130] sm:$0xff]
      %v869 = vld [vmem:[%s10 + $0x138] sm:$0xff]
      %v870 = vld [vmem:[%s10 + $0x140] sm:$0xff]
      %v871 = vld [vmem:[%s10 + $0x148] sm:$0xff]
      %v872 = vld [vmem:[%s10 + $0x150] sm:$0xff]
      %v873 = vld [vmem:[%s10 + $0x158] sm:$0xff]
      %v874 = vld [vmem:[%s10 + $0x160] sm:$0xff]
      %v875 = vld [vmem:[%s10 + $0x168] sm:$0xff]
      %v876 = vld [vmem:[%s10 + $0x170] sm:$0xff]
      %v877 = vld [vmem:[%s10 + $0x178] sm:$0xff]
      %v878 = vld [vmem:[%s11] sm:$0xff]
      %v879 = vld [vmem:[%s11 + $0x8] sm:$0xff]
      %v880 = vld [vmem:[%s11 + $0x10] sm:$0xff]
      %v881 = vld [vmem:[%s11 + $0x18] sm:$0xff]
      %v882 = vld [vmem:[%s11 + $0x20] sm:$0xff]
      %v883 = vld [vmem:[%s11 + $0x28] sm:$0xff]
      %v884 = vld [vmem:[%s11 + $0x30] sm:$0xff]
      %v885 = vld [vmem:[%s11 + $0x38] sm:$0xff]
      %v886 = vld [vmem:[%s11 + $0x40] sm:$0xff]
      %v887 = vld [vmem:[%s11 + $0x48] sm:$0xff]
      %v888 = vld [vmem:[%s11 + $0x50] sm:$0xff]
      %v889 = vld [vmem:[%s11 + $0x58] sm:$0xff]
      %v890 = vld [vmem:[%s11 + $0x60] sm:$0xff]
      %v891 = vld [vmem:[%s11 + $0x68] sm:$0xff]
      %v892 = vld [vmem:[%s11 + $0x70] sm:$0xff]
      %v893 = vld [vmem:[%s11 + $0x78] sm:$0xff]
      %v894 = vld [vmem:[%s11 + $0x80] sm:$0xff]
      %v895 = vld [vmem:[%s11 + $0x88] sm:$0xff]
      %v896 = vld [vmem:[%s11 + $0x90] sm:$0xff]
      %v897 = vld [vmem:[%s11 + $0x98] sm:$0xff]
      %v898 = vld [vmem:[%s11 + $0xa0] sm:$0xff]
      %v899 = vld [vmem:[%s11 + $0xa8] sm:$0xff]
      %v900 = vld [vmem:[%s11 + $0xb0] sm:$0xff]
      %v901 = vld [vmem:[%s11 + $0xb8] sm:$0xff]
      %v902 = vld [vmem:[%s11 + $0xc0] sm:$0xff]
      %v903 = vld [vmem:[%s11 + $0xc8] sm:$0xff]
      %v904 = vld [vmem:[%s11 + $0xd0] sm:$0xff]
      %v905 = vld [vmem:[%s11 + $0xd8] sm:$0xff]
      %v906 = vld [vmem:[%s11 + $0xe0] sm:$0xff]
      %v907 = vld [vmem:[%s11 + $0xe8] sm:$0xff]
      %v908 = vld [vmem:[%s11 + $0xf0] sm:$0xff]
      %v909 = vld [vmem:[%s11 + $0xf8] sm:$0xff]
      %v910 = vld [vmem:[%s11 + $0x100] sm:$0xff]
      %v911 = vld [vmem:[%s11 + $0x108] sm:$0xff]
      %v912 = vld [vmem:[%s11 + $0x110] sm:$0xff]
      %v913 = vld [vmem:[%s11 + $0x118] sm:$0xff]
      %v914 = vld [vmem:[%s11 + $0x120] sm:$0xff]
      %v915 = vld [vmem:[%s11 + $0x128] sm:$0xff]
      %v916 = vld [vmem:[%s11 + $0x130] sm:$0xff]
      %v917 = vld [vmem:[%s11 + $0x138] sm:$0xff]
      %v918 = vld [vmem:[%s11 + $0x140] sm:$0xff]
      %v919 = vld [vmem:[%s11 + $0x148] sm:$0xff]
      %v920 = vld [vmem:[%s11 + $0x150] sm:$0xff]
      %v921 = vld [vmem:[%s11 + $0x158] sm:$0xff]
      %v922 = vld [vmem:[%s11 + $0x160] sm:$0xff]
      %v923 = vld [vmem:[%s11 + $0x168] sm:$0xff]
      %v924 = vld [vmem:[%s11 + $0x170] sm:$0xff]
      %v925 = vld [vmem:[%s11 + $0x178] sm:$0xff]
      %927 = vset.pattern.permute.xlu0 0
      %928 = vperm.xlu0 %927, %v878
      %v929 = vpop.permute.xlu0 %928
      %932 = vset.pattern.permute.xlu0 0
      %933 = vperm.xlu0 %932, %v879
      %v934 = vpop.permute.xlu0 %933
      %937 = vset.pattern.permute.xlu0 0
      %938 = vperm.xlu0 %937, %v880
      %v939 = vpop.permute.xlu0 %938
      %942 = vset.pattern.permute.xlu0 0
      %943 = vperm.xlu0 %942, %v881
      %v944 = vpop.permute.xlu0 %943
      %947 = vset.pattern.permute.xlu0 0
      %948 = vperm.xlu0 %947, %v882
      %v949 = vpop.permute.xlu0 %948
      %952 = vset.pattern.permute.xlu0 0
      %953 = vperm.xlu0 %952, %v883
      %v954 = vpop.permute.xlu0 %953
      %957 = vset.pattern.permute.xlu0 0
      %958 = vperm.xlu0 %957, %v884
      %v959 = vpop.permute.xlu0 %958
      %962 = vset.pattern.permute.xlu0 0
      %963 = vperm.xlu0 %962, %v885
      %v964 = vpop.permute.xlu0 %963
      %967 = vset.pattern.permute.xlu0 0
      %968 = vperm.xlu0 %967, %v886
      %v969 = vpop.permute.xlu0 %968
      %972 = vset.pattern.permute.xlu0 0
      %973 = vperm.xlu0 %972, %v887
      %v974 = vpop.permute.xlu0 %973
      %977 = vset.pattern.permute.xlu0 0
      %978 = vperm.xlu0 %977, %v888
      %v979 = vpop.permute.xlu0 %978
      %982 = vset.pattern.permute.xlu0 0
      %983 = vperm.xlu0 %982, %v889
      %v984 = vpop.permute.xlu0 %983
      %987 = vset.pattern.permute.xlu0 0
      %988 = vperm.xlu0 %987, %v890
      %v989 = vpop.permute.xlu0 %988
      %992 = vset.pattern.permute.xlu0 0
      %993 = vperm.xlu0 %992, %v891
      %v994 = vpop.permute.xlu0 %993
      %997 = vset.pattern.permute.xlu0 0
      %998 = vperm.xlu0 %997, %v892
      %v999 = vpop.permute.xlu0 %998
      %1002 = vset.pattern.permute.xlu0 0
      %1003 = vperm.xlu0 %1002, %v893
      %v1004 = vpop.permute.xlu0 %1003
      %1007 = vset.pattern.permute.xlu0 0
      %1008 = vperm.xlu0 %1007, %v894
      %v1009 = vpop.permute.xlu0 %1008
      %1012 = vset.pattern.permute.xlu0 0
      %1013 = vperm.xlu0 %1012, %v895
      %v1014 = vpop.permute.xlu0 %1013
      %1017 = vset.pattern.permute.xlu0 0
      %1018 = vperm.xlu0 %1017, %v896
      %v1019 = vpop.permute.xlu0 %1018
      %1022 = vset.pattern.permute.xlu0 0
      %1023 = vperm.xlu0 %1022, %v897
      %v1024 = vpop.permute.xlu0 %1023
      %1027 = vset.pattern.permute.xlu0 0
      %1028 = vperm.xlu0 %1027, %v898
      %v1029 = vpop.permute.xlu0 %1028
      %1032 = vset.pattern.permute.xlu0 0
      %1033 = vperm.xlu0 %1032, %v899
      %v1034 = vpop.permute.xlu0 %1033
      %1037 = vset.pattern.permute.xlu0 0
      %1038 = vperm.xlu0 %1037, %v900
      %v1039 = vpop.permute.xlu0 %1038
      %1042 = vset.pattern.permute.xlu0 0
      %1043 = vperm.xlu0 %1042, %v901
      %v1044 = vpop.permute.xlu0 %1043
      %1047 = vset.pattern.permute.xlu0 0
      %1048 = vperm.xlu0 %1047, %v902
      %v1049 = vpop.permute.xlu0 %1048
      %1052 = vset.pattern.permute.xlu0 0
      %1053 = vperm.xlu0 %1052, %v903
      %v1054 = vpop.permute.xlu0 %1053
      %1057 = vset.pattern.permute.xlu0 0
      %1058 = vperm.xlu0 %1057, %v904
      %v1059 = vpop.permute.xlu0 %1058
      %1062 = vset.pattern.permute.xlu0 0
      %1063 = vperm.xlu0 %1062, %v905
      %v1064 = vpop.permute.xlu0 %1063
      %1067 = vset.pattern.permute.xlu0 0
      %1068 = vperm.xlu0 %1067, %v906
      %v1069 = vpop.permute.xlu0 %1068
      %1072 = vset.pattern.permute.xlu0 0
      %1073 = vperm.xlu0 %1072, %v907
      %v1074 = vpop.permute.xlu0 %1073
      %1077 = vset.pattern.permute.xlu0 0
      %1078 = vperm.xlu0 %1077, %v908
      %v1079 = vpop.permute.xlu0 %1078
      %1082 = vset.pattern.permute.xlu0 0
      %1083 = vperm.xlu0 %1082, %v909
      %v1084 = vpop.permute.xlu0 %1083
      %1087 = vset.pattern.permute.xlu0 0
      %1088 = vperm.xlu0 %1087, %v910
      %v1089 = vpop.permute.xlu0 %1088
      %1092 = vset.pattern.permute.xlu0 0
      %1093 = vperm.xlu0 %1092, %v911
      %v1094 = vpop.permute.xlu0 %1093
      %1097 = vset.pattern.permute.xlu0 0
      %1098 = vperm.xlu0 %1097, %v912
      %v1099 = vpop.permute.xlu0 %1098
      %1102 = vset.pattern.permute.xlu0 0
      %1103 = vperm.xlu0 %1102, %v913
      %v1104 = vpop.permute.xlu0 %1103
      %1107 = vset.pattern.permute.xlu0 0
      %1108 = vperm.xlu0 %1107, %v914
      %v1109 = vpop.permute.xlu0 %1108
      %1112 = vset.pattern.permute.xlu0 0
      %1113 = vperm.xlu0 %1112, %v915
      %v1114 = vpop.permute.xlu0 %1113
      %1117 = vset.pattern.permute.xlu0 0
      %1118 = vperm.xlu0 %1117, %v916
      %v1119 = vpop.permute.xlu0 %1118
      %1122 = vset.pattern.permute.xlu0 0
      %1123 = vperm.xlu0 %1122, %v917
      %v1124 = vpop.permute.xlu0 %1123
      %1127 = vset.pattern.permute.xlu0 0
      %1128 = vperm.xlu0 %1127, %v918
      %v1129 = vpop.permute.xlu0 %1128
      %1132 = vset.pattern.permute.xlu0 0
      %1133 = vperm.xlu0 %1132, %v919
      %v1134 = vpop.permute.xlu0 %1133
      %1137 = vset.pattern.permute.xlu0 0
      %1138 = vperm.xlu0 %1137, %v920
      %v1139 = vpop.permute.xlu0 %1138
      %1142 = vset.pattern.permute.xlu0 0
      %1143 = vperm.xlu0 %1142, %v921
      %v1144 = vpop.permute.xlu0 %1143
      %1147 = vset.pattern.permute.xlu0 0
      %1148 = vperm.xlu0 %1147, %v922
      %v1149 = vpop.permute.xlu0 %1148
      %1152 = vset.pattern.permute.xlu0 0
      %1153 = vperm.xlu0 %1152, %v923
      %v1154 = vpop.permute.xlu0 %1153
      %1157 = vset.pattern.permute.xlu0 0
      %1158 = vperm.xlu0 %1157, %v924
      %v1159 = vpop.permute.xlu0 %1158
      %1162 = vset.pattern.permute.xlu0 0
      %1163 = vperm.xlu0 %1162, %v925
      %v1164 = vpop.permute.xlu0 %1163
      %v1167 = vsel %vm636, %v830, 0
      %v1170 = vsel %vm636, %v831, 0
      %v1173 = vsel %vm636, %v832, 0
      %v1176 = vsel %vm636, %v833, 0
      %v1179 = vsel %vm636, %v834, 0
      %v1182 = vsel %vm636, %v835, 0
      %v1185 = vsel %vm636, %v836, 0
      %v1188 = vsel %vm636, %v837, 0
      %v1191 = vsel %vm636, %v838, 0
      %v1194 = vsel %vm636, %v839, 0
      %v1197 = vsel %vm636, %v840, 0
      %v1200 = vsel %vm636, %v841, 0
      %v1203 = vsel %vm636, %v842, 0
      %v1206 = vsel %vm636, %v843, 0
      %v1209 = vsel %vm636, %v844, 0
      %v1212 = vsel %vm636, %v845, 0
      %v1215 = vsel %vm636, %v846, 0
      %v1218 = vsel %vm636, %v847, 0
      %v1221 = vsel %vm636, %v848, 0
      %v1224 = vsel %vm636, %v849, 0
      %v1227 = vsel %vm636, %v850, 0
      %v1230 = vsel %vm636, %v851, 0
      %v1233 = vsel %vm636, %v852, 0
      %v1236 = vsel %vm636, %v853, 0
      %v1239 = vsel %vm636, %v854, 0
      %v1242 = vsel %vm636, %v855, 0
      %v1245 = vsel %vm636, %v856, 0
      %v1248 = vsel %vm636, %v857, 0
      %v1251 = vsel %vm636, %v858, 0
      %v1254 = vsel %vm636, %v859, 0
      %v1257 = vsel %vm636, %v860, 0
      %v1260 = vsel %vm636, %v861, 0
      %v1263 = vsel %vm636, %v862, 0
      %v1266 = vsel %vm636, %v863, 0
      %v1269 = vsel %vm636, %v864, 0
      %v1272 = vsel %vm636, %v865, 0
      %v1275 = vsel %vm636, %v866, 0
      %v1278 = vsel %vm636, %v867, 0
      %v1281 = vsel %vm636, %v868, 0
      %v1284 = vsel %vm636, %v869, 0
      %v1287 = vsel %vm636, %v870, 0
      %v1290 = vsel %vm636, %v871, 0
      %v1293 = vsel %vm636, %v872, 0
      %v1296 = vsel %vm636, %v873, 0
      %v1299 = vsel %vm636, %v874, 0
      %v1302 = vsel %vm636, %v875, 0
      %v1305 = vsel %vm636, %v876, 0
      %v1308 = vsel %vm636, %v877, 0
      %1310 = vmatprep.subr.mxu0 0.0
      %1311 = vmatpush1.msra.mxu0 %v468
      %1312 = vmatprep.subr.mxu0 0.0
      %1313 = vmatpush1.msra.mxu0 %v469
      %1314 = vmatprep.subr.mxu0 0.0
      %1315 = vmatpush1.msra.mxu0 %v470
      %1316 = vmatprep.subr.mxu0 0.0
      %1317 = vmatpush1.msra.mxu0 %v471
      %1318 = vmatprep.subr.mxu0 0.0
      %1319 = vmatpush1.msra.mxu0 %v472
      %1320 = vmatprep.subr.mxu0 0.0
      %1321 = vmatpush1.msra.mxu0 %v473
      %1322 = vmatprep.subr.mxu0 0.0
      %1323 = vmatpush1.msra.mxu0 %v474
      %1324 = vmatprep.subr.mxu0 0.0
      %1325 = vmatpush1.msra.mxu0 %v475
      %1326 = vmatprep.subr.mxu0 0.0
      %1327 = vmatpush1.msra.mxu0 0.0
      %1328 = vmatprep.subr.mxu0 0.0
      %1329 = vmatpush1.msra.mxu0 0.0
      %1330 = vmatprep.subr.mxu0 0.0
      %1331 = vmatpush1.msra.mxu0 0.0
      %1332 = vmatprep.subr.mxu0 0.0
      %1333 = vmatpush1.msra.mxu0 0.0
      %1334 = vmatprep.subr.mxu0 0.0
      %1335 = vmatpush1.msra.mxu0 0.0
      %1336 = vmatprep.subr.mxu0 0.0
      %1337 = vmatpush1.msra.mxu0 0.0
      %1338 = vmatprep.subr.mxu0 0.0
      %1339 = vmatpush1.msra.mxu0 0.0
      %1340 = vmatprep.subr.mxu0 0.0
      %1341 = vmatpush1.msra.mxu0 0.0
      %1342 = vmatprep.subr.mxu0 0.0
      %1343 = vmatpush1.msra.mxu0 0.0
      %1344 = vmatprep.subr.mxu0 0.0
      %1345 = vmatpush1.msra.mxu0 0.0
      %1346 = vmatprep.subr.mxu0 0.0
      %1347 = vmatpush1.msra.mxu0 0.0
      %1348 = vmatprep.subr.mxu0 0.0
      %1349 = vmatpush1.msra.mxu0 0.0
      %1350 = vmatprep.subr.mxu0 0.0
      %1351 = vmatpush1.msra.mxu0 0.0
      %1352 = vmatprep.subr.mxu0 0.0
      %1353 = vmatpush1.msra.mxu0 0.0
      %1354 = vmatprep.subr.mxu0 0.0
      %1355 = vmatpush1.msra.mxu0 0.0
      %1356 = vmatprep.subr.mxu0 0.0
      %1357 = vmatpush1.msra.mxu0 0.0
      %1358 = vmatprep.subr.mxu0 0.0
      %1359 = vmatpush1.msra.mxu0 0.0
      %1360 = vmatprep.subr.mxu0 0.0
      %1361 = vmatpush1.msra.mxu0 0.0
      %1362 = vmatprep.subr.mxu0 0.0
      %1363 = vmatpush1.msra.mxu0 0.0
      %1364 = vmatprep.subr.mxu0 0.0
      %1365 = vmatpush1.msra.mxu0 0.0
      %1366 = vmatprep.subr.mxu0 0.0
      %1367 = vmatpush1.msra.mxu0 0.0
      %1368 = vmatprep.subr.mxu0 0.0
      %1369 = vmatpush1.msra.mxu0 0.0
      %1370 = vmatprep.subr.mxu0 0.0
      %1371 = vmatpush1.msra.mxu0 0.0
      %1372 = vmatprep.subr.mxu0 0.0
      %1373 = vmatpush1.msra.mxu0 0.0
      %1374 = vmatprep.mubr.f32.mxu0 0.0
      %1375 = vmatmul.mubr.f32.gmra.mrb[0].mxu0 %v1167
      %v1376 = vpop.f32.mrb[0].mxu0
      %v1377 = vadd.f32 %v929, %v1376
      %v1378 = vpop.f32.mrb[0].mxu0
      %1379 = vmatprep.mubr.f32.mxu0 0.0
      %1380 = vmatmul.mubr.f32.gmra.mrb[0].mxu0 %v1170
      %v1381 = vpop.f32.mrb[0].mxu0
      %v1382 = vadd.f32 %v934, %v1381
      %v1383 = vpop.f32.mrb[0].mxu0
      %1384 = vmatprep.mubr.f32.mxu0 0.0
      %1385 = vmatmul.mubr.f32.gmra.mrb[0].mxu0 %v1173
      %v1386 = vpop.f32.mrb[0].mxu0
      %v1387 = vadd.f32 %v939, %v1386
      %v1388 = vpop.f32.mrb[0].mxu0
      %1389 = vmatprep.mubr.f32.mxu0 0.0
      %1390 = vmatmul.mubr.f32.gmra.mrb[0].mxu0 %v1176
      %v1391 = vpop.f32.mrb[0].mxu0
      %v1392 = vadd.f32 %v944, %v1391
      %v1393 = vpop.f32.mrb[0].mxu0
      %1394 = vmatprep.mubr.f32.mxu0 0.0
      %1395 = vmatmul.mubr.f32.gmra.mrb[0].mxu0 %v1179
      %v1396 = vpop.f32.mrb[0].mxu0
      %v1397 = vadd.f32 %v949, %v1396
      %v1398 = vpop.f32.mrb[0].mxu0
      %1399 = vmatprep.mubr.f32.mxu0 0.0
      %1400 = vmatmul.mubr.f32.gmra.mrb[0].mxu0 %v1182
      %v1401 = vpop.f32.mrb[0].mxu0
      %v1402 = vadd.f32 %v954, %v1401
      %v1403 = vpop.f32.mrb[0].mxu0
      %1404 = vmatprep.mubr.f32.mxu0 0.0
      %1405 = vmatmul.mubr.f32.gmra.mrb[0].mxu0 %v1185
      %v1406 = vpop.f32.mrb[0].mxu0
      %v1407 = vadd.f32 %v959, %v1406
      %v1408 = vpop.f32.mrb[0].mxu0
      %1409 = vmatprep.mubr.f32.mxu0 0.0
      %1410 = vmatmul.mubr.f32.gmra.mrb[0].mxu0 %v1188
      %v1411 = vpop.f32.mrb[0].mxu0
      %v1412 = vadd.f32 %v964, %v1411
      %v1413 = vpop.f32.mrb[0].mxu0
      %1414 = vmatprep.mubr.f32.mxu0 0.0
      %1415 = vmatmul.mubr.f32.gmra.mrb[0].mxu0 %v1191
      %v1416 = vpop.f32.mrb[0].mxu0
      %v1417 = vadd.f32 %v969, %v1416
      %v1418 = vpop.f32.mrb[0].mxu0
      %1419 = vmatprep.mubr.f32.mxu0 0.0
      %1420 = vmatmul.mubr.f32.gmra.mrb[0].mxu0 %v1194
      %v1421 = vpop.f32.mrb[0].mxu0
      %v1422 = vadd.f32 %v974, %v1421
      %v1423 = vpop.f32.mrb[0].mxu0
      %1424 = vmatprep.mubr.f32.mxu0 0.0
      %1425 = vmatmul.mubr.f32.gmra.mrb[0].mxu0 %v1197
      %v1426 = vpop.f32.mrb[0].mxu0
      %v1427 = vadd.f32 %v979, %v1426
      %v1428 = vpop.f32.mrb[0].mxu0
      %1429 = vmatprep.mubr.f32.mxu0 0.0
      %1430 = vmatmul.mubr.f32.gmra.mrb[0].mxu0 %v1200
      %v1431 = vpop.f32.mrb[0].mxu0
      %v1432 = vadd.f32 %v984, %v1431
      %v1433 = vpop.f32.mrb[0].mxu0
      %1434 = vmatprep.mubr.f32.mxu0 0.0
      %1435 = vmatmul.mubr.f32.gmra.mrb[0].mxu0 %v1203
      %v1436 = vpop.f32.mrb[0].mxu0
      %v1437 = vadd.f32 %v989, %v1436
      %v1438 = vpop.f32.mrb[0].mxu0
      %1439 = vmatprep.mubr.f32.mxu0 0.0
      %1440 = vmatmul.mubr.f32.gmra.mrb[0].mxu0 %v1206
      %v1441 = vpop.f32.mrb[0].mxu0
      %v1442 = vadd.f32 %v994, %v1441
      %v1443 = vpop.f32.mrb[0].mxu0
      %1444 = vmatprep.mubr.f32.mxu0 0.0
      %1445 = vmatmul.mubr.f32.gmra.mrb[0].mxu0 %v1209
      %v1446 = vpop.f32.mrb[0].mxu0
      %v1447 = vadd.f32 %v999, %v1446
      %v1448 = vpop.f32.mrb[0].mxu0
      %1449 = vmatprep.mubr.f32.mxu0 0.0
      %1450 = vmatmul.mubr.f32.gmra.mrb[0].mxu0 %v1212
      %v1451 = vpop.f32.mrb[0].mxu0
      %v1452 = vadd.f32 %v1004, %v1451
      %v1453 = vpop.f32.mrb[0].mxu0
      %1454 = vmatprep.mubr.f32.mxu0 0.0
      %1455 = vmatmul.mubr.f32.gmra.mrb[0].mxu0 %v1215
      %v1456 = vpop.f32.mrb[0].mxu0
      %v1457 = vadd.f32 %v1009, %v1456
      %v1458 = vpop.f32.mrb[0].mxu0
      %1459 = vmatprep.mubr.f32.mxu0 0.0
      %1460 = vmatmul.mubr.f32.gmra.mrb[0].mxu0 %v1218
      %v1461 = vpop.f32.mrb[0].mxu0
      %v1462 = vadd.f32 %v1014, %v1461
      %v1463 = vpop.f32.mrb[0].mxu0
      %1464 = vmatprep.mubr.f32.mxu0 0.0
      %1465 = vmatmul.mubr.f32.gmra.mrb[0].mxu0 %v1221
      %v1466 = vpop.f32.mrb[0].mxu0
      %v1467 = vadd.f32 %v1019, %v1466
      %v1468 = vpop.f32.mrb[0].mxu0
      %1469 = vmatprep.mubr.f32.mxu0 0.0
      %1470 = vmatmul.mubr.f32.gmra.mrb[0].mxu0 %v1224
      %v1471 = vpop.f32.mrb[0].mxu0
      %v1472 = vadd.f32 %v1024, %v1471
      %v1473 = vpop.f32.mrb[0].mxu0
      %1474 = vmatprep.mubr.f32.mxu0 0.0
      %1475 = vmatmul.mubr.f32.gmra.mrb[0].mxu0 %v1227
      %v1476 = vpop.f32.mrb[0].mxu0
      %v1477 = vadd.f32 %v1029, %v1476
      %v1478 = vpop.f32.mrb[0].mxu0
      %1479 = vmatprep.mubr.f32.mxu0 0.0
      %1480 = vmatmul.mubr.f32.gmra.mrb[0].mxu0 %v1230
      %v1481 = vpop.f32.mrb[0].mxu0
      %v1482 = vadd.f32 %v1034, %v1481
      %v1483 = vpop.f32.mrb[0].mxu0
      %1484 = vmatprep.mubr.f32.mxu0 0.0
      %1485 = vmatmul.mubr.f32.gmra.mrb[0].mxu0 %v1233
      %v1486 = vpop.f32.mrb[0].mxu0
      %v1487 = vadd.f32 %v1039, %v1486
      %v1488 = vpop.f32.mrb[0].mxu0
      %1489 = vmatprep.mubr.f32.mxu0 0.0
      %1490 = vmatmul.mubr.f32.gmra.mrb[0].mxu0 %v1236
      %v1491 = vpop.f32.mrb[0].mxu0
      %v1492 = vadd.f32 %v1044, %v1491
      %v1493 = vpop.f32.mrb[0].mxu0
      %1494 = vmatprep.mubr.f32.mxu0 0.0
      %1495 = vmatmul.mubr.f32.gmra.mrb[0].mxu0 %v1239
      %v1496 = vpop.f32.mrb[0].mxu0
      %v1497 = vadd.f32 %v1049, %v1496
      %v1498 = vpop.f32.mrb[0].mxu0
      %1499 = vmatprep.mubr.f32.mxu0 0.0
      %1500 = vmatmul.mubr.f32.gmra.mrb[0].mxu0 %v1242
      %v1501 = vpop.f32.mrb[0].mxu0
      %v1502 = vadd.f32 %v1054, %v1501
      %v1503 = vpop.f32.mrb[0].mxu0
      %1504 = vmatprep.mubr.f32.mxu0 0.0
      %1505 = vmatmul.mubr.f32.gmra.mrb[0].mxu0 %v1245
      %v1506 = vpop.f32.mrb[0].mxu0
      %v1507 = vadd.f32 %v1059, %v1506
      %v1508 = vpop.f32.mrb[0].mxu0
      %1509 = vmatprep.mubr.f32.mxu0 0.0
      %1510 = vmatmul.mubr.f32.gmra.mrb[0].mxu0 %v1248
      %v1511 = vpop.f32.mrb[0].mxu0
      %v1512 = vadd.f32 %v1064, %v1511
      %v1513 = vpop.f32.mrb[0].mxu0
      %1514 = vmatprep.mubr.f32.mxu0 0.0
      %1515 = vmatmul.mubr.f32.gmra.mrb[0].mxu0 %v1251
      %v1516 = vpop.f32.mrb[0].mxu0
      %v1517 = vadd.f32 %v1069, %v1516
      %v1518 = vpop.f32.mrb[0].mxu0
      %1519 = vmatprep.mubr.f32.mxu0 0.0
      %1520 = vmatmul.mubr.f32.gmra.mrb[0].mxu0 %v1254
      %v1521 = vpop.f32.mrb[0].mxu0
      %v1522 = vadd.f32 %v1074, %v1521
      %v1523 = vpop.f32.mrb[0].mxu0
      %1524 = vmatprep.mubr.f32.mxu0 0.0
      %1525 = vmatmul.mubr.f32.gmra.mrb[0].mxu0 %v1257
      %v1526 = vpop.f32.mrb[0].mxu0
      %v1527 = vadd.f32 %v1079, %v1526
      %v1528 = vpop.f32.mrb[0].mxu0
      %1529 = vmatprep.mubr.f32.mxu0 0.0
      %1530 = vmatmul.mubr.f32.gmra.mrb[0].mxu0 %v1260
      %v1531 = vpop.f32.mrb[0].mxu0
      %v1532 = vadd.f32 %v1084, %v1531
      %v1533 = vpop.f32.mrb[0].mxu0
      %1534 = vmatprep.mubr.f32.mxu0 0.0
      %1535 = vmatmul.mubr.f32.gmra.mrb[0].mxu0 %v1263
      %v1536 = vpop.f32.mrb[0].mxu0
      %v1537 = vadd.f32 %v1089, %v1536
      %v1538 = vpop.f32.mrb[0].mxu0
      %1539 = vmatprep.mubr.f32.mxu0 0.0
      %1540 = vmatmul.mubr.f32.gmra.mrb[0].mxu0 %v1266
      %v1541 = vpop.f32.mrb[0].mxu0
      %v1542 = vadd.f32 %v1094, %v1541
      %v1543 = vpop.f32.mrb[0].mxu0
      %1544 = vmatprep.mubr.f32.mxu0 0.0
      %1545 = vmatmul.mubr.f32.gmra.mrb[0].mxu0 %v1269
      %v1546 = vpop.f32.mrb[0].mxu0
      %v1547 = vadd.f32 %v1099, %v1546
      %v1548 = vpop.f32.mrb[0].mxu0
      %1549 = vmatprep.mubr.f32.mxu0 0.0
      %1550 = vmatmul.mubr.f32.gmra.mrb[0].mxu0 %v1272
      %v1551 = vpop.f32.mrb[0].mxu0
      %v1552 = vadd.f32 %v1104, %v1551
      %v1553 = vpop.f32.mrb[0].mxu0
      %1554 = vmatprep.mubr.f32.mxu0 0.0
      %1555 = vmatmul.mubr.f32.gmra.mrb[0].mxu0 %v1275
      %v1556 = vpop.f32.mrb[0].mxu0
      %v1557 = vadd.f32 %v1109, %v1556
      %v1558 = vpop.f32.mrb[0].mxu0
      %1559 = vmatprep.mubr.f32.mxu0 0.0
      %1560 = vmatmul.mubr.f32.gmra.mrb[0].mxu0 %v1278
      %v1561 = vpop.f32.mrb[0].mxu0
      %v1562 = vadd.f32 %v1114, %v1561
      %v1563 = vpop.f32.mrb[0].mxu0
      %1564 = vmatprep.mubr.f32.mxu0 0.0
      %1565 = vmatmul.mubr.f32.gmra.mrb[0].mxu0 %v1281
      %v1566 = vpop.f32.mrb[0].mxu0
      %v1567 = vadd.f32 %v1119, %v1566
      %v1568 = vpop.f32.mrb[0].mxu0
      %1569 = vmatprep.mubr.f32.mxu0 0.0
      %1570 = vmatmul.mubr.f32.gmra.mrb[0].mxu0 %v1284
      %v1571 = vpop.f32.mrb[0].mxu0
      %v1572 = vadd.f32 %v1124, %v1571
      %v1573 = vpop.f32.mrb[0].mxu0
      %1574 = vmatprep.mubr.f32.mxu0 0.0
      %1575 = vmatmul.mubr.f32.gmra.mrb[0].mxu0 %v1287
      %v1576 = vpop.f32.mrb[0].mxu0
      %v1577 = vadd.f32 %v1129, %v1576
      %v1578 = vpop.f32.mrb[0].mxu0
      %1579 = vmatprep.mubr.f32.mxu0 0.0
      %1580 = vmatmul.mubr.f32.gmra.mrb[0].mxu0 %v1290
      %v1581 = vpop.f32.mrb[0].mxu0
      %v1582 = vadd.f32 %v1134, %v1581
      %v1583 = vpop.f32.mrb[0].mxu0
      %1584 = vmatprep.mubr.f32.mxu0 0.0
      %1585 = vmatmul.mubr.f32.gmra.mrb[0].mxu0 %v1293
      %v1586 = vpop.f32.mrb[0].mxu0
      %v1587 = vadd.f32 %v1139, %v1586
      %v1588 = vpop.f32.mrb[0].mxu0
      %1589 = vmatprep.mubr.f32.mxu0 0.0
      %1590 = vmatmul.mubr.f32.gmra.mrb[0].mxu0 %v1296
      %v1591 = vpop.f32.mrb[0].mxu0
      %v1592 = vadd.f32 %v1144, %v1591
      %v1593 = vpop.f32.mrb[0].mxu0
      %1594 = vmatprep.mubr.f32.mxu0 0.0
      %1595 = vmatmul.mubr.f32.gmra.mrb[0].mxu0 %v1299
      %v1596 = vpop.f32.mrb[0].mxu0
      %v1597 = vadd.f32 %v1149, %v1596
      %v1598 = vpop.f32.mrb[0].mxu0
      %1599 = vmatprep.mubr.f32.mxu0 0.0
      %1600 = vmatmul.mubr.f32.gmra.mrb[0].mxu0 %v1302
      %v1601 = vpop.f32.mrb[0].mxu0
      %v1602 = vadd.f32 %v1154, %v1601
      %v1603 = vpop.f32.mrb[0].mxu0
      %1604 = vmatprep.mubr.f32.mxu0 0.0
      %1605 = vmatmul.mubr.f32.gmra.mrb[0].mxu0 %v1305
      %v1606 = vpop.f32.mrb[0].mxu0
      %v1607 = vadd.f32 %v1159, %v1606
      %v1608 = vpop.f32.mrb[0].mxu0
      %1609 = vmatprep.mubr.f32.mxu0 0.0
      %1610 = vmatmul.mubr.f32.gmra.mrb[0].mxu0 %v1308
      %v1611 = vpop.f32.mrb[0].mxu0
      %v1612 = vadd.f32 %v1164, %v1611
      %v1613 = vpop.f32.mrb[0].mxu0
      %1614 = vdwg.mxu0
      %v1615 = vadd.f32 %v1457, %v476
      %v1616 = vadd.f32 %v1462, %v477
      %v1617 = vadd.f32 %v1467, %v478
      %v1618 = vadd.f32 %v1472, %v479
      %v1619 = vadd.f32 %v1477, %v480
      %v1620 = vadd.f32 %v1482, %v481
      %v1621 = vadd.f32 %v1487, %v482
      %v1622 = vadd.f32 %v1492, %v483
      %v1623 = vadd.f32 %v1497, %v484
      %v1624 = vadd.f32 %v1502, %v485
      %v1625 = vadd.f32 %v1507, %v486
      %v1626 = vadd.f32 %v1512, %v487
      %v1627 = vadd.f32 %v1517, %v488
      %v1628 = vadd.f32 %v1522, %v489
      %v1629 = vadd.f32 %v1527, %v490
      %v1630 = vadd.f32 %v1532, %v491
      %vm1631 = vcmask 130048
      %v1633 = vsel %vm1631, %v1377, 0
      %v1636 = vsel %vm1631, %v1382, 0
      %v1639 = vsel %vm1631, %v1387, 0
      %v1642 = vsel %vm1631, %v1392, 0
      %v1645 = vsel %vm1631, %v1397, 0
      %v1648 = vsel %vm1631, %v1402, 0
      %v1651 = vsel %vm1631, %v1407, 0
      %v1654 = vsel %vm1631, %v1412, 0
      %v1657 = vsel %vm1631, %v1417, 0
      %v1660 = vsel %vm1631, %v1422, 0
      %v1663 = vsel %vm1631, %v1427, 0
      %v1666 = vsel %vm1631, %v1432, 0
      %v1669 = vsel %vm1631, %v1437, 0
      %v1672 = vsel %vm1631, %v1442, 0
      %v1675 = vsel %vm1631, %v1447, 0
      %v1678 = vsel %vm1631, %v1452, 0
      %v1681 = vsel %vm1631, %v1615, 0
      %v1684 = vsel %vm1631, %v1616, 0
      %v1687 = vsel %vm1631, %v1617, 0
      %v1690 = vsel %vm1631, %v1618, 0
      %v1693 = vsel %vm1631, %v1619, 0
      %v1696 = vsel %vm1631, %v1620, 0
      %v1699 = vsel %vm1631, %v1621, 0
      %v1702 = vsel %vm1631, %v1622, 0
      %v1705 = vsel %vm1631, %v1623, 0
      %v1708 = vsel %vm1631, %v1624, 0
      %v1711 = vsel %vm1631, %v1625, 0
      %v1714 = vsel %vm1631, %v1626, 0
      %v1717 = vsel %vm1631, %v1627, 0
      %v1720 = vsel %vm1631, %v1628, 0
      %v1723 = vsel %vm1631, %v1629, 0
      %v1726 = vsel %vm1631, %v1630, 0
      %1728 = vmatprep.subr.mxu0 0.0
      %1729 = vmatpush1.xpose.msra.mxu0 %v1681
      %1730 = vmatprep.subr.mxu0 0.0
      %1731 = vmatpush1.xpose.msra.mxu0 %v1684
      %1732 = vmatprep.subr.mxu0 0.0
      %1733 = vmatpush1.xpose.msra.mxu0 %v1687
      %1734 = vmatprep.subr.mxu0 0.0
      %1735 = vmatpush1.xpose.msra.mxu0 %v1690
      %1736 = vmatprep.subr.mxu0 0.0
      %1737 = vmatpush1.xpose.msra.mxu0 %v1693
      %1738 = vmatprep.subr.mxu0 0.0
      %1739 = vmatpush1.xpose.msra.mxu0 %v1696
      %1740 = vmatprep.subr.mxu0 0.0
      %1741 = vmatpush1.xpose.msra.mxu0 %v1699
      %1742 = vmatprep.subr.mxu0 0.0
      %1743 = vmatpush1.xpose.msra.mxu0 %v1702
      %1744 = vmatprep.subr.mxu0 0.0
      %1745 = vmatpush1.xpose.msra.mxu0 %v1705
      %1746 = vmatprep.subr.mxu0 0.0
      %1747 = vmatpush1.xpose.msra.mxu0 %v1708
      %1748 = vmatprep.subr.mxu0 0.0
      %1749 = vmatpush1.xpose.msra.mxu0 %v1711
      %1750 = vmatprep.subr.mxu0 0.0
      %1751 = vmatpush1.xpose.msra.mxu0 %v1714
      %1752 = vmatprep.subr.mxu0 0.0
      %1753 = vmatpush1.xpose.msra.mxu0 %v1717
      %1754 = vmatprep.subr.mxu0 0.0
      %1755 = vmatpush1.xpose.msra.mxu0 %v1720
      %1756 = vmatprep.subr.mxu0 0.0
      %1757 = vmatpush1.xpose.msra.mxu0 %v1723
      %1758 = vmatprep.subr.mxu0 0.0
      %1759 = vmatpush1.xpose.msra.mxu0 %v1726
      %1760 = vmatprep.subr.mxu0 0.0
      %1761 = vmatpush1.xpose.msra.mxu0 0.0
      %1762 = vmatprep.subr.mxu0 0.0
      %1763 = vmatpush1.xpose.msra.mxu0 0.0
      %1764 = vmatprep.subr.mxu0 0.0
      %1765 = vmatpush1.xpose.msra.mxu0 0.0
      %1766 = vmatprep.subr.mxu0 0.0
      %1767 = vmatpush1.xpose.msra.mxu0 0.0
      %1768 = vmatprep.subr.mxu0 0.0
      %1769 = vmatpush1.xpose.msra.mxu0 0.0
      %1770 = vmatprep.subr.mxu0 0.0
      %1771 = vmatpush1.xpose.msra.mxu0 0.0
      %1772 = vmatprep.subr.mxu0 0.0
      %1773 = vmatpush1.xpose.msra.mxu0 0.0
      %1774 = vmatprep.subr.mxu0 0.0
      %1775 = vmatpush1.xpose.msra.mxu0 0.0
      %1776 = vmatprep.subr.mxu0 0.0
      %1777 = vmatpush1.xpose.msra.mxu0 0.0
      %1778 = vmatprep.subr.mxu0 0.0
      %1779 = vmatpush1.xpose.msra.mxu0 0.0
      %1780 = vmatprep.subr.mxu0 0.0
      %1781 = vmatpush1.xpose.msra.mxu0 0.0
      %1782 = vmatprep.subr.mxu0 0.0
      %1783 = vmatpush1.xpose.msra.mxu0 0.0
      %1784 = vmatprep.subr.mxu0 0.0
      %1785 = vmatpush1.xpose.msra.mxu0 0.0
      %1786 = vmatprep.subr.mxu0 0.0
      %1787 = vmatpush1.xpose.msra.mxu0 0.0
      %1788 = vmatprep.subr.mxu0 0.0
      %1789 = vmatpush1.xpose.msra.mxu0 0.0
      %1790 = vmatprep.subr.mxu0 0.0
      %1791 = vmatpush1.xpose.msra.mxu0 0.0
      %1792 = vmatprep.mubr.f32.mxu0 0.0
      %1793 = vmatmul.mubr.f32.gmra.mrb[0].mxu0 %v1633
      %v1794 = vpop.f32.mrb[0].mxu0
      %v1795 = vadd.f32 0.0, %v1794
      %v1796 = vpop.f32.mrb[0].mxu0
      %1797 = vmatprep.mubr.f32.mxu0 0.0
      %1798 = vmatmul.mubr.f32.gmra.mrb[0].mxu0 %v1636
      %v1799 = vpop.f32.mrb[0].mxu0
      %v1800 = vadd.f32 0.0, %v1799
      %v1801 = vpop.f32.mrb[0].mxu0
      %1802 = vmatprep.mubr.f32.mxu0 0.0
      %1803 = vmatmul.mubr.f32.gmra.mrb[0].mxu0 %v1639
      %v1804 = vpop.f32.mrb[0].mxu0
      %v1805 = vadd.f32 0.0, %v1804
      %v1806 = vpop.f32.mrb[0].mxu0
      %1807 = vmatprep.mubr.f32.mxu0 0.0
      %1808 = vmatmul.mubr.f32.gmra.mrb[0].mxu0 %v1642
      %v1809 = vpop.f32.mrb[0].mxu0
      %v1810 = vadd.f32 0.0, %v1809
      %v1811 = vpop.f32.mrb[0].mxu0
      %1812 = vmatprep.mubr.f32.mxu0 0.0
      %1813 = vmatmul.mubr.f32.gmra.mrb[0].mxu0 %v1645
      %v1814 = vpop.f32.mrb[0].mxu0
      %v1815 = vadd.f32 0.0, %v1814
      %v1816 = vpop.f32.mrb[0].mxu0
      %1817 = vmatprep.mubr.f32.mxu0 0.0
      %1818 = vmatmul.mubr.f32.gmra.mrb[0].mxu0 %v1648
      %v1819 = vpop.f32.mrb[0].mxu0
      %v1820 = vadd.f32 0.0, %v1819
      %v1821 = vpop.f32.mrb[0].mxu0
      %1822 = vmatprep.mubr.f32.mxu0 0.0
      %1823 = vmatmul.mubr.f32.gmra.mrb[0].mxu0 %v1651
      %v1824 = vpop.f32.mrb[0].mxu0
      %v1825 = vadd.f32 0.0, %v1824
      %v1826 = vpop.f32.mrb[0].mxu0
      %1827 = vmatprep.mubr.f32.mxu0 0.0
      %1828 = vmatmul.mubr.f32.gmra.mrb[0].mxu0 %v1654
      %v1829 = vpop.f32.mrb[0].mxu0
      %v1830 = vadd.f32 0.0, %v1829
      %v1831 = vpop.f32.mrb[0].mxu0
      %1832 = vmatprep.mubr.f32.mxu0 0.0
      %1833 = vmatmul.mubr.f32.gmra.mrb[0].mxu0 %v1657
      %v1834 = vpop.f32.mrb[0].mxu0
      %v1835 = vadd.f32 0.0, %v1834
      %v1836 = vpop.f32.mrb[0].mxu0
      %1837 = vmatprep.mubr.f32.mxu0 0.0
      %1838 = vmatmul.mubr.f32.gmra.mrb[0].mxu0 %v1660
      %v1839 = vpop.f32.mrb[0].mxu0
      %v1840 = vadd.f32 0.0, %v1839
      %v1841 = vpop.f32.mrb[0].mxu0
      %1842 = vmatprep.mubr.f32.mxu0 0.0
      %1843 = vmatmul.mubr.f32.gmra.mrb[0].mxu0 %v1663
      %v1844 = vpop.f32.mrb[0].mxu0
      %v1845 = vadd.f32 0.0, %v1844
      %v1846 = vpop.f32.mrb[0].mxu0
      %1847 = vmatprep.mubr.f32.mxu0 0.0
      %1848 = vmatmul.mubr.f32.gmra.mrb[0].mxu0 %v1666
      %v1849 = vpop.f32.mrb[0].mxu0
      %v1850 = vadd.f32 0.0, %v1849
      %v1851 = vpop.f32.mrb[0].mxu0
      %1852 = vmatprep.mubr.f32.mxu0 0.0
      %1853 = vmatmul.mubr.f32.gmra.mrb[0].mxu0 %v1669
      %v1854 = vpop.f32.mrb[0].mxu0
      %v1855 = vadd.f32 0.0, %v1854
      %v1856 = vpop.f32.mrb[0].mxu0
      %1857 = vmatprep.mubr.f32.mxu0 0.0
      %1858 = vmatmul.mubr.f32.gmra.mrb[0].mxu0 %v1672
      %v1859 = vpop.f32.mrb[0].mxu0
      %v1860 = vadd.f32 0.0, %v1859
      %v1861 = vpop.f32.mrb[0].mxu0
      %1862 = vmatprep.mubr.f32.mxu0 0.0
      %1863 = vmatmul.mubr.f32.gmra.mrb[0].mxu0 %v1675
      %v1864 = vpop.f32.mrb[0].mxu0
      %v1865 = vadd.f32 0.0, %v1864
      %v1866 = vpop.f32.mrb[0].mxu0
      %1867 = vmatprep.mubr.f32.mxu0 0.0
      %1868 = vmatmul.mubr.f32.gmra.mrb[0].mxu0 %v1678
      %v1869 = vpop.f32.mrb[0].mxu0
      %v1870 = vadd.f32 0.0, %v1869
      %v1871 = vpop.f32.mrb[0].mxu0
      %1872 = vdwg.mxu0
      %v1873 = vmul.f32 %v1795, %v492
      %v1874 = vmul.f32 %v1800, %v493
      %v1875 = vmul.f32 %v1805, %v494
      %v1876 = vmul.f32 %v1810, %v495
      %v1877 = vmul.f32 %v1815, %v496
      %v1878 = vmul.f32 %v1820, %v497
      %v1879 = vmul.f32 %v1825, %v498
      %v1880 = vmul.f32 %v1830, %v499
      %v1881 = vmul.f32 %v1835, %v500
      %v1882 = vmul.f32 %v1840, %v501
      %v1883 = vmul.f32 %v1845, %v502
      %v1884 = vmul.f32 %v1850, %v503
      %v1885 = vmul.f32 %v1855, %v504
      %v1886 = vmul.f32 %v1860, %v505
      %v1887 = vmul.f32 %v1865, %v506
      %v1888 = vmul.f32 %v1870, %v507
      %1889 = vmatprep.subr.mxu0 0.0
      %1890 = vmatpush1.msra.mxu0 %v508
      %1891 = vmatprep.subr.mxu0 0.0
      %1892 = vmatpush1.msra.mxu0 %v509
      %1893 = vmatprep.subr.mxu0 0.0
      %1894 = vmatpush1.msra.mxu0 %v510
      %1895 = vmatprep.subr.mxu0 0.0
      %1896 = vmatpush1.msra.mxu0 %v511
      %1897 = vmatprep.subr.mxu0 0.0
      %1898 = vmatpush1.msra.mxu0 %v512
      %1899 = vmatprep.subr.mxu0 0.0
      %1900 = vmatpush1.msra.mxu0 %v513
      %1901 = vmatprep.subr.mxu0 0.0
      %1902 = vmatpush1.msra.mxu0 %v514
      %1903 = vmatprep.subr.mxu0 0.0
      %1904 = vmatpush1.msra.mxu0 %v515
      %1905 = vmatprep.subr.mxu0 0.0
      %1906 = vmatpush1.msra.mxu0 %v516
      %1907 = vmatprep.subr.mxu0 0.0
      %1908 = vmatpush1.msra.mxu0 %v517
      %1909 = vmatprep.subr.mxu0 0.0
      %1910 = vmatpush1.msra.mxu0 %v518
      %1911 = vmatprep.subr.mxu0 0.0
      %1912 = vmatpush1.msra.mxu0 %v519
      %1913 = vmatprep.subr.mxu0 0.0
      %1914 = vmatpush1.msra.mxu0 %v520
      %1915 = vmatprep.subr.mxu0 0.0
      %1916 = vmatpush1.msra.mxu0 %v521
      %1917 = vmatprep.subr.mxu0 0.0
      %1918 = vmatpush1.msra.mxu0 %v522
      %1919 = vmatprep.subr.mxu0 0.0
      %1920 = vmatpush1.msra.mxu0 %v523
      %1921 = vmatprep.subr.mxu0 0.0
      %1922 = vmatpush1.msra.mxu0 0.0
      %1923 = vmatprep.subr.mxu0 0.0
      %1924 = vmatpush1.msra.mxu0 0.0
      %1925 = vmatprep.subr.mxu0 0.0
      %1926 = vmatpush1.msra.mxu0 0.0
      %1927 = vmatprep.subr.mxu0 0.0
      %1928 = vmatpush1.msra.mxu0 0.0
      %1929 = vmatprep.subr.mxu0 0.0
      %1930 = vmatpush1.msra.mxu0 0.0
      %1931 = vmatprep.subr.mxu0 0.0
      %1932 = vmatpush1.msra.mxu0 0.0
      %1933 = vmatprep.subr.mxu0 0.0
      %1934 = vmatpush1.msra.mxu0 0.0
      %1935 = vmatprep.subr.mxu0 0.0
      %1936 = vmatpush1.msra.mxu0 0.0
      %1937 = vmatprep.subr.mxu0 0.0
      %1938 = vmatpush1.msra.mxu0 0.0
      %1939 = vmatprep.subr.mxu0 0.0
      %1940 = vmatpush1.msra.mxu0 0.0
      %1941 = vmatprep.subr.mxu0 0.0
      %1942 = vmatpush1.msra.mxu0 0.0
      %1943 = vmatprep.subr.mxu0 0.0
      %1944 = vmatpush1.msra.mxu0 0.0
      %1945 = vmatprep.subr.mxu0 0.0
      %1946 = vmatpush1.msra.mxu0 0.0
      %1947 = vmatprep.subr.mxu0 0.0
      %1948 = vmatpush1.msra.mxu0 0.0
      %1949 = vmatprep.subr.mxu0 0.0
      %1950 = vmatpush1.msra.mxu0 0.0
      %1951 = vmatprep.subr.mxu0 0.0
      %1952 = vmatpush1.msra.mxu0 0.0
      %1953 = vmatprep.mubr.f32.mxu0 0.0
      %1954 = vmatmul.mubr.f32.gmra.mrb[0].mxu0 %v1873
      %v1955 = vpop.f32.mrb[0].mxu0
      %v1956 = vadd.f32 0.0, %v1955
      %v1957 = vpop.f32.mrb[0].mxu0
      %1958 = vmatprep.mubr.f32.mxu0 0.0
      %1959 = vmatmul.mubr.f32.gmra.mrb[0].mxu0 %v1874
      %v1960 = vpop.f32.mrb[0].mxu0
      %v1961 = vadd.f32 0.0, %v1960
      %v1962 = vpop.f32.mrb[0].mxu0
      %1963 = vmatprep.mubr.f32.mxu0 0.0
      %1964 = vmatmul.mubr.f32.gmra.mrb[0].mxu0 %v1875
      %v1965 = vpop.f32.mrb[0].mxu0
      %v1966 = vadd.f32 0.0, %v1965
      %v1967 = vpop.f32.mrb[0].mxu0
      %1968 = vmatprep.mubr.f32.mxu0 0.0
      %1969 = vmatmul.mubr.f32.gmra.mrb[0].mxu0 %v1876
      %v1970 = vpop.f32.mrb[0].mxu0
      %v1971 = vadd.f32 0.0, %v1970
      %v1972 = vpop.f32.mrb[0].mxu0
      %1973 = vmatprep.mubr.f32.mxu0 0.0
      %1974 = vmatmul.mubr.f32.gmra.mrb[0].mxu0 %v1877
      %v1975 = vpop.f32.mrb[0].mxu0
      %v1976 = vadd.f32 0.0, %v1975
      %v1977 = vpop.f32.mrb[0].mxu0
      %1978 = vmatprep.mubr.f32.mxu0 0.0
      %1979 = vmatmul.mubr.f32.gmra.mrb[0].mxu0 %v1878
      %v1980 = vpop.f32.mrb[0].mxu0
      %v1981 = vadd.f32 0.0, %v1980
      %v1982 = vpop.f32.mrb[0].mxu0
      %1983 = vmatprep.mubr.f32.mxu0 0.0
      %1984 = vmatmul.mubr.f32.gmra.mrb[0].mxu0 %v1879
      %v1985 = vpop.f32.mrb[0].mxu0
      %v1986 = vadd.f32 0.0, %v1985
      %v1987 = vpop.f32.mrb[0].mxu0
      %1988 = vmatprep.mubr.f32.mxu0 0.0
      %1989 = vmatmul.mubr.f32.gmra.mrb[0].mxu0 %v1880
      %v1990 = vpop.f32.mrb[0].mxu0
      %v1991 = vadd.f32 0.0, %v1990
      %v1992 = vpop.f32.mrb[0].mxu0
      %1993 = vmatprep.mubr.f32.mxu0 0.0
      %1994 = vmatmul.mubr.f32.gmra.mrb[0].mxu0 %v1881
      %v1995 = vpop.f32.mrb[0].mxu0
      %v1996 = vadd.f32 0.0, %v1995
      %v1997 = vpop.f32.mrb[0].mxu0
      %1998 = vmatprep.mubr.f32.mxu0 0.0
      %1999 = vmatmul.mubr.f32.gmra.mrb[0].mxu0 %v1882
      %v2000 = vpop.f32.mrb[0].mxu0
      %v2001 = vadd.f32 0.0, %v2000
      %v2002 = vpop.f32.mrb[0].mxu0
      %2003 = vmatprep.mubr.f32.mxu0 0.0
      %2004 = vmatmul.mubr.f32.gmra.mrb[0].mxu0 %v1883
      %v2005 = vpop.f32.mrb[0].mxu0
      %v2006 = vadd.f32 0.0, %v2005
      %v2007 = vpop.f32.mrb[0].mxu0
      %2008 = vmatprep.mubr.f32.mxu0 0.0
      %2009 = vmatmul.mubr.f32.gmra.mrb[0].mxu0 %v1884
      %v2010 = vpop.f32.mrb[0].mxu0
      %v2011 = vadd.f32 0.0, %v2010
      %v2012 = vpop.f32.mrb[0].mxu0
      %2013 = vmatprep.mubr.f32.mxu0 0.0
      %2014 = vmatmul.mubr.f32.gmra.mrb[0].mxu0 %v1885
      %v2015 = vpop.f32.mrb[0].mxu0
      %v2016 = vadd.f32 0.0, %v2015
      %v2017 = vpop.f32.mrb[0].mxu0
      %2018 = vmatprep.mubr.f32.mxu0 0.0
      %2019 = vmatmul.mubr.f32.gmra.mrb[0].mxu0 %v1886
      %v2020 = vpop.f32.mrb[0].mxu0
      %v2021 = vadd.f32 0.0, %v2020
      %v2022 = vpop.f32.mrb[0].mxu0
      %2023 = vmatprep.mubr.f32.mxu0 0.0
      %2024 = vmatmul.mubr.f32.gmra.mrb[0].mxu0 %v1887
      %v2025 = vpop.f32.mrb[0].mxu0
      %v2026 = vadd.f32 0.0, %v2025
      %v2027 = vpop.f32.mrb[0].mxu0
      %2028 = vmatprep.mubr.f32.mxu0 0.0
      %2029 = vmatmul.mubr.f32.gmra.mrb[0].mxu0 %v1888
      %v2030 = vpop.f32.mrb[0].mxu0
      %v2031 = vadd.f32 0.0, %v2030
      %v2032 = vpop.f32.mrb[0].mxu0
      %2033 = vdwg.mxu0
      %v2034 = vsel %vm1631, %v1956, -inf
      %2035 = vmax.xlane.f32.xlu0 %v2034
      %v2036 = vpop.xlane.xlu0 %2035
      %v2037 = vsel %vm1631, %v1961, -inf
      %2038 = vmax.xlane.f32.xlu0 %v2037
      %v2039 = vpop.xlane.xlu0 %2038
      %v2040 = vsel %vm1631, %v1966, -inf
      %2041 = vmax.xlane.f32.xlu0 %v2040
      %v2042 = vpop.xlane.xlu0 %2041
      %v2043 = vsel %vm1631, %v1971, -inf
      %2044 = vmax.xlane.f32.xlu0 %v2043
      %v2045 = vpop.xlane.xlu0 %2044
      %v2046 = vsel %vm1631, %v1976, -inf
      %2047 = vmax.xlane.f32.xlu0 %v2046
      %v2048 = vpop.xlane.xlu0 %2047
      %v2049 = vsel %vm1631, %v1981, -inf
      %2050 = vmax.xlane.f32.xlu0 %v2049
      %v2051 = vpop.xlane.xlu0 %2050
      %v2052 = vsel %vm1631, %v1986, -inf
      %2053 = vmax.xlane.f32.xlu0 %v2052
      %v2054 = vpop.xlane.xlu0 %2053
      %v2055 = vsel %vm1631, %v1991, -inf
      %2056 = vmax.xlane.f32.xlu0 %v2055
      %v2057 = vpop.xlane.xlu0 %2056
      %v2058 = vsel %vm1631, %v1996, -inf
      %2059 = vmax.xlane.f32.xlu0 %v2058
      %v2060 = vpop.xlane.xlu0 %2059
      %v2061 = vsel %vm1631, %v2001, -inf
      %2062 = vmax.xlane.f32.xlu0 %v2061
      %v2063 = vpop.xlane.xlu0 %2062
      %v2064 = vsel %vm1631, %v2006, -inf
      %2065 = vmax.xlane.f32.xlu0 %v2064
      %v2066 = vpop.xlane.xlu0 %2065
      %v2067 = vsel %vm1631, %v2011, -inf
      %2068 = vmax.xlane.f32.xlu0 %v2067
      %v2069 = vpop.xlane.xlu0 %2068
      %v2070 = vsel %vm1631, %v2016, -inf
      %2071 = vmax.xlane.f32.xlu0 %v2070
      %v2072 = vpop.xlane.xlu0 %2071
      %v2073 = vsel %vm1631, %v2021, -inf
      %2074 = vmax.xlane.f32.xlu0 %v2073
      %v2075 = vpop.xlane.xlu0 %2074
      %v2076 = vsel %vm1631, %v2026, -inf
      %2077 = vmax.xlane.f32.xlu0 %v2076
      %v2078 = vpop.xlane.xlu0 %2077
      %v2079 = vsel %vm1631, %v2031, -inf
      %2080 = vmax.xlane.f32.xlu0 %v2079
      %v2081 = vpop.xlane.xlu0 %2080
      %v2082 = vmax.f32 %v2036, %v2048
      %v2083 = vmax.f32 %v2039, %v2051
      %v2084 = vmax.f32 %v2042, %v2054
      %v2085 = vmax.f32 %v2045, %v2057
      %v2086 = vmax.f32 %v2082, %v2060
      %v2087 = vmax.f32 %v2083, %v2063
      %v2088 = vmax.f32 %v2084, %v2066
      %v2089 = vmax.f32 %v2085, %v2069
      %v2090 = vmax.f32 %v2086, %v2072
      %v2091 = vmax.f32 %v2087, %v2075
      %v2092 = vmax.f32 %v2088, %v2078
      %v2093 = vmax.f32 %v2089, %v2081
      %v2094 = vmax.f32 %v2090, %v2091
      %v2095 = vmax.f32 %v2092, %v2093
      %v2096 = vmax.f32 %v2094, %v2095
      %v2097 = vrot.slane %v2096, 4
      %v2098 = vmax.f32 %v2096, %v2097
      %v2099 = vrot.slane %v2098, 2
      %v2100 = vmax.f32 %v2098, %v2099
      %v2101 = vrot.slane %v2100, 1
      %v2102 = vmax.f32 %v2100, %v2101
      %v2103 = vsub.f32 %v1956, %v2102
      %v2104 = vsub.f32 %v1961, %v2102
      %v2105 = vsub.f32 %v1966, %v2102
      %v2106 = vsub.f32 %v1971, %v2102
      %v2107 = vsub.f32 %v1976, %v2102
      %v2108 = vsub.f32 %v1981, %v2102
      %v2109 = vsub.f32 %v1986, %v2102
      %v2110 = vsub.f32 %v1991, %v2102
      %v2111 = vsub.f32 %v1996, %v2102
      %v2112 = vsub.f32 %v2001, %v2102
      %v2113 = vsub.f32 %v2006, %v2102
      %v2114 = vsub.f32 %v2011, %v2102
      %v2115 = vsub.f32 %v2016, %v2102
      %v2116 = vsub.f32 %v2021, %v2102
      %v2117 = vsub.f32 %v2026, %v2102
      %v2118 = vsub.f32 %v2031, %v2102
      %v2119 = vmul.f32 %v2103, 1.442695
      %v2120 = vpow.pop %v2119
      %v2121 = vmul.f32 %v2104, 1.442695
      %v2122 = vpow.pop %v2121
      %v2123 = vmul.f32 %v2105, 1.442695
      %v2124 = vpow.pop %v2123
      %v2125 = vmul.f32 %v2106, 1.442695
      %v2126 = vpow.pop %v2125
      %v2127 = vmul.f32 %v2107, 1.442695
      %v2128 = vpow.pop %v2127
      %v2129 = vmul.f32 %v2108, 1.442695
      %v2130 = vpow.pop %v2129
      %v2131 = vmul.f32 %v2109, 1.442695
      %v2132 = vpow.pop %v2131
      %v2133 = vmul.f32 %v2110, 1.442695
      %v2134 = vpow.pop %v2133
      %v2135 = vmul.f32 %v2111, 1.442695
      %v2136 = vpow.pop %v2135
      %v2137 = vmul.f32 %v2112, 1.442695
      %v2138 = vpow.pop %v2137
      %v2139 = vmul.f32 %v2113, 1.442695
      %v2140 = vpow.pop %v2139
      %v2141 = vmul.f32 %v2114, 1.442695
      %v2142 = vpow.pop %v2141
      %v2143 = vmul.f32 %v2115, 1.442695
      %v2144 = vpow.pop %v2143
      %v2145 = vmul.f32 %v2116, 1.442695
      %v2146 = vpow.pop %v2145
      %v2147 = vmul.f32 %v2117, 1.442695
      %v2148 = vpow.pop %v2147
      %v2149 = vmul.f32 %v2118, 1.442695
      %v2150 = vpow.pop %v2149
      %2151 = vmatprep.subr.mxu0 0.0
      %2152 = vmatpush1.msra.mxu0 %v2120
      %2153 = vmatprep.subr.mxu0 0.0
      %2154 = vmatpush1.msra.mxu0 %v2122
      %2155 = vmatprep.subr.mxu0 0.0
      %2156 = vmatpush1.msra.mxu0 %v2124
      %2157 = vmatprep.subr.mxu0 0.0
      %2158 = vmatpush1.msra.mxu0 %v2126
      %2159 = vmatprep.subr.mxu0 0.0
      %2160 = vmatpush1.msra.mxu0 %v2128
      %2161 = vmatprep.subr.mxu0 0.0
      %2162 = vmatpush1.msra.mxu0 %v2130
      %2163 = vmatprep.subr.mxu0 0.0
      %2164 = vmatpush1.msra.mxu0 %v2132
      %2165 = vmatprep.subr.mxu0 0.0
      %2166 = vmatpush1.msra.mxu0 %v2134
      %2167 = vmatprep.subr.mxu0 0.0
      %2168 = vmatpush1.msra.mxu0 %v2136
      %2169 = vmatprep.subr.mxu0 0.0
      %2170 = vmatpush1.msra.mxu0 %v2138
      %2171 = vmatprep.subr.mxu0 0.0
      %2172 = vmatpush1.msra.mxu0 %v2140
      %2173 = vmatprep.subr.mxu0 0.0
      %2174 = vmatpush1.msra.mxu0 %v2142
      %2175 = vmatprep.subr.mxu0 0.0
      %2176 = vmatpush1.msra.mxu0 %v2144
      %2177 = vmatprep.subr.mxu0 0.0
      %2178 = vmatpush1.msra.mxu0 %v2146
      %2179 = vmatprep.subr.mxu0 0.0
      %2180 = vmatpush1.msra.mxu0 %v2148
      %2181 = vmatprep.subr.mxu0 0.0
      %2182 = vmatpush1.msra.mxu0 %v2150
      %2183 = vmatprep.subr.mxu0 0.0
      %2184 = vmatpush1.msra.mxu0 0.0
      %2185 = vmatprep.subr.mxu0 0.0
      %2186 = vmatpush1.msra.mxu0 0.0
      %2187 = vmatprep.subr.mxu0 0.0
      %2188 = vmatpush1.msra.mxu0 0.0
      %2189 = vmatprep.subr.mxu0 0.0
      %2190 = vmatpush1.msra.mxu0 0.0
      %2191 = vmatprep.subr.mxu0 0.0
      %2192 = vmatpush1.msra.mxu0 0.0
      %2193 = vmatprep.subr.mxu0 0.0
      %2194 = vmatpush1.msra.mxu0 0.0
      %2195 = vmatprep.subr.mxu0 0.0
      %2196 = vmatpush1.msra.mxu0 0.0
      %2197 = vmatprep.subr.mxu0 0.0
      %2198 = vmatpush1.msra.mxu0 0.0
      %2199 = vmatprep.subr.mxu0 0.0
      %2200 = vmatpush1.msra.mxu0 0.0
      %2201 = vmatprep.subr.mxu0 0.0
      %2202 = vmatpush1.msra.mxu0 0.0
      %2203 = vmatprep.subr.mxu0 0.0
      %2204 = vmatpush1.msra.mxu0 0.0
      %2205 = vmatprep.subr.mxu0 0.0
      %2206 = vmatpush1.msra.mxu0 0.0
      %2207 = vmatprep.subr.mxu0 0.0
      %2208 = vmatpush1.msra.mxu0 0.0
      %2209 = vmatprep.subr.mxu0 0.0
      %2210 = vmatpush1.msra.mxu0 0.0
      %2211 = vmatprep.subr.mxu0 0.0
      %2212 = vmatpush1.msra.mxu0 0.0
      %2213 = vmatprep.subr.mxu0 0.0
      %2214 = vmatpush1.msra.mxu0 0.0
      %2215 = vmatprep.mubr.f32.mxu0 0.0
      %2216 = vmatmul.mubr.f32.gmra.mrb[0].mxu0 %v492
      %v2217 = vpop.f32.mrb[0].mxu0
      %v2218 = vadd.f32 0.0, %v2217
      %v2219 = vpop.f32.mrb[0].mxu0
      %2220 = vmatprep.mubr.f32.mxu0 0.0
      %2221 = vmatmul.mubr.f32.gmra.mrb[0].mxu0 %v493
      %v2222 = vpop.f32.mrb[0].mxu0
      %v2223 = vadd.f32 0.0, %v2222
      %v2224 = vpop.f32.mrb[0].mxu0
      %2225 = vmatprep.mubr.f32.mxu0 0.0
      %2226 = vmatmul.mubr.f32.gmra.mrb[0].mxu0 %v494
      %v2227 = vpop.f32.mrb[0].mxu0
      %v2228 = vadd.f32 0.0, %v2227
      %v2229 = vpop.f32.mrb[0].mxu0
      %2230 = vmatprep.mubr.f32.mxu0 0.0
      %2231 = vmatmul.mubr.f32.gmra.mrb[0].mxu0 %v495
      %v2232 = vpop.f32.mrb[0].mxu0
      %v2233 = vadd.f32 0.0, %v2232
      %v2234 = vpop.f32.mrb[0].mxu0
      %2235 = vmatprep.mubr.f32.mxu0 0.0
      %2236 = vmatmul.mubr.f32.gmra.mrb[0].mxu0 %v496
      %v2237 = vpop.f32.mrb[0].mxu0
      %v2238 = vadd.f32 0.0, %v2237
      %v2239 = vpop.f32.mrb[0].mxu0
      %2240 = vmatprep.mubr.f32.mxu0 0.0
      %2241 = vmatmul.mubr.f32.gmra.mrb[0].mxu0 %v497
      %v2242 = vpop.f32.mrb[0].mxu0
      %v2243 = vadd.f32 0.0, %v2242
      %v2244 = vpop.f32.mrb[0].mxu0
      %2245 = vmatprep.mubr.f32.mxu0 0.0
      %2246 = vmatmul.mubr.f32.gmra.mrb[0].mxu0 %v498
      %v2247 = vpop.f32.mrb[0].mxu0
      %v2248 = vadd.f32 0.0, %v2247
      %v2249 = vpop.f32.mrb[0].mxu0
      %2250 = vmatprep.mubr.f32.mxu0 0.0
      %2251 = vmatmul.mubr.f32.gmra.mrb[0].mxu0 %v499
      %v2252 = vpop.f32.mrb[0].mxu0
      %v2253 = vadd.f32 0.0, %v2252
      %v2254 = vpop.f32.mrb[0].mxu0
      %2255 = vmatprep.mubr.f32.mxu0 0.0
      %2256 = vmatmul.mubr.f32.gmra.mrb[0].mxu0 %v500
      %v2257 = vpop.f32.mrb[0].mxu0
      %v2258 = vadd.f32 0.0, %v2257
      %v2259 = vpop.f32.mrb[0].mxu0
      %2260 = vmatprep.mubr.f32.mxu0 0.0
      %2261 = vmatmul.mubr.f32.gmra.mrb[0].mxu0 %v501
      %v2262 = vpop.f32.mrb[0].mxu0
      %v2263 = vadd.f32 0.0, %v2262
      %v2264 = vpop.f32.mrb[0].mxu0
      %2265 = vmatprep.mubr.f32.mxu0 0.0
      %2266 = vmatmul.mubr.f32.gmra.mrb[0].mxu0 %v502
      %v2267 = vpop.f32.mrb[0].mxu0
      %v2268 = vadd.f32 0.0, %v2267
      %v2269 = vpop.f32.mrb[0].mxu0
      %2270 = vmatprep.mubr.f32.mxu0 0.0
      %2271 = vmatmul.mubr.f32.gmra.mrb[0].mxu0 %v503
      %v2272 = vpop.f32.mrb[0].mxu0
      %v2273 = vadd.f32 0.0, %v2272
      %v2274 = vpop.f32.mrb[0].mxu0
      %2275 = vmatprep.mubr.f32.mxu0 0.0
      %2276 = vmatmul.mubr.f32.gmra.mrb[0].mxu0 %v504
      %v2277 = vpop.f32.mrb[0].mxu0
      %v2278 = vadd.f32 0.0, %v2277
      %v2279 = vpop.f32.mrb[0].mxu0
      %2280 = vmatprep.mubr.f32.mxu0 0.0
      %2281 = vmatmul.mubr.f32.gmra.mrb[0].mxu0 %v505
      %v2282 = vpop.f32.mrb[0].mxu0
      %v2283 = vadd.f32 0.0, %v2282
      %v2284 = vpop.f32.mrb[0].mxu0
      %2285 = vmatprep.mubr.f32.mxu0 0.0
      %2286 = vmatmul.mubr.f32.gmra.mrb[0].mxu0 %v506
      %v2287 = vpop.f32.mrb[0].mxu0
      %v2288 = vadd.f32 0.0, %v2287
      %v2289 = vpop.f32.mrb[0].mxu0
      %2290 = vmatprep.mubr.f32.mxu0 0.0
      %2291 = vmatmul.mubr.f32.gmra.mrb[0].mxu0 %v507
      %v2292 = vpop.f32.mrb[0].mxu0
      %v2293 = vadd.f32 0.0, %v2292
      %v2294 = vpop.f32.mrb[0].mxu0
      %2295 = vdwg.mxu0
      %v2296 = vsel %vm1631, %v2218, 0.0
      %2297 = vadd.xlane.f32.xlu0 %v2296
      %v2298 = vpop.xlane.xlu0 %2297
      %v2299 = vsel %vm1631, %v2223, 0.0
      %2300 = vadd.xlane.f32.xlu0 %v2299
      %v2301 = vpop.xlane.xlu0 %2300
      %v2302 = vsel %vm1631, %v2228, 0.0
      %2303 = vadd.xlane.f32.xlu0 %v2302
      %v2304 = vpop.xlane.xlu0 %2303
      %v2305 = vsel %vm1631, %v2233, 0.0
      %2306 = vadd.xlane.f32.xlu0 %v2305
      %v2307 = vpop.xlane.xlu0 %2306
      %v2308 = vsel %vm1631, %v2238, 0.0
      %2309 = vadd.xlane.f32.xlu0 %v2308
      %v2310 = vpop.xlane.xlu0 %2309
      %v2311 = vsel %vm1631, %v2243, 0.0
      %2312 = vadd.xlane.f32.xlu0 %v2311
      %v2313 = vpop.xlane.xlu0 %2312
      %v2314 = vsel %vm1631, %v2248, 0.0
      %2315 = vadd.xlane.f32.xlu0 %v2314
      %v2316 = vpop.xlane.xlu0 %2315
      %v2317 = vsel %vm1631, %v2253, 0.0
      %2318 = vadd.xlane.f32.xlu0 %v2317
      %v2319 = vpop.xlane.xlu0 %2318
      %v2320 = vsel %vm1631, %v2258, 0.0
      %2321 = vadd.xlane.f32.xlu0 %v2320
      %v2322 = vpop.xlane.xlu0 %2321
      %v2323 = vsel %vm1631, %v2263, 0.0
      %2324 = vadd.xlane.f32.xlu0 %v2323
      %v2325 = vpop.xlane.xlu0 %2324
      %v2326 = vsel %vm1631, %v2268, 0.0
      %2327 = vadd.xlane.f32.xlu0 %v2326
      %v2328 = vpop.xlane.xlu0 %2327
      %v2329 = vsel %vm1631, %v2273, 0.0
      %2330 = vadd.xlane.f32.xlu0 %v2329
      %v2331 = vpop.xlane.xlu0 %2330
      %v2332 = vsel %vm1631, %v2278, 0.0
      %2333 = vadd.xlane.f32.xlu0 %v2332
      %v2334 = vpop.xlane.xlu0 %2333
      %v2335 = vsel %vm1631, %v2283, 0.0
      %2336 = vadd.xlane.f32.xlu0 %v2335
      %v2337 = vpop.xlane.xlu0 %2336
      %v2338 = vsel %vm1631, %v2288, 0.0
      %2339 = vadd.xlane.f32.xlu0 %v2338
      %v2340 = vpop.xlane.xlu0 %2339
      %v2341 = vsel %vm1631, %v2293, 0.0
      %2342 = vadd.xlane.f32.xlu0 %v2341
      %v2343 = vpop.xlane.xlu0 %2342
      %v2344 = vrcp.pop %v2298
      %v2345 = vrcp.pop %v2301
      %v2346 = vrcp.pop %v2304
      %v2347 = vrcp.pop %v2307
      %v2348 = vrcp.pop %v2310
      %v2349 = vrcp.pop %v2313
      %v2350 = vrcp.pop %v2316
      %v2351 = vrcp.pop %v2319
      %v2352 = vrcp.pop %v2322
      %v2353 = vrcp.pop %v2325
      %v2354 = vrcp.pop %v2328
      %v2355 = vrcp.pop %v2331
      %v2356 = vrcp.pop %v2334
      %v2357 = vrcp.pop %v2337
      %v2358 = vrcp.pop %v2340
      %v2359 = vrcp.pop %v2343
      %v2360 = vmul.f32 %v2120, %v2344
      %v2361 = vmul.f32 %v2122, %v2345
      %v2362 = vmul.f32 %v2124, %v2346
      %v2363 = vmul.f32 %v2126, %v2347
      %v2364 = vmul.f32 %v2128, %v2348
      %v2365 = vmul.f32 %v2130, %v2349
      %v2366 = vmul.f32 %v2132, %v2350
      %v2367 = vmul.f32 %v2134, %v2351
      %v2368 = vmul.f32 %v2136, %v2352
      %v2369 = vmul.f32 %v2138, %v2353
      %v2370 = vmul.f32 %v2140, %v2354
      %v2371 = vmul.f32 %v2142, %v2355
      %v2372 = vmul.f32 %v2144, %v2356
      %v2373 = vmul.f32 %v2146, %v2357
      %v2374 = vmul.f32 %v2148, %v2358
      %v2375 = vmul.f32 %v2150, %v2359
      %v2376 = vmul.f32 %v2360, %v1537
      %v2377 = vmul.f32 %v2361, %v1542
      %v2378 = vmul.f32 %v2362, %v1547
      %v2379 = vmul.f32 %v2363, %v1552
      %v2380 = vmul.f32 %v2364, %v1557
      %v2381 = vmul.f32 %v2365, %v1562
      %v2382 = vmul.f32 %v2366, %v1567
      %v2383 = vmul.f32 %v2367, %v1572
      %v2384 = vmul.f32 %v2368, %v1577
      %v2385 = vmul.f32 %v2369, %v1582
      %v2386 = vmul.f32 %v2370, %v1587
      %v2387 = vmul.f32 %v2371, %v1592
      %v2388 = vmul.f32 %v2372, %v1597
      %v2389 = vmul.f32 %v2373, %v1602
      %v2390 = vmul.f32 %v2374, %v1607
      %v2391 = vmul.f32 %v2375, %v1612
      %v2392 = vld [vmem:[%s12] sm:$0xff]
      %v2393 = vld [vmem:[%s12 + $0x8] sm:$0xff]
      %v2394 = vld [vmem:[%s12 + $0x10] sm:$0xff]
      %v2395 = vld [vmem:[%s12 + $0x18] sm:$0xff]
      %v2396 = vld [vmem:[%s12 + $0x20] sm:$0xff]
      %v2397 = vld [vmem:[%s12 + $0x28] sm:$0xff]
      %v2398 = vld [vmem:[%s12 + $0x30] sm:$0xff]
      %v2399 = vld [vmem:[%s12 + $0x38] sm:$0xff]
      %v2400 = vld [vmem:[%s12 + $0x40] sm:$0xff]
      %v2401 = vld [vmem:[%s12 + $0x48] sm:$0xff]
      %v2402 = vld [vmem:[%s12 + $0x50] sm:$0xff]
      %v2403 = vld [vmem:[%s12 + $0x58] sm:$0xff]
      %v2404 = vld [vmem:[%s12 + $0x60] sm:$0xff]
      %v2405 = vld [vmem:[%s12 + $0x68] sm:$0xff]
      %v2406 = vld [vmem:[%s12 + $0x70] sm:$0xff]
      %v2407 = vld [vmem:[%s12 + $0x78] sm:$0xff]
      %v2408 = vld [vmem:[%s12 + $0x80] sm:$0xff]
      %v2409 = vld [vmem:[%s12 + $0x88] sm:$0xff]
      %v2410 = vld [vmem:[%s12 + $0x90] sm:$0xff]
      %v2411 = vld [vmem:[%s12 + $0x98] sm:$0xff]
      %v2412 = vld [vmem:[%s12 + $0xa0] sm:$0xff]
      %v2413 = vld [vmem:[%s12 + $0xa8] sm:$0xff]
      %v2414 = vld [vmem:[%s12 + $0xb0] sm:$0xff]
      %v2415 = vld [vmem:[%s12 + $0xb8] sm:$0xff]
      %v2416 = vld [vmem:[%s12 + $0xc0] sm:$0xff]
      %v2417 = vld [vmem:[%s12 + $0xc8] sm:$0xff]
      %v2418 = vld [vmem:[%s12 + $0xd0] sm:$0xff]
      %v2419 = vld [vmem:[%s12 + $0xd8] sm:$0xff]
      %v2420 = vld [vmem:[%s12 + $0xe0] sm:$0xff]
      %v2421 = vld [vmem:[%s12 + $0xe8] sm:$0xff]
      %v2422 = vld [vmem:[%s12 + $0xf0] sm:$0xff]
      %v2423 = vld [vmem:[%s12 + $0xf8] sm:$0xff]
      %v2424 = vld [vmem:[%s12 + $0x100] sm:$0xff]
      %v2425 = vld [vmem:[%s12 + $0x108] sm:$0xff]
      %v2426 = vld [vmem:[%s12 + $0x110] sm:$0xff]
      %v2427 = vld [vmem:[%s12 + $0x118] sm:$0xff]
      %v2428 = vld [vmem:[%s12 + $0x120] sm:$0xff]
      %v2429 = vld [vmem:[%s12 + $0x128] sm:$0xff]
      %v2430 = vld [vmem:[%s12 + $0x130] sm:$0xff]
      %v2431 = vld [vmem:[%s12 + $0x138] sm:$0xff]
      %v2432 = vld [vmem:[%s12 + $0x140] sm:$0xff]
      %v2433 = vld [vmem:[%s12 + $0x148] sm:$0xff]
      %v2434 = vld [vmem:[%s12 + $0x150] sm:$0xff]
      %v2435 = vld [vmem:[%s12 + $0x158] sm:$0xff]
      %v2436 = vld [vmem:[%s12 + $0x160] sm:$0xff]
      %v2437 = vld [vmem:[%s12 + $0x168] sm:$0xff]
      %v2438 = vld [vmem:[%s12 + $0x170] sm:$0xff]
      %v2439 = vld [vmem:[%s12 + $0x178] sm:$0xff]
      %v2440 = vld [vmem:[%s13] sm:$0xff]
      %v2441 = vld [vmem:[%s13 + $0x8] sm:$0xff]
      %v2442 = vld [vmem:[%s13 + $0x10] sm:$0xff]
      %v2443 = vld [vmem:[%s13 + $0x18] sm:$0xff]
      %v2444 = vld [vmem:[%s13 + $0x20] sm:$0xff]
      %v2445 = vld [vmem:[%s13 + $0x28] sm:$0xff]
      %v2446 = vld [vmem:[%s13 + $0x30] sm:$0xff]
      %v2447 = vld [vmem:[%s13 + $0x38] sm:$0xff]
      %v2448 = vld [vmem:[%s13 + $0x40] sm:$0xff]
      %v2449 = vld [vmem:[%s13 + $0x48] sm:$0xff]
      %v2450 = vld [vmem:[%s13 + $0x50] sm:$0xff]
      %v2451 = vld [vmem:[%s13 + $0x58] sm:$0xff]
      %v2452 = vld [vmem:[%s13 + $0x60] sm:$0xff]
      %v2453 = vld [vmem:[%s13 + $0x68] sm:$0xff]
      %v2454 = vld [vmem:[%s13 + $0x70] sm:$0xff]
      %v2455 = vld [vmem:[%s13 + $0x78] sm:$0xff]
      %v2456 = vld [vmem:[%s13 + $0x80] sm:$0xff]
      %v2457 = vld [vmem:[%s13 + $0x88] sm:$0xff]
      %v2458 = vld [vmem:[%s13 + $0x90] sm:$0xff]
      %v2459 = vld [vmem:[%s13 + $0x98] sm:$0xff]
      %v2460 = vld [vmem:[%s13 + $0xa0] sm:$0xff]
      %v2461 = vld [vmem:[%s13 + $0xa8] sm:$0xff]
      %v2462 = vld [vmem:[%s13 + $0xb0] sm:$0xff]
      %v2463 = vld [vmem:[%s13 + $0xb8] sm:$0xff]
      %v2464 = vld [vmem:[%s13 + $0xc0] sm:$0xff]
      %v2465 = vld [vmem:[%s13 + $0xc8] sm:$0xff]
      %v2466 = vld [vmem:[%s13 + $0xd0] sm:$0xff]
      %v2467 = vld [vmem:[%s13 + $0xd8] sm:$0xff]
      %v2468 = vld [vmem:[%s13 + $0xe0] sm:$0xff]
      %v2469 = vld [vmem:[%s13 + $0xe8] sm:$0xff]
      %v2470 = vld [vmem:[%s13 + $0xf0] sm:$0xff]
      %v2471 = vld [vmem:[%s13 + $0xf8] sm:$0xff]
      %v2472 = vld [vmem:[%s13 + $0x100] sm:$0xff]
      %v2473 = vld [vmem:[%s13 + $0x108] sm:$0xff]
      %v2474 = vld [vmem:[%s13 + $0x110] sm:$0xff]
      %v2475 = vld [vmem:[%s13 + $0x118] sm:$0xff]
      %v2476 = vld [vmem:[%s13 + $0x120] sm:$0xff]
      %v2477 = vld [vmem:[%s13 + $0x128] sm:$0xff]
      %v2478 = vld [vmem:[%s13 + $0x130] sm:$0xff]
      %v2479 = vld [vmem:[%s13 + $0x138] sm:$0xff]
      %v2480 = vld [vmem:[%s13 + $0x140] sm:$0xff]
      %v2481 = vld [vmem:[%s13 + $0x148] sm:$0xff]
      %v2482 = vld [vmem:[%s13 + $0x150] sm:$0xff]
      %v2483 = vld [vmem:[%s13 + $0x158] sm:$0xff]
      %v2484 = vld [vmem:[%s13 + $0x160] sm:$0xff]
      %v2485 = vld [vmem:[%s13 + $0x168] sm:$0xff]
      %v2486 = vld [vmem:[%s13 + $0x170] sm:$0xff]
      %v2487 = vld [vmem:[%s13 + $0x178] sm:$0xff]
      %2489 = vset.pattern.permute.xlu0 0
      %2490 = vperm.xlu0 %2489, %v2440
      %v2491 = vpop.permute.xlu0 %2490
      %2494 = vset.pattern.permute.xlu0 0
      %2495 = vperm.xlu0 %2494, %v2441
      %v2496 = vpop.permute.xlu0 %2495
      %2499 = vset.pattern.permute.xlu0 0
      %2500 = vperm.xlu0 %2499, %v2442
      %v2501 = vpop.permute.xlu0 %2500
      %2504 = vset.pattern.permute.xlu0 0
      %2505 = vperm.xlu0 %2504, %v2443
      %v2506 = vpop.permute.xlu0 %2505
      %2509 = vset.pattern.permute.xlu0 0
      %2510 = vperm.xlu0 %2509, %v2444
      %v2511 = vpop.permute.xlu0 %2510
      %2514 = vset.pattern.permute.xlu0 0
      %2515 = vperm.xlu0 %2514, %v2445
      %v2516 = vpop.permute.xlu0 %2515
      %2519 = vset.pattern.permute.xlu0 0
      %2520 = vperm.xlu0 %2519, %v2446
      %v2521 = vpop.permute.xlu0 %2520
      %2524 = vset.pattern.permute.xlu0 0
      %2525 = vperm.xlu0 %2524, %v2447
      %v2526 = vpop.permute.xlu0 %2525
      %2529 = vset.pattern.permute.xlu0 0
      %2530 = vperm.xlu0 %2529, %v2448
      %v2531 = vpop.permute.xlu0 %2530
      %2534 = vset.pattern.permute.xlu0 0
      %2535 = vperm.xlu0 %2534, %v2449
      %v2536 = vpop.permute.xlu0 %2535
      %2539 = vset.pattern.permute.xlu0 0
      %2540 = vperm.xlu0 %2539, %v2450
      %v2541 = vpop.permute.xlu0 %2540
      %2544 = vset.pattern.permute.xlu0 0
      %2545 = vperm.xlu0 %2544, %v2451
      %v2546 = vpop.permute.xlu0 %2545
      %2549 = vset.pattern.permute.xlu0 0
      %2550 = vperm.xlu0 %2549, %v2452
      %v2551 = vpop.permute.xlu0 %2550
      %2554 = vset.pattern.permute.xlu0 0
      %2555 = vperm.xlu0 %2554, %v2453
      %v2556 = vpop.permute.xlu0 %2555
      %2559 = vset.pattern.permute.xlu0 0
      %2560 = vperm.xlu0 %2559, %v2454
      %v2561 = vpop.permute.xlu0 %2560
      %2564 = vset.pattern.permute.xlu0 0
      %2565 = vperm.xlu0 %2564, %v2455
      %v2566 = vpop.permute.xlu0 %2565
      %2569 = vset.pattern.permute.xlu0 0
      %2570 = vperm.xlu0 %2569, %v2456
      %v2571 = vpop.permute.xlu0 %2570
      %2574 = vset.pattern.permute.xlu0 0
      %2575 = vperm.xlu0 %2574, %v2457
      %v2576 = vpop.permute.xlu0 %2575
      %2579 = vset.pattern.permute.xlu0 0
      %2580 = vperm.xlu0 %2579, %v2458
      %v2581 = vpop.permute.xlu0 %2580
      %2584 = vset.pattern.permute.xlu0 0
      %2585 = vperm.xlu0 %2584, %v2459
      %v2586 = vpop.permute.xlu0 %2585
      %2589 = vset.pattern.permute.xlu0 0
      %2590 = vperm.xlu0 %2589, %v2460
      %v2591 = vpop.permute.xlu0 %2590
      %2594 = vset.pattern.permute.xlu0 0
      %2595 = vperm.xlu0 %2594, %v2461
      %v2596 = vpop.permute.xlu0 %2595
      %2599 = vset.pattern.permute.xlu0 0
      %2600 = vperm.xlu0 %2599, %v2462
      %v2601 = vpop.permute.xlu0 %2600
      %2604 = vset.pattern.permute.xlu0 0
      %2605 = vperm.xlu0 %2604, %v2463
      %v2606 = vpop.permute.xlu0 %2605
      %2609 = vset.pattern.permute.xlu0 0
      %2610 = vperm.xlu0 %2609, %v2464
      %v2611 = vpop.permute.xlu0 %2610
      %2614 = vset.pattern.permute.xlu0 0
      %2615 = vperm.xlu0 %2614, %v2465
      %v2616 = vpop.permute.xlu0 %2615
      %2619 = vset.pattern.permute.xlu0 0
      %2620 = vperm.xlu0 %2619, %v2466
      %v2621 = vpop.permute.xlu0 %2620
      %2624 = vset.pattern.permute.xlu0 0
      %2625 = vperm.xlu0 %2624, %v2467
      %v2626 = vpop.permute.xlu0 %2625
      %2629 = vset.pattern.permute.xlu0 0
      %2630 = vperm.xlu0 %2629, %v2468
      %v2631 = vpop.permute.xlu0 %2630
      %2634 = vset.pattern.permute.xlu0 0
      %2635 = vperm.xlu0 %2634, %v2469
      %v2636 = vpop.permute.xlu0 %2635
      %2639 = vset.pattern.permute.xlu0 0
      %2640 = vperm.xlu0 %2639, %v2470
      %v2641 = vpop.permute.xlu0 %2640
      %2644 = vset.pattern.permute.xlu0 0
      %2645 = vperm.xlu0 %2644, %v2471
      %v2646 = vpop.permute.xlu0 %2645
      %2649 = vset.pattern.permute.xlu0 0
      %2650 = vperm.xlu0 %2649, %v2472
      %v2651 = vpop.permute.xlu0 %2650
      %2654 = vset.pattern.permute.xlu0 0
      %2655 = vperm.xlu0 %2654, %v2473
      %v2656 = vpop.permute.xlu0 %2655
      %2659 = vset.pattern.permute.xlu0 0
      %2660 = vperm.xlu0 %2659, %v2474
      %v2661 = vpop.permute.xlu0 %2660
      %2664 = vset.pattern.permute.xlu0 0
      %2665 = vperm.xlu0 %2664, %v2475
      %v2666 = vpop.permute.xlu0 %2665
      %2669 = vset.pattern.permute.xlu0 0
      %2670 = vperm.xlu0 %2669, %v2476
      %v2671 = vpop.permute.xlu0 %2670
      %2674 = vset.pattern.permute.xlu0 0
      %2675 = vperm.xlu0 %2674, %v2477
      %v2676 = vpop.permute.xlu0 %2675
      %2679 = vset.pattern.permute.xlu0 0
      %2680 = vperm.xlu0 %2679, %v2478
      %v2681 = vpop.permute.xlu0 %2680
      %2684 = vset.pattern.permute.xlu0 0
      %2685 = vperm.xlu0 %2684, %v2479
      %v2686 = vpop.permute.xlu0 %2685
      %2689 = vset.pattern.permute.xlu0 0
      %2690 = vperm.xlu0 %2689, %v2480
      %v2691 = vpop.permute.xlu0 %2690
      %2694 = vset.pattern.permute.xlu0 0
      %2695 = vperm.xlu0 %2694, %v2481
      %v2696 = vpop.permute.xlu0 %2695
      %2699 = vset.pattern.permute.xlu0 0
      %2700 = vperm.xlu0 %2699, %v2482
      %v2701 = vpop.permute.xlu0 %2700
      %2704 = vset.pattern.permute.xlu0 0
      %2705 = vperm.xlu0 %2704, %v2483
      %v2706 = vpop.permute.xlu0 %2705
      %2709 = vset.pattern.permute.xlu0 0
      %2710 = vperm.xlu0 %2709, %v2484
      %v2711 = vpop.permute.xlu0 %2710
      %2714 = vset.pattern.permute.xlu0 0
      %2715 = vperm.xlu0 %2714, %v2485
      %v2716 = vpop.permute.xlu0 %2715
      %2719 = vset.pattern.permute.xlu0 0
      %2720 = vperm.xlu0 %2719, %v2486
      %v2721 = vpop.permute.xlu0 %2720
      %2724 = vset.pattern.permute.xlu0 0
      %2725 = vperm.xlu0 %2724, %v2487
      %v2726 = vpop.permute.xlu0 %2725
      %2728 = vmatprep.subr.mxu0 0.0
      %2729 = vmatpush1.msra.mxu0 %v2376
      %2730 = vmatprep.subr.mxu0 0.0
      %2731 = vmatpush1.msra.mxu0 %v2377
      %2732 = vmatprep.subr.mxu0 0.0
      %2733 = vmatpush1.msra.mxu0 %v2378
      %2734 = vmatprep.subr.mxu0 0.0
      %2735 = vmatpush1.msra.mxu0 %v2379
      %2736 = vmatprep.subr.mxu0 0.0
      %2737 = vmatpush1.msra.mxu0 %v2380
      %2738 = vmatprep.subr.mxu0 0.0
      %2739 = vmatpush1.msra.mxu0 %v2381
      %2740 = vmatprep.subr.mxu0 0.0
      %2741 = vmatpush1.msra.mxu0 %v2382
      %2742 = vmatprep.subr.mxu0 0.0
      %2743 = vmatpush1.msra.mxu0 %v2383
      %2744 = vmatprep.subr.mxu0 0.0
      %2745 = vmatpush1.msra.mxu0 %v2384
      %2746 = vmatprep.subr.mxu0 0.0
      %2747 = vmatpush1.msra.mxu0 %v2385
      %2748 = vmatprep.subr.mxu0 0.0
      %2749 = vmatpush1.msra.mxu0 %v2386
      %2750 = vmatprep.subr.mxu0 0.0
      %2751 = vmatpush1.msra.mxu0 %v2387
      %2752 = vmatprep.subr.mxu0 0.0
      %2753 = vmatpush1.msra.mxu0 %v2388
      %2754 = vmatprep.subr.mxu0 0.0
      %2755 = vmatpush1.msra.mxu0 %v2389
      %2756 = vmatprep.subr.mxu0 0.0
      %2757 = vmatpush1.msra.mxu0 %v2390
      %2758 = vmatprep.subr.mxu0 0.0
      %2759 = vmatpush1.msra.mxu0 %v2391
      %2760 = vmatprep.subr.mxu0 0.0
      %2761 = vmatpush1.msra.mxu0 0.0
      %2762 = vmatprep.subr.mxu0 0.0
      %2763 = vmatpush1.msra.mxu0 0.0
      %2764 = vmatprep.subr.mxu0 0.0
      %2765 = vmatpush1.msra.mxu0 0.0
      %2766 = vmatprep.subr.mxu0 0.0
      %2767 = vmatpush1.msra.mxu0 0.0
      %2768 = vmatprep.subr.mxu0 0.0
      %2769 = vmatpush1.msra.mxu0 0.0
      %2770 = vmatprep.subr.mxu0 0.0
      %2771 = vmatpush1.msra.mxu0 0.0
      %2772 = vmatprep.subr.mxu0 0.0
      %2773 = vmatpush1.msra.mxu0 0.0
      %2774 = vmatprep.subr.mxu0 0.0
      %2775 = vmatpush1.msra.mxu0 0.0
      %2776 = vmatprep.subr.mxu0 0.0
      %2777 = vmatpush1.msra.mxu0 0.0
      %2778 = vmatprep.subr.mxu0 0.0
      %2779 = vmatpush1.msra.mxu0 0.0
      %2780 = vmatprep.subr.mxu0 0.0
      %2781 = vmatpush1.msra.mxu0 0.0
      %2782 = vmatprep.subr.mxu0 0.0
      %2783 = vmatpush1.msra.mxu0 0.0
      %2784 = vmatprep.subr.mxu0 0.0
      %2785 = vmatpush1.msra.mxu0 0.0
      %2786 = vmatprep.subr.mxu0 0.0
      %2787 = vmatpush1.msra.mxu0 0.0
      %2788 = vmatprep.subr.mxu0 0.0
      %2789 = vmatpush1.msra.mxu0 0.0
      %2790 = vmatprep.subr.mxu0 0.0
      %2791 = vmatpush1.msra.mxu0 0.0
      %2792 = vmatprep.mubr.f32.mxu0 0.0
      %2793 = vmatmul.mubr.f32.gmra.mrb[0].mxu0 %v2392
      %v2794 = vpop.f32.mrb[0].mxu0
      %v2795 = vadd.f32 %v2491, %v2794
      %v2796 = vpop.f32.mrb[0].mxu0
      %2797 = vmatprep.mubr.f32.mxu0 0.0
      %2798 = vmatmul.mubr.f32.gmra.mrb[0].mxu0 %v2393
      %v2799 = vpop.f32.mrb[0].mxu0
      %v2800 = vadd.f32 %v2496, %v2799
      %v2801 = vpop.f32.mrb[0].mxu0
      %2802 = vmatprep.mubr.f32.mxu0 0.0
      %2803 = vmatmul.mubr.f32.gmra.mrb[0].mxu0 %v2394
      %v2804 = vpop.f32.mrb[0].mxu0
      %v2805 = vadd.f32 %v2501, %v2804
      %v2806 = vpop.f32.mrb[0].mxu0
      %2807 = vmatprep.mubr.f32.mxu0 0.0
      %2808 = vmatmul.mubr.f32.gmra.mrb[0].mxu0 %v2395
      %v2809 = vpop.f32.mrb[0].mxu0
      %v2810 = vadd.f32 %v2506, %v2809
      %v2811 = vpop.f32.mrb[0].mxu0
      %2812 = vmatprep.mubr.f32.mxu0 0.0
      %2813 = vmatmul.mubr.f32.gmra.mrb[0].mxu0 %v2396
      %v2814 = vpop.f32.mrb[0].mxu0
      %v2815 = vadd.f32 %v2511, %v2814
      %v2816 = vpop.f32.mrb[0].mxu0
      %2817 = vmatprep.mubr.f32.mxu0 0.0
      %2818 = vmatmul.mubr.f32.gmra.mrb[0].mxu0 %v2397
      %v2819 = vpop.f32.mrb[0].mxu0
      %v2820 = vadd.f32 %v2516, %v2819
      %v2821 = vpop.f32.mrb[0].mxu0
      %2822 = vmatprep.mubr.f32.mxu0 0.0
      %2823 = vmatmul.mubr.f32.gmra.mrb[0].mxu0 %v2398
      %v2824 = vpop.f32.mrb[0].mxu0
      %v2825 = vadd.f32 %v2521, %v2824
      %v2826 = vpop.f32.mrb[0].mxu0
      %2827 = vmatprep.mubr.f32.mxu0 0.0
      %2828 = vmatmul.mubr.f32.gmra.mrb[0].mxu0 %v2399
      %v2829 = vpop.f32.mrb[0].mxu0
      %v2830 = vadd.f32 %v2526, %v2829
      %v2831 = vpop.f32.mrb[0].mxu0
      %2832 = vmatprep.mubr.f32.mxu0 0.0
      %2833 = vmatmul.mubr.f32.gmra.mrb[0].mxu0 %v2400
      %v2834 = vpop.f32.mrb[0].mxu0
      %v2835 = vadd.f32 %v2531, %v2834
      %v2836 = vpop.f32.mrb[0].mxu0
      %2837 = vmatprep.mubr.f32.mxu0 0.0
      %2838 = vmatmul.mubr.f32.gmra.mrb[0].mxu0 %v2401
      %v2839 = vpop.f32.mrb[0].mxu0
      %v2840 = vadd.f32 %v2536, %v2839
      %v2841 = vpop.f32.mrb[0].mxu0
      %2842 = vmatprep.mubr.f32.mxu0 0.0
      %2843 = vmatmul.mubr.f32.gmra.mrb[0].mxu0 %v2402
      %v2844 = vpop.f32.mrb[0].mxu0
      %v2845 = vadd.f32 %v2541, %v2844
      %v2846 = vpop.f32.mrb[0].mxu0
      %2847 = vmatprep.mubr.f32.mxu0 0.0
      %2848 = vmatmul.mubr.f32.gmra.mrb[0].mxu0 %v2403
      %v2849 = vpop.f32.mrb[0].mxu0
      %v2850 = vadd.f32 %v2546, %v2849
      %v2851 = vpop.f32.mrb[0].mxu0
      %2852 = vmatprep.mubr.f32.mxu0 0.0
      %2853 = vmatmul.mubr.f32.gmra.mrb[0].mxu0 %v2404
      %v2854 = vpop.f32.mrb[0].mxu0
      %v2855 = vadd.f32 %v2551, %v2854
      %v2856 = vpop.f32.mrb[0].mxu0
      %2857 = vmatprep.mubr.f32.mxu0 0.0
      %2858 = vmatmul.mubr.f32.gmra.mrb[0].mxu0 %v2405
      %v2859 = vpop.f32.mrb[0].mxu0
      %v2860 = vadd.f32 %v2556, %v2859
      %v2861 = vpop.f32.mrb[0].mxu0
      %2862 = vmatprep.mubr.f32.mxu0 0.0
      %2863 = vmatmul.mubr.f32.gmra.mrb[0].mxu0 %v2406
      %v2864 = vpop.f32.mrb[0].mxu0
      %v2865 = vadd.f32 %v2561, %v2864
      %v2866 = vpop.f32.mrb[0].mxu0
      %2867 = vmatprep.mubr.f32.mxu0 0.0
      %2868 = vmatmul.mubr.f32.gmra.mrb[0].mxu0 %v2407
      %v2869 = vpop.f32.mrb[0].mxu0
      %v2870 = vadd.f32 %v2566, %v2869
      %v2871 = vpop.f32.mrb[0].mxu0
      %2872 = vmatprep.mubr.f32.mxu0 0.0
      %2873 = vmatmul.mubr.f32.gmra.mrb[0].mxu0 %v2408
      %v2874 = vpop.f32.mrb[0].mxu0
      %v2875 = vadd.f32 %v2571, %v2874
      %v2876 = vpop.f32.mrb[0].mxu0
      %2877 = vmatprep.mubr.f32.mxu0 0.0
      %2878 = vmatmul.mubr.f32.gmra.mrb[0].mxu0 %v2409
      %v2879 = vpop.f32.mrb[0].mxu0
      %v2880 = vadd.f32 %v2576, %v2879
      %v2881 = vpop.f32.mrb[0].mxu0
      %2882 = vmatprep.mubr.f32.mxu0 0.0
      %2883 = vmatmul.mubr.f32.gmra.mrb[0].mxu0 %v2410
      %v2884 = vpop.f32.mrb[0].mxu0
      %v2885 = vadd.f32 %v2581, %v2884
      %v2886 = vpop.f32.mrb[0].mxu0
      %2887 = vmatprep.mubr.f32.mxu0 0.0
      %2888 = vmatmul.mubr.f32.gmra.mrb[0].mxu0 %v2411
      %v2889 = vpop.f32.mrb[0].mxu0
      %v2890 = vadd.f32 %v2586, %v2889
      %v2891 = vpop.f32.mrb[0].mxu0
      %2892 = vmatprep.mubr.f32.mxu0 0.0
      %2893 = vmatmul.mubr.f32.gmra.mrb[0].mxu0 %v2412
      %v2894 = vpop.f32.mrb[0].mxu0
      %v2895 = vadd.f32 %v2591, %v2894
      %v2896 = vpop.f32.mrb[0].mxu0
      %2897 = vmatprep.mubr.f32.mxu0 0.0
      %2898 = vmatmul.mubr.f32.gmra.mrb[0].mxu0 %v2413
      %v2899 = vpop.f32.mrb[0].mxu0
      %v2900 = vadd.f32 %v2596, %v2899
      %v2901 = vpop.f32.mrb[0].mxu0
      %2902 = vmatprep.mubr.f32.mxu0 0.0
      %2903 = vmatmul.mubr.f32.gmra.mrb[0].mxu0 %v2414
      %v2904 = vpop.f32.mrb[0].mxu0
      %v2905 = vadd.f32 %v2601, %v2904
      %v2906 = vpop.f32.mrb[0].mxu0
      %2907 = vmatprep.mubr.f32.mxu0 0.0
      %2908 = vmatmul.mubr.f32.gmra.mrb[0].mxu0 %v2415
      %v2909 = vpop.f32.mrb[0].mxu0
      %v2910 = vadd.f32 %v2606, %v2909
      %v2911 = vpop.f32.mrb[0].mxu0
      %2912 = vmatprep.mubr.f32.mxu0 0.0
      %2913 = vmatmul.mubr.f32.gmra.mrb[0].mxu0 %v2416
      %v2914 = vpop.f32.mrb[0].mxu0
      %v2915 = vadd.f32 %v2611, %v2914
      %v2916 = vpop.f32.mrb[0].mxu0
      %2917 = vmatprep.mubr.f32.mxu0 0.0
      %2918 = vmatmul.mubr.f32.gmra.mrb[0].mxu0 %v2417
      %v2919 = vpop.f32.mrb[0].mxu0
      %v2920 = vadd.f32 %v2616, %v2919
      %v2921 = vpop.f32.mrb[0].mxu0
      %2922 = vmatprep.mubr.f32.mxu0 0.0
      %2923 = vmatmul.mubr.f32.gmra.mrb[0].mxu0 %v2418
      %v2924 = vpop.f32.mrb[0].mxu0
      %v2925 = vadd.f32 %v2621, %v2924
      %v2926 = vpop.f32.mrb[0].mxu0
      %2927 = vmatprep.mubr.f32.mxu0 0.0
      %2928 = vmatmul.mubr.f32.gmra.mrb[0].mxu0 %v2419
      %v2929 = vpop.f32.mrb[0].mxu0
      %v2930 = vadd.f32 %v2626, %v2929
      %v2931 = vpop.f32.mrb[0].mxu0
      %2932 = vmatprep.mubr.f32.mxu0 0.0
      %2933 = vmatmul.mubr.f32.gmra.mrb[0].mxu0 %v2420
      %v2934 = vpop.f32.mrb[0].mxu0
      %v2935 = vadd.f32 %v2631, %v2934
      %v2936 = vpop.f32.mrb[0].mxu0
      %2937 = vmatprep.mubr.f32.mxu0 0.0
      %2938 = vmatmul.mubr.f32.gmra.mrb[0].mxu0 %v2421
      %v2939 = vpop.f32.mrb[0].mxu0
      %v2940 = vadd.f32 %v2636, %v2939
      %v2941 = vpop.f32.mrb[0].mxu0
      %2942 = vmatprep.mubr.f32.mxu0 0.0
      %2943 = vmatmul.mubr.f32.gmra.mrb[0].mxu0 %v2422
      %v2944 = vpop.f32.mrb[0].mxu0
      %v2945 = vadd.f32 %v2641, %v2944
      %v2946 = vpop.f32.mrb[0].mxu0
      %2947 = vmatprep.mubr.f32.mxu0 0.0
      %2948 = vmatmul.mubr.f32.gmra.mrb[0].mxu0 %v2423
      %v2949 = vpop.f32.mrb[0].mxu0
      %v2950 = vadd.f32 %v2646, %v2949
      %v2951 = vpop.f32.mrb[0].mxu0
      %2952 = vmatprep.mubr.f32.mxu0 0.0
      %2953 = vmatmul.mubr.f32.gmra.mrb[0].mxu0 %v2424
      %v2954 = vpop.f32.mrb[0].mxu0
      %v2955 = vadd.f32 %v2651, %v2954
      %v2956 = vpop.f32.mrb[0].mxu0
      %2957 = vmatprep.mubr.f32.mxu0 0.0
      %2958 = vmatmul.mubr.f32.gmra.mrb[0].mxu0 %v2425
      %v2959 = vpop.f32.mrb[0].mxu0
      %v2960 = vadd.f32 %v2656, %v2959
      %v2961 = vpop.f32.mrb[0].mxu0
      %2962 = vmatprep.mubr.f32.mxu0 0.0
      %2963 = vmatmul.mubr.f32.gmra.mrb[0].mxu0 %v2426
      %v2964 = vpop.f32.mrb[0].mxu0
      %v2965 = vadd.f32 %v2661, %v2964
      %v2966 = vpop.f32.mrb[0].mxu0
      %2967 = vmatprep.mubr.f32.mxu0 0.0
      %2968 = vmatmul.mubr.f32.gmra.mrb[0].mxu0 %v2427
      %v2969 = vpop.f32.mrb[0].mxu0
      %v2970 = vadd.f32 %v2666, %v2969
      %v2971 = vpop.f32.mrb[0].mxu0
      %2972 = vmatprep.mubr.f32.mxu0 0.0
      %2973 = vmatmul.mubr.f32.gmra.mrb[0].mxu0 %v2428
      %v2974 = vpop.f32.mrb[0].mxu0
      %v2975 = vadd.f32 %v2671, %v2974
      %v2976 = vpop.f32.mrb[0].mxu0
      %2977 = vmatprep.mubr.f32.mxu0 0.0
      %2978 = vmatmul.mubr.f32.gmra.mrb[0].mxu0 %v2429
      %v2979 = vpop.f32.mrb[0].mxu0
      %v2980 = vadd.f32 %v2676, %v2979
      %v2981 = vpop.f32.mrb[0].mxu0
      %2982 = vmatprep.mubr.f32.mxu0 0.0
      %2983 = vmatmul.mubr.f32.gmra.mrb[0].mxu0 %v2430
      %v2984 = vpop.f32.mrb[0].mxu0
      %v2985 = vadd.f32 %v2681, %v2984
      %v2986 = vpop.f32.mrb[0].mxu0
      %2987 = vmatprep.mubr.f32.mxu0 0.0
      %2988 = vmatmul.mubr.f32.gmra.mrb[0].mxu0 %v2431
      %v2989 = vpop.f32.mrb[0].mxu0
      %v2990 = vadd.f32 %v2686, %v2989
      %v2991 = vpop.f32.mrb[0].mxu0
      %2992 = vmatprep.mubr.f32.mxu0 0.0
      %2993 = vmatmul.mubr.f32.gmra.mrb[0].mxu0 %v2432
      %v2994 = vpop.f32.mrb[0].mxu0
      %v2995 = vadd.f32 %v2691, %v2994
      %v2996 = vpop.f32.mrb[0].mxu0
      %2997 = vmatprep.mubr.f32.mxu0 0.0
      %2998 = vmatmul.mubr.f32.gmra.mrb[0].mxu0 %v2433
      %v2999 = vpop.f32.mrb[0].mxu0
      %v3000 = vadd.f32 %v2696, %v2999
      %v3001 = vpop.f32.mrb[0].mxu0
      %3002 = vmatprep.mubr.f32.mxu0 0.0
      %3003 = vmatmul.mubr.f32.gmra.mrb[0].mxu0 %v2434
      %v3004 = vpop.f32.mrb[0].mxu0
      %v3005 = vadd.f32 %v2701, %v3004
      %v3006 = vpop.f32.mrb[0].mxu0
      %3007 = vmatprep.mubr.f32.mxu0 0.0
      %3008 = vmatmul.mubr.f32.gmra.mrb[0].mxu0 %v2435
      %v3009 = vpop.f32.mrb[0].mxu0
      %v3010 = vadd.f32 %v2706, %v3009
      %v3011 = vpop.f32.mrb[0].mxu0
      %3012 = vmatprep.mubr.f32.mxu0 0.0
      %3013 = vmatmul.mubr.f32.gmra.mrb[0].mxu0 %v2436
      %v3014 = vpop.f32.mrb[0].mxu0
      %v3015 = vadd.f32 %v2711, %v3014
      %v3016 = vpop.f32.mrb[0].mxu0
      %3017 = vmatprep.mubr.f32.mxu0 0.0
      %3018 = vmatmul.mubr.f32.gmra.mrb[0].mxu0 %v2437
      %v3019 = vpop.f32.mrb[0].mxu0
      %v3020 = vadd.f32 %v2716, %v3019
      %v3021 = vpop.f32.mrb[0].mxu0
      %3022 = vmatprep.mubr.f32.mxu0 0.0
      %3023 = vmatmul.mubr.f32.gmra.mrb[0].mxu0 %v2438
      %v3024 = vpop.f32.mrb[0].mxu0
      %v3025 = vadd.f32 %v2721, %v3024
      %v3026 = vpop.f32.mrb[0].mxu0
      %3027 = vmatprep.mubr.f32.mxu0 0.0
      %3028 = vmatmul.mubr.f32.gmra.mrb[0].mxu0 %v2439
      %v3029 = vpop.f32.mrb[0].mxu0
      %v3030 = vadd.f32 %v2726, %v3029
      %v3031 = vpop.f32.mrb[0].mxu0
      %3032 = vdwg.mxu0
      %v3033 = vadd.f32 %v2875, %v476
      %v3034 = vadd.f32 %v2880, %v477
      %v3035 = vadd.f32 %v2885, %v478
      %v3036 = vadd.f32 %v2890, %v479
      %v3037 = vadd.f32 %v2895, %v480
      %v3038 = vadd.f32 %v2900, %v481
      %v3039 = vadd.f32 %v2905, %v482
      %v3040 = vadd.f32 %v2910, %v483
      %v3041 = vadd.f32 %v2915, %v484
      %v3042 = vadd.f32 %v2920, %v485
      %v3043 = vadd.f32 %v2925, %v486
      %v3044 = vadd.f32 %v2930, %v487
      %v3045 = vadd.f32 %v2935, %v488
      %v3046 = vadd.f32 %v2940, %v489
      %v3047 = vadd.f32 %v2945, %v490
      %v3048 = vadd.f32 %v2950, %v491
      %v3050 = vsel %vm1631, %v2795, 0
      %v3053 = vsel %vm1631, %v2800, 0
      %v3056 = vsel %vm1631, %v2805, 0
      %v3059 = vsel %vm1631, %v2810, 0
      %v3062 = vsel %vm1631, %v2815, 0
      %v3065 = vsel %vm1631, %v2820, 0
      %v3068 = vsel %vm1631, %v2825, 0
      %v3071 = vsel %vm1631, %v2830, 0
      %v3074 = vsel %vm1631, %v2835, 0
      %v3077 = vsel %vm1631, %v2840, 0
      %v3080 = vsel %vm1631, %v2845, 0
      %v3083 = vsel %vm1631, %v2850, 0
      %v3086 = vsel %vm1631, %v2855, 0
      %v3089 = vsel %vm1631, %v2860, 0
      %v3092 = vsel %vm1631, %v2865, 0
      %v3095 = vsel %vm1631, %v2870, 0
      %v3098 = vsel %vm1631, %v3033, 0
      %v3101 = vsel %vm1631, %v3034, 0
      %v3104 = vsel %vm1631, %v3035, 0
      %v3107 = vsel %vm1631, %v3036, 0
      %v3110 = vsel %vm1631, %v3037, 0
      %v3113 = vsel %vm1631, %v3038, 0
      %v3116 = vsel %vm1631, %v3039, 0
      %v3119 = vsel %vm1631, %v3040, 0
      %v3122 = vsel %vm1631, %v3041, 0
      %v3125 = vsel %vm1631, %v3042, 0
      %v3128 = vsel %vm1631, %v3043, 0
      %v3131 = vsel %vm1631, %v3044, 0
      %v3134 = vsel %vm1631, %v3045, 0
      %v3137 = vsel %vm1631, %v3046, 0
      %v3140 = vsel %vm1631, %v3047, 0
      %v3143 = vsel %vm1631, %v3048, 0
      %3145 = vmatprep.subr.mxu0 0.0
      %3146 = vmatpush1.xpose.msra.mxu0 %v3098
      %3147 = vmatprep.subr.mxu0 0.0
      %3148 = vmatpush1.xpose.msra.mxu0 %v3101
      %3149 = vmatprep.subr.mxu0 0.0
      %3150 = vmatpush1.xpose.msra.mxu0 %v3104
      %3151 = vmatprep.subr.mxu0 0.0
      %3152 = vmatpush1.xpose.msra.mxu0 %v3107
      %3153 = vmatprep.subr.mxu0 0.0
      %3154 = vmatpush1.xpose.msra.mxu0 %v3110
      %3155 = vmatprep.subr.mxu0 0.0
      %3156 = vmatpush1.xpose.msra.mxu0 %v3113
      %3157 = vmatprep.subr.mxu0 0.0
      %3158 = vmatpush1.xpose.msra.mxu0 %v3116
      %3159 = vmatprep.subr.mxu0 0.0
      %3160 = vmatpush1.xpose.msra.mxu0 %v3119
      %3161 = vmatprep.subr.mxu0 0.0
      %3162 = vmatpush1.xpose.msra.mxu0 %v3122
      %3163 = vmatprep.subr.mxu0 0.0
      %3164 = vmatpush1.xpose.msra.mxu0 %v3125
      %3165 = vmatprep.subr.mxu0 0.0
      %3166 = vmatpush1.xpose.msra.mxu0 %v3128
      %3167 = vmatprep.subr.mxu0 0.0
      %3168 = vmatpush1.xpose.msra.mxu0 %v3131
      %3169 = vmatprep.subr.mxu0 0.0
      %3170 = vmatpush1.xpose.msra.mxu0 %v3134
      %3171 = vmatprep.subr.mxu0 0.0
      %3172 = vmatpush1.xpose.msra.mxu0 %v3137
      %3173 = vmatprep.subr.mxu0 0.0
      %3174 = vmatpush1.xpose.msra.mxu0 %v3140
      %3175 = vmatprep.subr.mxu0 0.0
      %3176 = vmatpush1.xpose.msra.mxu0 %v3143
      %3177 = vmatprep.subr.mxu0 0.0
      %3178 = vmatpush1.xpose.msra.mxu0 0.0
      %3179 = vmatprep.subr.mxu0 0.0
      %3180 = vmatpush1.xpose.msra.mxu0 0.0
      %3181 = vmatprep.subr.mxu0 0.0
      %3182 = vmatpush1.xpose.msra.mxu0 0.0
      %3183 = vmatprep.subr.mxu0 0.0
      %3184 = vmatpush1.xpose.msra.mxu0 0.0
      %3185 = vmatprep.subr.mxu0 0.0
      %3186 = vmatpush1.xpose.msra.mxu0 0.0
      %3187 = vmatprep.subr.mxu0 0.0
      %3188 = vmatpush1.xpose.msra.mxu0 0.0
      %3189 = vmatprep.subr.mxu0 0.0
      %3190 = vmatpush1.xpose.msra.mxu0 0.0
      %3191 = vmatprep.subr.mxu0 0.0
      %3192 = vmatpush1.xpose.msra.mxu0 0.0
      %3193 = vmatprep.subr.mxu0 0.0
      %3194 = vmatpush1.xpose.msra.mxu0 0.0
      %3195 = vmatprep.subr.mxu0 0.0
      %3196 = vmatpush1.xpose.msra.mxu0 0.0
      %3197 = vmatprep.subr.mxu0 0.0
      %3198 = vmatpush1.xpose.msra.mxu0 0.0
      %3199 = vmatprep.subr.mxu0 0.0
      %3200 = vmatpush1.xpose.msra.mxu0 0.0
      %3201 = vmatprep.subr.mxu0 0.0
      %3202 = vmatpush1.xpose.msra.mxu0 0.0
      %3203 = vmatprep.subr.mxu0 0.0
      %3204 = vmatpush1.xpose.msra.mxu0 0.0
      %3205 = vmatprep.subr.mxu0 0.0
      %3206 = vmatpush1.xpose.msra.mxu0 0.0
      %3207 = vmatprep.subr.mxu0 0.0
      %3208 = vmatpush1.xpose.msra.mxu0 0.0
      %3209 = vmatprep.mubr.f32.mxu0 0.0
      %3210 = vmatmul.mubr.f32.gmra.mrb[0].mxu0 %v3050
      %v3211 = vpop.f32.mrb[0].mxu0
      %v3212 = vadd.f32 0.0, %v3211
      %v3213 = vpop.f32.mrb[0].mxu0
      %3214 = vmatprep.mubr.f32.mxu0 0.0
      %3215 = vmatmul.mubr.f32.gmra.mrb[0].mxu0 %v3053
      %v3216 = vpop.f32.mrb[0].mxu0
      %v3217 = vadd.f32 0.0, %v3216
      %v3218 = vpop.f32.mrb[0].mxu0
      %3219 = vmatprep.mubr.f32.mxu0 0.0
      %3220 = vmatmul.mubr.f32.gmra.mrb[0].mxu0 %v3056
      %v3221 = vpop.f32.mrb[0].mxu0
      %v3222 = vadd.f32 0.0, %v3221
      %v3223 = vpop.f32.mrb[0].mxu0
      %3224 = vmatprep.mubr.f32.mxu0 0.0
      %3225 = vmatmul.mubr.f32.gmra.mrb[0].mxu0 %v3059
      %v3226 = vpop.f32.mrb[0].mxu0
      %v3227 = vadd.f32 0.0, %v3226
      %v3228 = vpop.f32.mrb[0].mxu0
      %3229 = vmatprep.mubr.f32.mxu0 0.0
      %3230 = vmatmul.mubr.f32.gmra.mrb[0].mxu0 %v3062
      %v3231 = vpop.f32.mrb[0].mxu0
      %v3232 = vadd.f32 0.0, %v3231
      %v3233 = vpop.f32.mrb[0].mxu0
      %3234 = vmatprep.mubr.f32.mxu0 0.0
      %3235 = vmatmul.mubr.f32.gmra.mrb[0].mxu0 %v3065
      %v3236 = vpop.f32.mrb[0].mxu0
      %v3237 = vadd.f32 0.0, %v3236
      %v3238 = vpop.f32.mrb[0].mxu0
      %3239 = vmatprep.mubr.f32.mxu0 0.0
      %3240 = vmatmul.mubr.f32.gmra.mrb[0].mxu0 %v3068
      %v3241 = vpop.f32.mrb[0].mxu0
      %v3242 = vadd.f32 0.0, %v3241
      %v3243 = vpop.f32.mrb[0].mxu0
      %3244 = vmatprep.mubr.f32.mxu0 0.0
      %3245 = vmatmul.mubr.f32.gmra.mrb[0].mxu0 %v3071
      %v3246 = vpop.f32.mrb[0].mxu0
      %v3247 = vadd.f32 0.0, %v3246
      %v3248 = vpop.f32.mrb[0].mxu0
      %3249 = vmatprep.mubr.f32.mxu0 0.0
      %3250 = vmatmul.mubr.f32.gmra.mrb[0].mxu0 %v3074
      %v3251 = vpop.f32.mrb[0].mxu0
      %v3252 = vadd.f32 0.0, %v3251
      %v3253 = vpop.f32.mrb[0].mxu0
      %3254 = vmatprep.mubr.f32.mxu0 0.0
      %3255 = vmatmul.mubr.f32.gmra.mrb[0].mxu0 %v3077
      %v3256 = vpop.f32.mrb[0].mxu0
      %v3257 = vadd.f32 0.0, %v3256
      %v3258 = vpop.f32.mrb[0].mxu0
      %3259 = vmatprep.mubr.f32.mxu0 0.0
      %3260 = vmatmul.mubr.f32.gmra.mrb[0].mxu0 %v3080
      %v3261 = vpop.f32.mrb[0].mxu0
      %v3262 = vadd.f32 0.0, %v3261
      %v3263 = vpop.f32.mrb[0].mxu0
      %3264 = vmatprep.mubr.f32.mxu0 0.0
      %3265 = vmatmul.mubr.f32.gmra.mrb[0].mxu0 %v3083
      %v3266 = vpop.f32.mrb[0].mxu0
      %v3267 = vadd.f32 0.0, %v3266
      %v3268 = vpop.f32.mrb[0].mxu0
      %3269 = vmatprep.mubr.f32.mxu0 0.0
      %3270 = vmatmul.mubr.f32.gmra.mrb[0].mxu0 %v3086
      %v3271 = vpop.f32.mrb[0].mxu0
      %v3272 = vadd.f32 0.0, %v3271
      %v3273 = vpop.f32.mrb[0].mxu0
      %3274 = vmatprep.mubr.f32.mxu0 0.0
      %3275 = vmatmul.mubr.f32.gmra.mrb[0].mxu0 %v3089
      %v3276 = vpop.f32.mrb[0].mxu0
      %v3277 = vadd.f32 0.0, %v3276
      %v3278 = vpop.f32.mrb[0].mxu0
      %3279 = vmatprep.mubr.f32.mxu0 0.0
      %3280 = vmatmul.mubr.f32.gmra.mrb[0].mxu0 %v3092
      %v3281 = vpop.f32.mrb[0].mxu0
      %v3282 = vadd.f32 0.0, %v3281
      %v3283 = vpop.f32.mrb[0].mxu0
      %3284 = vmatprep.mubr.f32.mxu0 0.0
      %3285 = vmatmul.mubr.f32.gmra.mrb[0].mxu0 %v3095
      %v3286 = vpop.f32.mrb[0].mxu0
      %v3287 = vadd.f32 0.0, %v3286
      %v3288 = vpop.f32.mrb[0].mxu0
      %3289 = vdwg.mxu0
      %v3290 = vmul.f32 %v3212, %v492
      %v3291 = vmul.f32 %v3217, %v493
      %v3292 = vmul.f32 %v3222, %v494
      %v3293 = vmul.f32 %v3227, %v495
      %v3294 = vmul.f32 %v3232, %v496
      %v3295 = vmul.f32 %v3237, %v497
      %v3296 = vmul.f32 %v3242, %v498
      %v3297 = vmul.f32 %v3247, %v499
      %v3298 = vmul.f32 %v3252, %v500
      %v3299 = vmul.f32 %v3257, %v501
      %v3300 = vmul.f32 %v3262, %v502
      %v3301 = vmul.f32 %v3267, %v503
      %v3302 = vmul.f32 %v3272, %v504
      %v3303 = vmul.f32 %v3277, %v505
      %v3304 = vmul.f32 %v3282, %v506
      %v3305 = vmul.f32 %v3287, %v507
      %3306 = vmatprep.subr.mxu0 0.0
      %3307 = vmatpush1.msra.mxu0 %v508
      %3308 = vmatprep.subr.mxu0 0.0
      %3309 = vmatpush1.msra.mxu0 %v509
      %3310 = vmatprep.subr.mxu0 0.0
      %3311 = vmatpush1.msra.mxu0 %v510
      %3312 = vmatprep.subr.mxu0 0.0
      %3313 = vmatpush1.msra.mxu0 %v511
      %3314 = vmatprep.subr.mxu0 0.0
      %3315 = vmatpush1.msra.mxu0 %v512
      %3316 = vmatprep.subr.mxu0 0.0
      %3317 = vmatpush1.msra.mxu0 %v513
      %3318 = vmatprep.subr.mxu0 0.0
      %3319 = vmatpush1.msra.mxu0 %v514
      %3320 = vmatprep.subr.mxu0 0.0
      %3321 = vmatpush1.msra.mxu0 %v515
      %3322 = vmatprep.subr.mxu0 0.0
      %3323 = vmatpush1.msra.mxu0 %v516
      %3324 = vmatprep.subr.mxu0 0.0
      %3325 = vmatpush1.msra.mxu0 %v517
      %3326 = vmatprep.subr.mxu0 0.0
      %3327 = vmatpush1.msra.mxu0 %v518
      %3328 = vmatprep.subr.mxu0 0.0
      %3329 = vmatpush1.msra.mxu0 %v519
      %3330 = vmatprep.subr.mxu0 0.0
      %3331 = vmatpush1.msra.mxu0 %v520
      %3332 = vmatprep.subr.mxu0 0.0
      %3333 = vmatpush1.msra.mxu0 %v521
      %3334 = vmatprep.subr.mxu0 0.0
      %3335 = vmatpush1.msra.mxu0 %v522
      %3336 = vmatprep.subr.mxu0 0.0
      %3337 = vmatpush1.msra.mxu0 %v523
      %3338 = vmatprep.subr.mxu0 0.0
      %3339 = vmatpush1.msra.mxu0 0.0
      %3340 = vmatprep.subr.mxu0 0.0
      %3341 = vmatpush1.msra.mxu0 0.0
      %3342 = vmatprep.subr.mxu0 0.0
      %3343 = vmatpush1.msra.mxu0 0.0
      %3344 = vmatprep.subr.mxu0 0.0
      %3345 = vmatpush1.msra.mxu0 0.0
      %3346 = vmatprep.subr.mxu0 0.0
      %3347 = vmatpush1.msra.mxu0 0.0
      %3348 = vmatprep.subr.mxu0 0.0
      %3349 = vmatpush1.msra.mxu0 0.0
      %3350 = vmatprep.subr.mxu0 0.0
      %3351 = vmatpush1.msra.mxu0 0.0
      %3352 = vmatprep.subr.mxu0 0.0
      %3353 = vmatpush1.msra.mxu0 0.0
      %3354 = vmatprep.subr.mxu0 0.0
      %3355 = vmatpush1.msra.mxu0 0.0
      %3356 = vmatprep.subr.mxu0 0.0
      %3357 = vmatpush1.msra.mxu0 0.0
      %3358 = vmatprep.subr.mxu0 0.0
      %3359 = vmatpush1.msra.mxu0 0.0
      %3360 = vmatprep.subr.mxu0 0.0
      %3361 = vmatpush1.msra.mxu0 0.0
      %3362 = vmatprep.subr.mxu0 0.0
      %3363 = vmatpush1.msra.mxu0 0.0
      %3364 = vmatprep.subr.mxu0 0.0
      %3365 = vmatpush1.msra.mxu0 0.0
      %3366 = vmatprep.subr.mxu0 0.0
      %3367 = vmatpush1.msra.mxu0 0.0
      %3368 = vmatprep.subr.mxu0 0.0
      %3369 = vmatpush1.msra.mxu0 0.0
      %3370 = vmatprep.mubr.f32.mxu0 0.0
      %3371 = vmatmul.mubr.f32.gmra.mrb[0].mxu0 %v3290
      %v3372 = vpop.f32.mrb[0].mxu0
      %v3373 = vadd.f32 0.0, %v3372
      %v3374 = vpop.f32.mrb[0].mxu0
      %3375 = vmatprep.mubr.f32.mxu0 0.0
      %3376 = vmatmul.mubr.f32.gmra.mrb[0].mxu0 %v3291
      %v3377 = vpop.f32.mrb[0].mxu0
      %v3378 = vadd.f32 0.0, %v3377
      %v3379 = vpop.f32.mrb[0].mxu0
      %3380 = vmatprep.mubr.f32.mxu0 0.0
      %3381 = vmatmul.mubr.f32.gmra.mrb[0].mxu0 %v3292
      %v3382 = vpop.f32.mrb[0].mxu0
      %v3383 = vadd.f32 0.0, %v3382
      %v3384 = vpop.f32.mrb[0].mxu0
      %3385 = vmatprep.mubr.f32.mxu0 0.0
      %3386 = vmatmul.mubr.f32.gmra.mrb[0].mxu0 %v3293
      %v3387 = vpop.f32.mrb[0].mxu0
      %v3388 = vadd.f32 0.0, %v3387
      %v3389 = vpop.f32.mrb[0].mxu0
      %3390 = vmatprep.mubr.f32.mxu0 0.0
      %3391 = vmatmul.mubr.f32.gmra.mrb[0].mxu0 %v3294
      %v3392 = vpop.f32.mrb[0].mxu0
      %v3393 = vadd.f32 0.0, %v3392
      %v3394 = vpop.f32.mrb[0].mxu0
      %3395 = vmatprep.mubr.f32.mxu0 0.0
      %3396 = vmatmul.mubr.f32.gmra.mrb[0].mxu0 %v3295
      %v3397 = vpop.f32.mrb[0].mxu0
      %v3398 = vadd.f32 0.0, %v3397
      %v3399 = vpop.f32.mrb[0].mxu0
      %3400 = vmatprep.mubr.f32.mxu0 0.0
      %3401 = vmatmul.mubr.f32.gmra.mrb[0].mxu0 %v3296
      %v3402 = vpop.f32.mrb[0].mxu0
      %v3403 = vadd.f32 0.0, %v3402
      %v3404 = vpop.f32.mrb[0].mxu0
      %3405 = vmatprep.mubr.f32.mxu0 0.0
      %3406 = vmatmul.mubr.f32.gmra.mrb[0].mxu0 %v3297
      %v3407 = vpop.f32.mrb[0].mxu0
      %v3408 = vadd.f32 0.0, %v3407
      %v3409 = vpop.f32.mrb[0].mxu0
      %3410 = vmatprep.mubr.f32.mxu0 0.0
      %3411 = vmatmul.mubr.f32.gmra.mrb[0].mxu0 %v3298
      %v3412 = vpop.f32.mrb[0].mxu0
      %v3413 = vadd.f32 0.0, %v3412
      %v3414 = vpop.f32.mrb[0].mxu0
      %3415 = vmatprep.mubr.f32.mxu0 0.0
      %3416 = vmatmul.mubr.f32.gmra.mrb[0].mxu0 %v3299
      %v3417 = vpop.f32.mrb[0].mxu0
      %v3418 = vadd.f32 0.0, %v3417
      %v3419 = vpop.f32.mrb[0].mxu0
      %3420 = vmatprep.mubr.f32.mxu0 0.0
      %3421 = vmatmul.mubr.f32.gmra.mrb[0].mxu0 %v3300
      %v3422 = vpop.f32.mrb[0].mxu0
      %v3423 = vadd.f32 0.0, %v3422
      %v3424 = vpop.f32.mrb[0].mxu0
      %3425 = vmatprep.mubr.f32.mxu0 0.0
      %3426 = vmatmul.mubr.f32.gmra.mrb[0].mxu0 %v3301
      %v3427 = vpop.f32.mrb[0].mxu0
      %v3428 = vadd.f32 0.0, %v3427
      %v3429 = vpop.f32.mrb[0].mxu0
      %3430 = vmatprep.mubr.f32.mxu0 0.0
      %3431 = vmatmul.mubr.f32.gmra.mrb[0].mxu0 %v3302
      %v3432 = vpop.f32.mrb[0].mxu0
      %v3433 = vadd.f32 0.0, %v3432
      %v3434 = vpop.f32.mrb[0].mxu0
      %3435 = vmatprep.mubr.f32.mxu0 0.0
      %3436 = vmatmul.mubr.f32.gmra.mrb[0].mxu0 %v3303
      %v3437 = vpop.f32.mrb[0].mxu0
      %v3438 = vadd.f32 0.0, %v3437
      %v3439 = vpop.f32.mrb[0].mxu0
      %3440 = vmatprep.mubr.f32.mxu0 0.0
      %3441 = vmatmul.mubr.f32.gmra.mrb[0].mxu0 %v3304
      %v3442 = vpop.f32.mrb[0].mxu0
      %v3443 = vadd.f32 0.0, %v3442
      %v3444 = vpop.f32.mrb[0].mxu0
      %3445 = vmatprep.mubr.f32.mxu0 0.0
      %3446 = vmatmul.mubr.f32.gmra.mrb[0].mxu0 %v3305
      %v3447 = vpop.f32.mrb[0].mxu0
      %v3448 = vadd.f32 0.0, %v3447
      %v3449 = vpop.f32.mrb[0].mxu0
      %3450 = vdwg.mxu0
      %v3451 = vsel %vm1631, %v3373, -inf
      %3452 = vmax.xlane.f32.xlu0 %v3451
      %v3453 = vpop.xlane.xlu0 %3452
      %v3454 = vsel %vm1631, %v3378, -inf
      %3455 = vmax.xlane.f32.xlu0 %v3454
      %v3456 = vpop.xlane.xlu0 %3455
      %v3457 = vsel %vm1631, %v3383, -inf
      %3458 = vmax.xlane.f32.xlu0 %v3457
      %v3459 = vpop.xlane.xlu0 %3458
      %v3460 = vsel %vm1631, %v3388, -inf
      %3461 = vmax.xlane.f32.xlu0 %v3460
      %v3462 = vpop.xlane.xlu0 %3461
      %v3463 = vsel %vm1631, %v3393, -inf
      %3464 = vmax.xlane.f32.xlu0 %v3463
      %v3465 = vpop.xlane.xlu0 %3464
      %v3466 = vsel %vm1631, %v3398, -inf
      %3467 = vmax.xlane.f32.xlu0 %v3466
      %v3468 = vpop.xlane.xlu0 %3467
      %v3469 = vsel %vm1631, %v3403, -inf
      %3470 = vmax.xlane.f32.xlu0 %v3469
      %v3471 = vpop.xlane.xlu0 %3470
      %v3472 = vsel %vm1631, %v3408, -inf
      %3473 = vmax.xlane.f32.xlu0 %v3472
      %v3474 = vpop.xlane.xlu0 %3473
      %v3475 = vsel %vm1631, %v3413, -inf
      %3476 = vmax.xlane.f32.xlu0 %v3475
      %v3477 = vpop.xlane.xlu0 %3476
      %v3478 = vsel %vm1631, %v3418, -inf
      %3479 = vmax.xlane.f32.xlu0 %v3478
      %v3480 = vpop.xlane.xlu0 %3479
      %v3481 = vsel %vm1631, %v3423, -inf
      %3482 = vmax.xlane.f32.xlu0 %v3481
      %v3483 = vpop.xlane.xlu0 %3482
      %v3484 = vsel %vm1631, %v3428, -inf
      %3485 = vmax.xlane.f32.xlu0 %v3484
      %v3486 = vpop.xlane.xlu0 %3485
      %v3487 = vsel %vm1631, %v3433, -inf
      %3488 = vmax.xlane.f32.xlu0 %v3487
      %v3489 = vpop.xlane.xlu0 %3488
      %v3490 = vsel %vm1631, %v3438, -inf
      %3491 = vmax.xlane.f32.xlu0 %v3490
      %v3492 = vpop.xlane.xlu0 %3491
      %v3493 = vsel %vm1631, %v3443, -inf
      %3494 = vmax.xlane.f32.xlu0 %v3493
      %v3495 = vpop.xlane.xlu0 %3494
      %v3496 = vsel %vm1631, %v3448, -inf
      %3497 = vmax.xlane.f32.xlu0 %v3496
      %v3498 = vpop.xlane.xlu0 %3497
      %v3499 = vmax.f32 %v3453, %v3465
      %v3500 = vmax.f32 %v3456, %v3468
      %v3501 = vmax.f32 %v3459, %v3471
      %v3502 = vmax.f32 %v3462, %v3474
      %v3503 = vmax.f32 %v3499, %v3477
      %v3504 = vmax.f32 %v3500, %v3480
      %v3505 = vmax.f32 %v3501, %v3483
      %v3506 = vmax.f32 %v3502, %v3486
      %v3507 = vmax.f32 %v3503, %v3489
      %v3508 = vmax.f32 %v3504, %v3492
      %v3509 = vmax.f32 %v3505, %v3495
      %v3510 = vmax.f32 %v3506, %v3498
      %v3511 = vmax.f32 %v3507, %v3508
      %v3512 = vmax.f32 %v3509, %v3510
      %v3513 = vmax.f32 %v3511, %v3512
      %v3514 = vrot.slane %v3513, 4
      %v3515 = vmax.f32 %v3513, %v3514
      %v3516 = vrot.slane %v3515, 2
      %v3517 = vmax.f32 %v3515, %v3516
      %v3518 = vrot.slane %v3517, 1
      %v3519 = vmax.f32 %v3517, %v3518
      %v3520 = vsub.f32 %v3373, %v3519
      %v3521 = vsub.f32 %v3378, %v3519
      %v3522 = vsub.f32 %v3383, %v3519
      %v3523 = vsub.f32 %v3388, %v3519
      %v3524 = vsub.f32 %v3393, %v3519
      %v3525 = vsub.f32 %v3398, %v3519
      %v3526 = vsub.f32 %v3403, %v3519
      %v3527 = vsub.f32 %v3408, %v3519
      %v3528 = vsub.f32 %v3413, %v3519
      %v3529 = vsub.f32 %v3418, %v3519
      %v3530 = vsub.f32 %v3423, %v3519
      %v3531 = vsub.f32 %v3428, %v3519
      %v3532 = vsub.f32 %v3433, %v3519
      %v3533 = vsub.f32 %v3438, %v3519
      %v3534 = vsub.f32 %v3443, %v3519
      %v3535 = vsub.f32 %v3448, %v3519
      %v3536 = vmul.f32 %v3520, 1.442695
      %v3537 = vpow.pop %v3536
      %v3538 = vmul.f32 %v3521, 1.442695
      %v3539 = vpow.pop %v3538
      %v3540 = vmul.f32 %v3522, 1.442695
      %v3541 = vpow.pop %v3540
      %v3542 = vmul.f32 %v3523, 1.442695
      %v3543 = vpow.pop %v3542
      %v3544 = vmul.f32 %v3524, 1.442695
      %v3545 = vpow.pop %v3544
      %v3546 = vmul.f32 %v3525, 1.442695
      %v3547 = vpow.pop %v3546
      %v3548 = vmul.f32 %v3526, 1.442695
      %v3549 = vpow.pop %v3548
      %v3550 = vmul.f32 %v3527, 1.442695
      %v3551 = vpow.pop %v3550
      %v3552 = vmul.f32 %v3528, 1.442695
      %v3553 = vpow.pop %v3552
      %v3554 = vmul.f32 %v3529, 1.442695
      %v3555 = vpow.pop %v3554
      %v3556 = vmul.f32 %v3530, 1.442695
      %v3557 = vpow.pop %v3556
      %v3558 = vmul.f32 %v3531, 1.442695
      %v3559 = vpow.pop %v3558
      %v3560 = vmul.f32 %v3532, 1.442695
      %v3561 = vpow.pop %v3560
      %v3562 = vmul.f32 %v3533, 1.442695
      %v3563 = vpow.pop %v3562
      %v3564 = vmul.f32 %v3534, 1.442695
      %v3565 = vpow.pop %v3564
      %v3566 = vmul.f32 %v3535, 1.442695
      %v3567 = vpow.pop %v3566
      %3568 = vmatprep.subr.mxu0 0.0
      %3569 = vmatpush1.msra.mxu0 %v3537
      %3570 = vmatprep.subr.mxu0 0.0
      %3571 = vmatpush1.msra.mxu0 %v3539
      %3572 = vmatprep.subr.mxu0 0.0
      %3573 = vmatpush1.msra.mxu0 %v3541
      %3574 = vmatprep.subr.mxu0 0.0
      %3575 = vmatpush1.msra.mxu0 %v3543
      %3576 = vmatprep.subr.mxu0 0.0
      %3577 = vmatpush1.msra.mxu0 %v3545
      %3578 = vmatprep.subr.mxu0 0.0
      %3579 = vmatpush1.msra.mxu0 %v3547
      %3580 = vmatprep.subr.mxu0 0.0
      %3581 = vmatpush1.msra.mxu0 %v3549
      %3582 = vmatprep.subr.mxu0 0.0
      %3583 = vmatpush1.msra.mxu0 %v3551
      %3584 = vmatprep.subr.mxu0 0.0
      %3585 = vmatpush1.msra.mxu0 %v3553
      %3586 = vmatprep.subr.mxu0 0.0
      %3587 = vmatpush1.msra.mxu0 %v3555
      %3588 = vmatprep.subr.mxu0 0.0
      %3589 = vmatpush1.msra.mxu0 %v3557
      %3590 = vmatprep.subr.mxu0 0.0
      %3591 = vmatpush1.msra.mxu0 %v3559
      %3592 = vmatprep.subr.mxu0 0.0
      %3593 = vmatpush1.msra.mxu0 %v3561
      %3594 = vmatprep.subr.mxu0 0.0
      %3595 = vmatpush1.msra.mxu0 %v3563
      %3596 = vmatprep.subr.mxu0 0.0
      %3597 = vmatpush1.msra.mxu0 %v3565
      %3598 = vmatprep.subr.mxu0 0.0
      %3599 = vmatpush1.msra.mxu0 %v3567
      %3600 = vmatprep.subr.mxu0 0.0
      %3601 = vmatpush1.msra.mxu0 0.0
      %3602 = vmatprep.subr.mxu0 0.0
      %3603 = vmatpush1.msra.mxu0 0.0
      %3604 = vmatprep.subr.mxu0 0.0
      %3605 = vmatpush1.msra.mxu0 0.0
      %3606 = vmatprep.subr.mxu0 0.0
      %3607 = vmatpush1.msra.mxu0 0.0
      %3608 = vmatprep.subr.mxu0 0.0
      %3609 = vmatpush1.msra.mxu0 0.0
      %3610 = vmatprep.subr.mxu0 0.0
      %3611 = vmatpush1.msra.mxu0 0.0
      %3612 = vmatprep.subr.mxu0 0.0
      %3613 = vmatpush1.msra.mxu0 0.0
      %3614 = vmatprep.subr.mxu0 0.0
      %3615 = vmatpush1.msra.mxu0 0.0
      %3616 = vmatprep.subr.mxu0 0.0
      %3617 = vmatpush1.msra.mxu0 0.0
      %3618 = vmatprep.subr.mxu0 0.0
      %3619 = vmatpush1.msra.mxu0 0.0
      %3620 = vmatprep.subr.mxu0 0.0
      %3621 = vmatpush1.msra.mxu0 0.0
      %3622 = vmatprep.subr.mxu0 0.0
      %3623 = vmatpush1.msra.mxu0 0.0
      %3624 = vmatprep.subr.mxu0 0.0
      %3625 = vmatpush1.msra.mxu0 0.0
      %3626 = vmatprep.subr.mxu0 0.0
      %3627 = vmatpush1.msra.mxu0 0.0
      %3628 = vmatprep.subr.mxu0 0.0
      %3629 = vmatpush1.msra.mxu0 0.0
      %3630 = vmatprep.subr.mxu0 0.0
      %3631 = vmatpush1.msra.mxu0 0.0
      %3632 = vmatprep.mubr.f32.mxu0 0.0
      %3633 = vmatmul.mubr.f32.gmra.mrb[0].mxu0 %v492
      %v3634 = vpop.f32.mrb[0].mxu0
      %v3635 = vadd.f32 0.0, %v3634
      %v3636 = vpop.f32.mrb[0].mxu0
      %3637 = vmatprep.mubr.f32.mxu0 0.0
      %3638 = vmatmul.mubr.f32.gmra.mrb[0].mxu0 %v493
      %v3639 = vpop.f32.mrb[0].mxu0
      %v3640 = vadd.f32 0.0, %v3639
      %v3641 = vpop.f32.mrb[0].mxu0
      %3642 = vmatprep.mubr.f32.mxu0 0.0
      %3643 = vmatmul.mubr.f32.gmra.mrb[0].mxu0 %v494
      %v3644 = vpop.f32.mrb[0].mxu0
      %v3645 = vadd.f32 0.0, %v3644
      %v3646 = vpop.f32.mrb[0].mxu0
      %3647 = vmatprep.mubr.f32.mxu0 0.0
      %3648 = vmatmul.mubr.f32.gmra.mrb[0].mxu0 %v495
      %v3649 = vpop.f32.mrb[0].mxu0
      %v3650 = vadd.f32 0.0, %v3649
      %v3651 = vpop.f32.mrb[0].mxu0
      %3652 = vmatprep.mubr.f32.mxu0 0.0
      %3653 = vmatmul.mubr.f32.gmra.mrb[0].mxu0 %v496
      %v3654 = vpop.f32.mrb[0].mxu0
      %v3655 = vadd.f32 0.0, %v3654
      %v3656 = vpop.f32.mrb[0].mxu0
      %3657 = vmatprep.mubr.f32.mxu0 0.0
      %3658 = vmatmul.mubr.f32.gmra.mrb[0].mxu0 %v497
      %v3659 = vpop.f32.mrb[0].mxu0
      %v3660 = vadd.f32 0.0, %v3659
      %v3661 = vpop.f32.mrb[0].mxu0
      %3662 = vmatprep.mubr.f32.mxu0 0.0
      %3663 = vmatmul.mubr.f32.gmra.mrb[0].mxu0 %v498
      %v3664 = vpop.f32.mrb[0].mxu0
      %v3665 = vadd.f32 0.0, %v3664
      %v3666 = vpop.f32.mrb[0].mxu0
      %3667 = vmatprep.mubr.f32.mxu0 0.0
      %3668 = vmatmul.mubr.f32.gmra.mrb[0].mxu0 %v499
      %v3669 = vpop.f32.mrb[0].mxu0
      %v3670 = vadd.f32 0.0, %v3669
      %v3671 = vpop.f32.mrb[0].mxu0
      %3672 = vmatprep.mubr.f32.mxu0 0.0
      %3673 = vmatmul.mubr.f32.gmra.mrb[0].mxu0 %v500
      %v3674 = vpop.f32.mrb[0].mxu0
      %v3675 = vadd.f32 0.0, %v3674
      %v3676 = vpop.f32.mrb[0].mxu0
      %3677 = vmatprep.mubr.f32.mxu0 0.0
      %3678 = vmatmul.mubr.f32.gmra.mrb[0].mxu0 %v501
      %v3679 = vpop.f32.mrb[0].mxu0
      %v3680 = vadd.f32 0.0, %v3679
      %v3681 = vpop.f32.mrb[0].mxu0
      %3682 = vmatprep.mubr.f32.mxu0 0.0
      %3683 = vmatmul.mubr.f32.gmra.mrb[0].mxu0 %v502
      %v3684 = vpop.f32.mrb[0].mxu0
      %v3685 = vadd.f32 0.0, %v3684
      %v3686 = vpop.f32.mrb[0].mxu0
      %3687 = vmatprep.mubr.f32.mxu0 0.0
      %3688 = vmatmul.mubr.f32.gmra.mrb[0].mxu0 %v503
      %v3689 = vpop.f32.mrb[0].mxu0
      %v3690 = vadd.f32 0.0, %v3689
      %v3691 = vpop.f32.mrb[0].mxu0
      %3692 = vmatprep.mubr.f32.mxu0 0.0
      %3693 = vmatmul.mubr.f32.gmra.mrb[0].mxu0 %v504
      %v3694 = vpop.f32.mrb[0].mxu0
      %v3695 = vadd.f32 0.0, %v3694
      %v3696 = vpop.f32.mrb[0].mxu0
      %3697 = vmatprep.mubr.f32.mxu0 0.0
      %3698 = vmatmul.mubr.f32.gmra.mrb[0].mxu0 %v505
      %v3699 = vpop.f32.mrb[0].mxu0
      %v3700 = vadd.f32 0.0, %v3699
      %v3701 = vpop.f32.mrb[0].mxu0
      %3702 = vmatprep.mubr.f32.mxu0 0.0
      %3703 = vmatmul.mubr.f32.gmra.mrb[0].mxu0 %v506
      %v3704 = vpop.f32.mrb[0].mxu0
      %v3705 = vadd.f32 0.0, %v3704
      %v3706 = vpop.f32.mrb[0].mxu0
      %3707 = vmatprep.mubr.f32.mxu0 0.0
      %3708 = vmatmul.mubr.f32.gmra.mrb[0].mxu0 %v507
      %v3709 = vpop.f32.mrb[0].mxu0
      %v3710 = vadd.f32 0.0, %v3709
      %v3711 = vpop.f32.mrb[0].mxu0
      %3712 = vdwg.mxu0
      %v3713 = vsel %vm1631, %v3635, 0.0
      %3714 = vadd.xlane.f32.xlu0 %v3713
      %v3715 = vpop.xlane.xlu0 %3714
      %v3716 = vsel %vm1631, %v3640, 0.0
      %3717 = vadd.xlane.f32.xlu0 %v3716
      %v3718 = vpop.xlane.xlu0 %3717
      %v3719 = vsel %vm1631, %v3645, 0.0
      %3720 = vadd.xlane.f32.xlu0 %v3719
      %v3721 = vpop.xlane.xlu0 %3720
      %v3722 = vsel %vm1631, %v3650, 0.0
      %3723 = vadd.xlane.f32.xlu0 %v3722
      %v3724 = vpop.xlane.xlu0 %3723
      %v3725 = vsel %vm1631, %v3655, 0.0
      %3726 = vadd.xlane.f32.xlu0 %v3725
      %v3727 = vpop.xlane.xlu0 %3726
      %v3728 = vsel %vm1631, %v3660, 0.0
      %3729 = vadd.xlane.f32.xlu0 %v3728
      %v3730 = vpop.xlane.xlu0 %3729
      %v3731 = vsel %vm1631, %v3665, 0.0
      %3732 = vadd.xlane.f32.xlu0 %v3731
      %v3733 = vpop.xlane.xlu0 %3732
      %v3734 = vsel %vm1631, %v3670, 0.0
      %3735 = vadd.xlane.f32.xlu0 %v3734
      %v3736 = vpop.xlane.xlu0 %3735
      %v3737 = vsel %vm1631, %v3675, 0.0
      %3738 = vadd.xlane.f32.xlu0 %v3737
      %v3739 = vpop.xlane.xlu0 %3738
      %v3740 = vsel %vm1631, %v3680, 0.0
      %3741 = vadd.xlane.f32.xlu0 %v3740
      %v3742 = vpop.xlane.xlu0 %3741
      %v3743 = vsel %vm1631, %v3685, 0.0
      %3744 = vadd.xlane.f32.xlu0 %v3743
      %v3745 = vpop.xlane.xlu0 %3744
      %v3746 = vsel %vm1631, %v3690, 0.0
      %3747 = vadd.xlane.f32.xlu0 %v3746
      %v3748 = vpop.xlane.xlu0 %3747
      %v3749 = vsel %vm1631, %v3695, 0.0
      %3750 = vadd.xlane.f32.xlu0 %v3749
      %v3751 = vpop.xlane.xlu0 %3750
      %v3752 = vsel %vm1631, %v3700, 0.0
      %3753 = vadd.xlane.f32.xlu0 %v3752
      %v3754 = vpop.xlane.xlu0 %3753
      %v3755 = vsel %vm1631, %v3705, 0.0
      %3756 = vadd.xlane.f32.xlu0 %v3755
      %v3757 = vpop.xlane.xlu0 %3756
      %v3758 = vsel %vm1631, %v3710, 0.0
      %3759 = vadd.xlane.f32.xlu0 %v3758
      %v3760 = vpop.xlane.xlu0 %3759
      %v3761 = vrcp.pop %v3715
      %v3762 = vrcp.pop %v3718
      %v3763 = vrcp.pop %v3721
      %v3764 = vrcp.pop %v3724
      %v3765 = vrcp.pop %v3727
      %v3766 = vrcp.pop %v3730
      %v3767 = vrcp.pop %v3733
      %v3768 = vrcp.pop %v3736
      %v3769 = vrcp.pop %v3739
      %v3770 = vrcp.pop %v3742
      %v3771 = vrcp.pop %v3745
      %v3772 = vrcp.pop %v3748
      %v3773 = vrcp.pop %v3751
      %v3774 = vrcp.pop %v3754
      %v3775 = vrcp.pop %v3757
      %v3776 = vrcp.pop %v3760
      %v3777 = vmul.f32 %v3537, %v3761
      %v3778 = vmul.f32 %v3539, %v3762
      %v3779 = vmul.f32 %v3541, %v3763
      %v3780 = vmul.f32 %v3543, %v3764
      %v3781 = vmul.f32 %v3545, %v3765
      %v3782 = vmul.f32 %v3547, %v3766
      %v3783 = vmul.f32 %v3549, %v3767
      %v3784 = vmul.f32 %v3551, %v3768
      %v3785 = vmul.f32 %v3553, %v3769
      %v3786 = vmul.f32 %v3555, %v3770
      %v3787 = vmul.f32 %v3557, %v3771
      %v3788 = vmul.f32 %v3559, %v3772
      %v3789 = vmul.f32 %v3561, %v3773
      %v3790 = vmul.f32 %v3563, %v3774
      %v3791 = vmul.f32 %v3565, %v3775
      %v3792 = vmul.f32 %v3567, %v3776
      %v3793 = vmul.f32 %v3777, %v2955
      %v3794 = vmul.f32 %v3778, %v2960
      %v3795 = vmul.f32 %v3779, %v2965
      %v3796 = vmul.f32 %v3780, %v2970
      %v3797 = vmul.f32 %v3781, %v2975
      %v3798 = vmul.f32 %v3782, %v2980
      %v3799 = vmul.f32 %v3783, %v2985
      %v3800 = vmul.f32 %v3784, %v2990
      %v3801 = vmul.f32 %v3785, %v2995
      %v3802 = vmul.f32 %v3786, %v3000
      %v3803 = vmul.f32 %v3787, %v3005
      %v3804 = vmul.f32 %v3788, %v3010
      %v3805 = vmul.f32 %v3789, %v3015
      %v3806 = vmul.f32 %v3790, %v3020
      %v3807 = vmul.f32 %v3791, %v3025
      %v3808 = vmul.f32 %v3792, %v3030
      %v3809 = vadd.f32 %v3793, %v752
      %v3810 = vadd.f32 %v3794, %v757
      %v3811 = vadd.f32 %v3795, %v762
      %v3812 = vadd.f32 %v3796, %v767
      %v3813 = vadd.f32 %v3797, %v772
      %v3814 = vadd.f32 %v3798, %v777
      %v3815 = vadd.f32 %v3799, %v782
      %v3816 = vadd.f32 %v3800, %v787
      %v3817 = vadd.f32 %v3801, %v792
      %v3818 = vadd.f32 %v3802, %v797
      %v3819 = vadd.f32 %v3803, %v802
      %v3820 = vadd.f32 %v3804, %v807
      %v3821 = vadd.f32 %v3805, %v812
      %v3822 = vadd.f32 %v3806, %v817
      %v3823 = vadd.f32 %v3807, %v822
      %v3824 = vadd.f32 %v3808, %v827
      %v3825 = vld [vmem:[%s4] sm:$0xff]
      %v3826 = vld [vmem:[%s4 + $0x8] sm:$0xff]
      %v3828 = vsel %vm1631, %v3809, 0
      %v3831 = vsel %vm1631, %v3810, 0
      %v3834 = vsel %vm1631, %v3811, 0
      %v3837 = vsel %vm1631, %v3812, 0
      %v3840 = vsel %vm1631, %v3813, 0
      %v3843 = vsel %vm1631, %v3814, 0
      %v3846 = vsel %vm1631, %v3815, 0
      %v3849 = vsel %vm1631, %v3816, 0
      %v3852 = vsel %vm1631, %v3817, 0
      %v3855 = vsel %vm1631, %v3818, 0
      %v3858 = vsel %vm1631, %v3819, 0
      %v3861 = vsel %vm1631, %v3820, 0
      %v3864 = vsel %vm1631, %v3821, 0
      %v3867 = vsel %vm1631, %v3822, 0
      %v3870 = vsel %vm1631, %v3823, 0
      %v3873 = vsel %vm1631, %v3824, 0
      %3875 = vmatprep.subr.mxu0 0.0
      %3876 = vmatpush1.msra.mxu0 %v3825
      %3877 = vmatprep.subr.mxu0 0.0
      %3878 = vmatpush1.msra.mxu0 %v3826
      %3879 = vmatprep.subr.mxu0 0.0
      %3880 = vmatpush1.msra.mxu0 0.0
      %3881 = vmatprep.subr.mxu0 0.0
      %3882 = vmatpush1.msra.mxu0 0.0
      %3883 = vmatprep.subr.mxu0 0.0
      %3884 = vmatpush1.msra.mxu0 0.0
      %3885 = vmatprep.subr.mxu0 0.0
      %3886 = vmatpush1.msra.mxu0 0.0
      %3887 = vmatprep.subr.mxu0 0.0
      %3888 = vmatpush1.msra.mxu0 0.0
      %3889 = vmatprep.subr.mxu0 0.0
      %3890 = vmatpush1.msra.mxu0 0.0
      %3891 = vmatprep.subr.mxu0 0.0
      %3892 = vmatpush1.msra.mxu0 0.0
      %3893 = vmatprep.subr.mxu0 0.0
      %3894 = vmatpush1.msra.mxu0 0.0
      %3895 = vmatprep.subr.mxu0 0.0
      %3896 = vmatpush1.msra.mxu0 0.0
      %3897 = vmatprep.subr.mxu0 0.0
      %3898 = vmatpush1.msra.mxu0 0.0
      %3899 = vmatprep.subr.mxu0 0.0
      %3900 = vmatpush1.msra.mxu0 0.0
      %3901 = vmatprep.subr.mxu0 0.0
      %3902 = vmatpush1.msra.mxu0 0.0
      %3903 = vmatprep.subr.mxu0 0.0
      %3904 = vmatpush1.msra.mxu0 0.0
      %3905 = vmatprep.subr.mxu0 0.0
      %3906 = vmatpush1.msra.mxu0 0.0
      %3907 = vmatprep.subr.mxu0 0.0
      %3908 = vmatpush1.msra.mxu0 0.0
      %3909 = vmatprep.subr.mxu0 0.0
      %3910 = vmatpush1.msra.mxu0 0.0
      %3911 = vmatprep.subr.mxu0 0.0
      %3912 = vmatpush1.msra.mxu0 0.0
      %3913 = vmatprep.subr.mxu0 0.0
      %3914 = vmatpush1.msra.mxu0 0.0
      %3915 = vmatprep.subr.mxu0 0.0
      %3916 = vmatpush1.msra.mxu0 0.0
      %3917 = vmatprep.subr.mxu0 0.0
      %3918 = vmatpush1.msra.mxu0 0.0
      %3919 = vmatprep.subr.mxu0 0.0
      %3920 = vmatpush1.msra.mxu0 0.0
      %3921 = vmatprep.subr.mxu0 0.0
      %3922 = vmatpush1.msra.mxu0 0.0
      %3923 = vmatprep.subr.mxu0 0.0
      %3924 = vmatpush1.msra.mxu0 0.0
      %3925 = vmatprep.subr.mxu0 0.0
      %3926 = vmatpush1.msra.mxu0 0.0
      %3927 = vmatprep.subr.mxu0 0.0
      %3928 = vmatpush1.msra.mxu0 0.0
      %3929 = vmatprep.subr.mxu0 0.0
      %3930 = vmatpush1.msra.mxu0 0.0
      %3931 = vmatprep.subr.mxu0 0.0
      %3932 = vmatpush1.msra.mxu0 0.0
      %3933 = vmatprep.subr.mxu0 0.0
      %3934 = vmatpush1.msra.mxu0 0.0
      %3935 = vmatprep.subr.mxu0 0.0
      %3936 = vmatpush1.msra.mxu0 0.0
      %3937 = vmatprep.subr.mxu0 0.0
      %3938 = vmatpush1.msra.mxu0 0.0
      %3939 = vmatprep.mubr.f32.mxu0 0.0
      %3940 = vmatmul.mubr.f32.gmra.mrb[0].mxu0 %v3828
      %v3941 = vpop.f32.mrb[0].mxu0
      %v3942 = vadd.f32 0.0, %v3941
      %v3943 = vpop.f32.mrb[0].mxu0
      %3944 = vmatprep.mubr.f32.mxu0 0.0
      %3945 = vmatmul.mubr.f32.gmra.mrb[0].mxu0 %v3831
      %v3946 = vpop.f32.mrb[0].mxu0
      %v3947 = vadd.f32 0.0, %v3946
      %v3948 = vpop.f32.mrb[0].mxu0
      %3949 = vmatprep.mubr.f32.mxu0 0.0
      %3950 = vmatmul.mubr.f32.gmra.mrb[0].mxu0 %v3834
      %v3951 = vpop.f32.mrb[0].mxu0
      %v3952 = vadd.f32 0.0, %v3951
      %v3953 = vpop.f32.mrb[0].mxu0
      %3954 = vmatprep.mubr.f32.mxu0 0.0
      %3955 = vmatmul.mubr.f32.gmra.mrb[0].mxu0 %v3837
      %v3956 = vpop.f32.mrb[0].mxu0
      %v3957 = vadd.f32 0.0, %v3956
      %v3958 = vpop.f32.mrb[0].mxu0
      %3959 = vmatprep.mubr.f32.mxu0 0.0
      %3960 = vmatmul.mubr.f32.gmra.mrb[0].mxu0 %v3840
      %v3961 = vpop.f32.mrb[0].mxu0
      %v3962 = vadd.f32 0.0, %v3961
      %v3963 = vpop.f32.mrb[0].mxu0
      %3964 = vmatprep.mubr.f32.mxu0 0.0
      %3965 = vmatmul.mubr.f32.gmra.mrb[0].mxu0 %v3843
      %v3966 = vpop.f32.mrb[0].mxu0
      %v3967 = vadd.f32 0.0, %v3966
      %v3968 = vpop.f32.mrb[0].mxu0
      %3969 = vmatprep.mubr.f32.mxu0 0.0
      %3970 = vmatmul.mubr.f32.gmra.mrb[0].mxu0 %v3846
      %v3971 = vpop.f32.mrb[0].mxu0
      %v3972 = vadd.f32 0.0, %v3971
      %v3973 = vpop.f32.mrb[0].mxu0
      %3974 = vmatprep.mubr.f32.mxu0 0.0
      %3975 = vmatmul.mubr.f32.gmra.mrb[0].mxu0 %v3849
      %v3976 = vpop.f32.mrb[0].mxu0
      %v3977 = vadd.f32 0.0, %v3976
      %v3978 = vpop.f32.mrb[0].mxu0
      %3979 = vmatprep.mubr.f32.mxu0 0.0
      %3980 = vmatmul.mubr.f32.gmra.mrb[0].mxu0 %v3852
      %v3981 = vpop.f32.mrb[0].mxu0
      %v3982 = vadd.f32 0.0, %v3981
      %v3983 = vpop.f32.mrb[0].mxu0
      %3984 = vmatprep.mubr.f32.mxu0 0.0
      %3985 = vmatmul.mubr.f32.gmra.mrb[0].mxu0 %v3855
      %v3986 = vpop.f32.mrb[0].mxu0
      %v3987 = vadd.f32 0.0, %v3986
      %v3988 = vpop.f32.mrb[0].mxu0
      %3989 = vmatprep.mubr.f32.mxu0 0.0
      %3990 = vmatmul.mubr.f32.gmra.mrb[0].mxu0 %v3858
      %v3991 = vpop.f32.mrb[0].mxu0
      %v3992 = vadd.f32 0.0, %v3991
      %v3993 = vpop.f32.mrb[0].mxu0
      %3994 = vmatprep.mubr.f32.mxu0 0.0
      %3995 = vmatmul.mubr.f32.gmra.mrb[0].mxu0 %v3861
      %v3996 = vpop.f32.mrb[0].mxu0
      %v3997 = vadd.f32 0.0, %v3996
      %v3998 = vpop.f32.mrb[0].mxu0
      %3999 = vmatprep.mubr.f32.mxu0 0.0
      %4000 = vmatmul.mubr.f32.gmra.mrb[0].mxu0 %v3864
      %v4001 = vpop.f32.mrb[0].mxu0
      %v4002 = vadd.f32 0.0, %v4001
      %v4003 = vpop.f32.mrb[0].mxu0
      %4004 = vmatprep.mubr.f32.mxu0 0.0
      %4005 = vmatmul.mubr.f32.gmra.mrb[0].mxu0 %v3867
      %v4006 = vpop.f32.mrb[0].mxu0
      %v4007 = vadd.f32 0.0, %v4006
      %v4008 = vpop.f32.mrb[0].mxu0
      %4009 = vmatprep.mubr.f32.mxu0 0.0
      %4010 = vmatmul.mubr.f32.gmra.mrb[0].mxu0 %v3870
      %v4011 = vpop.f32.mrb[0].mxu0
      %v4012 = vadd.f32 0.0, %v4011
      %v4013 = vpop.f32.mrb[0].mxu0
      %4014 = vmatprep.mubr.f32.mxu0 0.0
      %4015 = vmatmul.mubr.f32.gmra.mrb[0].mxu0 %v3873
      %v4016 = vpop.f32.mrb[0].mxu0
      %v4017 = vadd.f32 0.0, %v4016
      %v4018 = vpop.f32.mrb[0].mxu0
      %4019 = vdwg.mxu0
      %v4020 = vld [vmem:[%s5] sm:$0xff]
      %v4021 = vld [vmem:[%s5 + $0x8] sm:$0xff]
      %4022 = vmatprep.subr.mxu0 0.0
      %4023 = vmatpush1.msra.mxu0 %v4020
      %4024 = vmatprep.subr.mxu0 0.0
      %4025 = vmatpush1.msra.mxu0 %v4021
      %4026 = vmatprep.subr.mxu0 0.0
      %4027 = vmatpush1.msra.mxu0 0.0
      %4028 = vmatprep.subr.mxu0 0.0
      %4029 = vmatpush1.msra.mxu0 0.0
      %4030 = vmatprep.subr.mxu0 0.0
      %4031 = vmatpush1.msra.mxu0 0.0
      %4032 = vmatprep.subr.mxu0 0.0
      %4033 = vmatpush1.msra.mxu0 0.0
      %4034 = vmatprep.subr.mxu0 0.0
      %4035 = vmatpush1.msra.mxu0 0.0
      %4036 = vmatprep.subr.mxu0 0.0
      %4037 = vmatpush1.msra.mxu0 0.0
      %4038 = vmatprep.subr.mxu0 0.0
      %4039 = vmatpush1.msra.mxu0 0.0
      %4040 = vmatprep.subr.mxu0 0.0
      %4041 = vmatpush1.msra.mxu0 0.0
      %4042 = vmatprep.subr.mxu0 0.0
      %4043 = vmatpush1.msra.mxu0 0.0
      %4044 = vmatprep.subr.mxu0 0.0
      %4045 = vmatpush1.msra.mxu0 0.0
      %4046 = vmatprep.subr.mxu0 0.0
      %4047 = vmatpush1.msra.mxu0 0.0
      %4048 = vmatprep.subr.mxu0 0.0
      %4049 = vmatpush1.msra.mxu0 0.0
      %4050 = vmatprep.subr.mxu0 0.0
      %4051 = vmatpush1.msra.mxu0 0.0
      %4052 = vmatprep.subr.mxu0 0.0
      %4053 = vmatpush1.msra.mxu0 0.0
      %4054 = vmatprep.subr.mxu0 0.0
      %4055 = vmatpush1.msra.mxu0 0.0
      %4056 = vmatprep.subr.mxu0 0.0
      %4057 = vmatpush1.msra.mxu0 0.0
      %4058 = vmatprep.subr.mxu0 0.0
      %4059 = vmatpush1.msra.mxu0 0.0
      %4060 = vmatprep.subr.mxu0 0.0
      %4061 = vmatpush1.msra.mxu0 0.0
      %4062 = vmatprep.subr.mxu0 0.0
      %4063 = vmatpush1.msra.mxu0 0.0
      %4064 = vmatprep.subr.mxu0 0.0
      %4065 = vmatpush1.msra.mxu0 0.0
      %4066 = vmatprep.subr.mxu0 0.0
      %4067 = vmatpush1.msra.mxu0 0.0
      %4068 = vmatprep.subr.mxu0 0.0
      %4069 = vmatpush1.msra.mxu0 0.0
      %4070 = vmatprep.subr.mxu0 0.0
      %4071 = vmatpush1.msra.mxu0 0.0
      %4072 = vmatprep.subr.mxu0 0.0
      %4073 = vmatpush1.msra.mxu0 0.0
      %4074 = vmatprep.subr.mxu0 0.0
      %4075 = vmatpush1.msra.mxu0 0.0
      %4076 = vmatprep.subr.mxu0 0.0
      %4077 = vmatpush1.msra.mxu0 0.0
      %4078 = vmatprep.subr.mxu0 0.0
      %4079 = vmatpush1.msra.mxu0 0.0
      %4080 = vmatprep.subr.mxu0 0.0
      %4081 = vmatpush1.msra.mxu0 0.0
      %4082 = vmatprep.subr.mxu0 0.0
      %4083 = vmatpush1.msra.mxu0 0.0
      %4084 = vmatprep.subr.mxu0 0.0
      %4085 = vmatpush1.msra.mxu0 0.0
      %4086 = vmatprep.mubr.f32.mxu0 0.0
      %4087 = vmatmul.mubr.f32.gmra.mrb[0].mxu0 %v3828
      %v4088 = vpop.f32.mrb[0].mxu0
      %v4089 = vadd.f32 0.0, %v4088
      %v4090 = vpop.f32.mrb[0].mxu0
      %4091 = vmatprep.mubr.f32.mxu0 0.0
      %4092 = vmatmul.mubr.f32.gmra.mrb[0].mxu0 %v3831
      %v4093 = vpop.f32.mrb[0].mxu0
      %v4094 = vadd.f32 0.0, %v4093
      %v4095 = vpop.f32.mrb[0].mxu0
      %4096 = vmatprep.mubr.f32.mxu0 0.0
      %4097 = vmatmul.mubr.f32.gmra.mrb[0].mxu0 %v3834
      %v4098 = vpop.f32.mrb[0].mxu0
      %v4099 = vadd.f32 0.0, %v4098
      %v4100 = vpop.f32.mrb[0].mxu0
      %4101 = vmatprep.mubr.f32.mxu0 0.0
      %4102 = vmatmul.mubr.f32.gmra.mrb[0].mxu0 %v3837
      %v4103 = vpop.f32.mrb[0].mxu0
      %v4104 = vadd.f32 0.0, %v4103
      %v4105 = vpop.f32.mrb[0].mxu0
      %4106 = vmatprep.mubr.f32.mxu0 0.0
      %4107 = vmatmul.mubr.f32.gmra.mrb[0].mxu0 %v3840
      %v4108 = vpop.f32.mrb[0].mxu0
      %v4109 = vadd.f32 0.0, %v4108
      %v4110 = vpop.f32.mrb[0].mxu0
      %4111 = vmatprep.mubr.f32.mxu0 0.0
      %4112 = vmatmul.mubr.f32.gmra.mrb[0].mxu0 %v3843
      %v4113 = vpop.f32.mrb[0].mxu0
      %v4114 = vadd.f32 0.0, %v4113
      %v4115 = vpop.f32.mrb[0].mxu0
      %4116 = vmatprep.mubr.f32.mxu0 0.0
      %4117 = vmatmul.mubr.f32.gmra.mrb[0].mxu0 %v3846
      %v4118 = vpop.f32.mrb[0].mxu0
      %v4119 = vadd.f32 0.0, %v4118
      %v4120 = vpop.f32.mrb[0].mxu0
      %4121 = vmatprep.mubr.f32.mxu0 0.0
      %4122 = vmatmul.mubr.f32.gmra.mrb[0].mxu0 %v3849
      %v4123 = vpop.f32.mrb[0].mxu0
      %v4124 = vadd.f32 0.0, %v4123
      %v4125 = vpop.f32.mrb[0].mxu0
      %4126 = vmatprep.mubr.f32.mxu0 0.0
      %4127 = vmatmul.mubr.f32.gmra.mrb[0].mxu0 %v3852
      %v4128 = vpop.f32.mrb[0].mxu0
      %v4129 = vadd.f32 0.0, %v4128
      %v4130 = vpop.f32.mrb[0].mxu0
      %4131 = vmatprep.mubr.f32.mxu0 0.0
      %4132 = vmatmul.mubr.f32.gmra.mrb[0].mxu0 %v3855
      %v4133 = vpop.f32.mrb[0].mxu0
      %v4134 = vadd.f32 0.0, %v4133
      %v4135 = vpop.f32.mrb[0].mxu0
      %4136 = vmatprep.mubr.f32.mxu0 0.0
      %4137 = vmatmul.mubr.f32.gmra.mrb[0].mxu0 %v3858
      %v4138 = vpop.f32.mrb[0].mxu0
      %v4139 = vadd.f32 0.0, %v4138
      %v4140 = vpop.f32.mrb[0].mxu0
      %4141 = vmatprep.mubr.f32.mxu0 0.0
      %4142 = vmatmul.mubr.f32.gmra.mrb[0].mxu0 %v3861
      %v4143 = vpop.f32.mrb[0].mxu0
      %v4144 = vadd.f32 0.0, %v4143
      %v4145 = vpop.f32.mrb[0].mxu0
      %4146 = vmatprep.mubr.f32.mxu0 0.0
      %4147 = vmatmul.mubr.f32.gmra.mrb[0].mxu0 %v3864
      %v4148 = vpop.f32.mrb[0].mxu0
      %v4149 = vadd.f32 0.0, %v4148
      %v4150 = vpop.f32.mrb[0].mxu0
      %4151 = vmatprep.mubr.f32.mxu0 0.0
      %4152 = vmatmul.mubr.f32.gmra.mrb[0].mxu0 %v3867
      %v4153 = vpop.f32.mrb[0].mxu0
      %v4154 = vadd.f32 0.0, %v4153
      %v4155 = vpop.f32.mrb[0].mxu0
      %4156 = vmatprep.mubr.f32.mxu0 0.0
      %4157 = vmatmul.mubr.f32.gmra.mrb[0].mxu0 %v3870
      %v4158 = vpop.f32.mrb[0].mxu0
      %v4159 = vadd.f32 0.0, %v4158
      %v4160 = vpop.f32.mrb[0].mxu0
      %4161 = vmatprep.mubr.f32.mxu0 0.0
      %4162 = vmatmul.mubr.f32.gmra.mrb[0].mxu0 %v3873
      %v4163 = vpop.f32.mrb[0].mxu0
      %v4164 = vadd.f32 0.0, %v4163
      %v4165 = vpop.f32.mrb[0].mxu0
      %4166 = vdwg.mxu0
      %v4167 = vmax.f32 %v3942, %v4089
      %v4168 = vmax.f32 %v3947, %v4094
      %v4169 = vmax.f32 %v3952, %v4099
      %v4170 = vmax.f32 %v3957, %v4104
      %v4171 = vmax.f32 %v3962, %v4109
      %v4172 = vmax.f32 %v3967, %v4114
      %v4173 = vmax.f32 %v3972, %v4119
      %v4174 = vmax.f32 %v3977, %v4124
      %v4175 = vmax.f32 %v3982, %v4129
      %v4176 = vmax.f32 %v3987, %v4134
      %v4177 = vmax.f32 %v3992, %v4139
      %v4178 = vmax.f32 %v3997, %v4144
      %v4179 = vmax.f32 %v4002, %v4149
      %v4180 = vmax.f32 %v4007, %v4154
      %v4181 = vmax.f32 %v4012, %v4159
      %v4182 = vmax.f32 %v4017, %v4164
      %v4183 = vld [vmem:[%s6] sm:$0xff]
      %v4184 = vld [vmem:[%s6 + $0x8] sm:$0xff]
      %v4185 = vld [vmem:[%s6 + $0x10] sm:$0xff]
      %v4186 = vld [vmem:[%s6 + $0x18] sm:$0xff]
      %v4187 = vld [vmem:[%s6 + $0x20] sm:$0xff]
      %v4188 = vld [vmem:[%s6 + $0x28] sm:$0xff]
      %v4189 = vld [vmem:[%s6 + $0x30] sm:$0xff]
      %v4190 = vld [vmem:[%s6 + $0x38] sm:$0xff]
      %4191 = vmatprep.subr.mxu0 0.0
      %4192 = vmatpush1.msra.mxu0 %v4167
      %4193 = vmatprep.subr.mxu0 0.0
      %4194 = vmatpush1.msra.mxu0 %v4168
      %4195 = vmatprep.subr.mxu0 0.0
      %4196 = vmatpush1.msra.mxu0 %v4169
      %4197 = vmatprep.subr.mxu0 0.0
      %4198 = vmatpush1.msra.mxu0 %v4170
      %4199 = vmatprep.subr.mxu0 0.0
      %4200 = vmatpush1.msra.mxu0 %v4171
      %4201 = vmatprep.subr.mxu0 0.0
      %4202 = vmatpush1.msra.mxu0 %v4172
      %4203 = vmatprep.subr.mxu0 0.0
      %4204 = vmatpush1.msra.mxu0 %v4173
      %4205 = vmatprep.subr.mxu0 0.0
      %4206 = vmatpush1.msra.mxu0 %v4174
      %4207 = vmatprep.subr.mxu0 0.0
      %4208 = vmatpush1.msra.mxu0 %v4175
      %4209 = vmatprep.subr.mxu0 0.0
      %4210 = vmatpush1.msra.mxu0 %v4176
      %4211 = vmatprep.subr.mxu0 0.0
      %4212 = vmatpush1.msra.mxu0 %v4177
      %4213 = vmatprep.subr.mxu0 0.0
      %4214 = vmatpush1.msra.mxu0 %v4178
      %4215 = vmatprep.subr.mxu0 0.0
      %4216 = vmatpush1.msra.mxu0 %v4179
      %4217 = vmatprep.subr.mxu0 0.0
      %4218 = vmatpush1.msra.mxu0 %v4180
      %4219 = vmatprep.subr.mxu0 0.0
      %4220 = vmatpush1.msra.mxu0 %v4181
      %4221 = vmatprep.subr.mxu0 0.0
      %4222 = vmatpush1.msra.mxu0 %v4182
      %4223 = vmatprep.subr.mxu0 0.0
      %4224 = vmatpush1.msra.mxu0 0.0
      %4225 = vmatprep.subr.mxu0 0.0
      %4226 = vmatpush1.msra.mxu0 0.0
      %4227 = vmatprep.subr.mxu0 0.0
      %4228 = vmatpush1.msra.mxu0 0.0
      %4229 = vmatprep.subr.mxu0 0.0
      %4230 = vmatpush1.msra.mxu0 0.0
      %4231 = vmatprep.subr.mxu0 0.0
      %4232 = vmatpush1.msra.mxu0 0.0
      %4233 = vmatprep.subr.mxu0 0.0
      %4234 = vmatpush1.msra.mxu0 0.0
      %4235 = vmatprep.subr.mxu0 0.0
      %4236 = vmatpush1.msra.mxu0 0.0
      %4237 = vmatprep.subr.mxu0 0.0
      %4238 = vmatpush1.msra.mxu0 0.0
      %4239 = vmatprep.subr.mxu0 0.0
      %4240 = vmatpush1.msra.mxu0 0.0
      %4241 = vmatprep.subr.mxu0 0.0
      %4242 = vmatpush1.msra.mxu0 0.0
      %4243 = vmatprep.subr.mxu0 0.0
      %4244 = vmatpush1.msra.mxu0 0.0
      %4245 = vmatprep.subr.mxu0 0.0
      %4246 = vmatpush1.msra.mxu0 0.0
      %4247 = vmatprep.subr.mxu0 0.0
      %4248 = vmatpush1.msra.mxu0 0.0
      %4249 = vmatprep.subr.mxu0 0.0
      %4250 = vmatpush1.msra.mxu0 0.0
      %4251 = vmatprep.subr.mxu0 0.0
      %4252 = vmatpush1.msra.mxu0 0.0
      %4253 = vmatprep.subr.mxu0 0.0
      %4254 = vmatpush1.msra.mxu0 0.0
      %4255 = vmatprep.mubr.f32.mxu0 0.0
      %4256 = vmatmul.mubr.f32.gmra.mrb[0].mxu0 %v4183
      %v4257 = vpop.f32.mrb[0].mxu0
      %v4258 = vadd.f32 0.0, %v4257
      %v4259 = vpop.f32.mrb[0].mxu0
      %4260 = vmatprep.mubr.f32.mxu0 0.0
      %4261 = vmatmul.mubr.f32.gmra.mrb[0].mxu0 %v4184
      %v4262 = vpop.f32.mrb[0].mxu0
      %v4263 = vadd.f32 0.0, %v4262
      %v4264 = vpop.f32.mrb[0].mxu0
      %4265 = vmatprep.mubr.f32.mxu0 0.0
      %4266 = vmatmul.mubr.f32.gmra.mrb[0].mxu0 %v4185
      %v4267 = vpop.f32.mrb[0].mxu0
      %v4268 = vadd.f32 0.0, %v4267
      %v4269 = vpop.f32.mrb[0].mxu0
      %4270 = vmatprep.mubr.f32.mxu0 0.0
      %4271 = vmatmul.mubr.f32.gmra.mrb[0].mxu0 %v4186
      %v4272 = vpop.f32.mrb[0].mxu0
      %v4273 = vadd.f32 0.0, %v4272
      %v4274 = vpop.f32.mrb[0].mxu0
      %4275 = vmatprep.mubr.f32.mxu0 0.0
      %4276 = vmatmul.mubr.f32.gmra.mrb[0].mxu0 %v4187
      %v4277 = vpop.f32.mrb[0].mxu0
      %v4278 = vadd.f32 0.0, %v4277
      %v4279 = vpop.f32.mrb[0].mxu0
      %4280 = vmatprep.mubr.f32.mxu0 0.0
      %4281 = vmatmul.mubr.f32.gmra.mrb[0].mxu0 %v4188
      %v4282 = vpop.f32.mrb[0].mxu0
      %v4283 = vadd.f32 0.0, %v4282
      %v4284 = vpop.f32.mrb[0].mxu0
      %4285 = vmatprep.mubr.f32.mxu0 0.0
      %4286 = vmatmul.mubr.f32.gmra.mrb[0].mxu0 %v4189
      %v4287 = vpop.f32.mrb[0].mxu0
      %v4288 = vadd.f32 0.0, %v4287
      %v4289 = vpop.f32.mrb[0].mxu0
      %4290 = vmatprep.mubr.f32.mxu0 0.0
      %4291 = vmatmul.mubr.f32.gmra.mrb[0].mxu0 %v4190
      %v4292 = vpop.f32.mrb[0].mxu0
      %v4293 = vadd.f32 0.0, %v4292
      %v4294 = vpop.f32.mrb[0].mxu0
      %4295 = vdwg.mxu0
      %v4296 = vld [vmem:[%s7] sm:$0xff]
      %v4297 = vld [vmem:[%s7 + $0x8] sm:$0xff]
      %v4298 = vld [vmem:[%s7 + $0x10] sm:$0xff]
      %v4299 = vld [vmem:[%s7 + $0x18] sm:$0xff]
      %v4300 = vld [vmem:[%s7 + $0x20] sm:$0xff]
      %v4301 = vld [vmem:[%s7 + $0x28] sm:$0xff]
      %v4302 = vld [vmem:[%s7 + $0x30] sm:$0xff]
      %v4303 = vld [vmem:[%s7 + $0x38] sm:$0xff]
      %4304 = vmatprep.subr.mxu0 0.0
      %4305 = vmatpush1.msra.mxu0 %v4167
      %4306 = vmatprep.subr.mxu0 0.0
      %4307 = vmatpush1.msra.mxu0 %v4168
      %4308 = vmatprep.subr.mxu0 0.0
      %4309 = vmatpush1.msra.mxu0 %v4169
      %4310 = vmatprep.subr.mxu0 0.0
      %4311 = vmatpush1.msra.mxu0 %v4170
      %4312 = vmatprep.subr.mxu0 0.0
      %4313 = vmatpush1.msra.mxu0 %v4171
      %4314 = vmatprep.subr.mxu0 0.0
      %4315 = vmatpush1.msra.mxu0 %v4172
      %4316 = vmatprep.subr.mxu0 0.0
      %4317 = vmatpush1.msra.mxu0 %v4173
      %4318 = vmatprep.subr.mxu0 0.0
      %4319 = vmatpush1.msra.mxu0 %v4174
      %4320 = vmatprep.subr.mxu0 0.0
      %4321 = vmatpush1.msra.mxu0 %v4175
      %4322 = vmatprep.subr.mxu0 0.0
      %4323 = vmatpush1.msra.mxu0 %v4176
      %4324 = vmatprep.subr.mxu0 0.0
      %4325 = vmatpush1.msra.mxu0 %v4177
      %4326 = vmatprep.subr.mxu0 0.0
      %4327 = vmatpush1.msra.mxu0 %v4178
      %4328 = vmatprep.subr.mxu0 0.0
      %4329 = vmatpush1.msra.mxu0 %v4179
      %4330 = vmatprep.subr.mxu0 0.0
      %4331 = vmatpush1.msra.mxu0 %v4180
      %4332 = vmatprep.subr.mxu0 0.0
      %4333 = vmatpush1.msra.mxu0 %v4181
      %4334 = vmatprep.subr.mxu0 0.0
      %4335 = vmatpush1.msra.mxu0 %v4182
      %4336 = vmatprep.subr.mxu0 0.0
      %4337 = vmatpush1.msra.mxu0 0.0
      %4338 = vmatprep.subr.mxu0 0.0
      %4339 = vmatpush1.msra.mxu0 0.0
      %4340 = vmatprep.subr.mxu0 0.0
      %4341 = vmatpush1.msra.mxu0 0.0
      %4342 = vmatprep.subr.mxu0 0.0
      %4343 = vmatpush1.msra.mxu0 0.0
      %4344 = vmatprep.subr.mxu0 0.0
      %4345 = vmatpush1.msra.mxu0 0.0
      %4346 = vmatprep.subr.mxu0 0.0
      %4347 = vmatpush1.msra.mxu0 0.0
      %4348 = vmatprep.subr.mxu0 0.0
      %4349 = vmatpush1.msra.mxu0 0.0
      %4350 = vmatprep.subr.mxu0 0.0
      %4351 = vmatpush1.msra.mxu0 0.0
      %4352 = vmatprep.subr.mxu0 0.0
      %4353 = vmatpush1.msra.mxu0 0.0
      %4354 = vmatprep.subr.mxu0 0.0
      %4355 = vmatpush1.msra.mxu0 0.0
      %4356 = vmatprep.subr.mxu0 0.0
      %4357 = vmatpush1.msra.mxu0 0.0
      %4358 = vmatprep.subr.mxu0 0.0
      %4359 = vmatpush1.msra.mxu0 0.0
      %4360 = vmatprep.subr.mxu0 0.0
      %4361 = vmatpush1.msra.mxu0 0.0
      %4362 = vmatprep.subr.mxu0 0.0
      %4363 = vmatpush1.msra.mxu0 0.0
      %4364 = vmatprep.subr.mxu0 0.0
      %4365 = vmatpush1.msra.mxu0 0.0
      %4366 = vmatprep.subr.mxu0 0.0
      %4367 = vmatpush1.msra.mxu0 0.0
      %4368 = vmatprep.mubr.f32.mxu0 0.0
      %4369 = vmatmul.mubr.f32.gmra.mrb[0].mxu0 %v4296
      %v4370 = vpop.f32.mrb[0].mxu0
      %v4371 = vadd.f32 0.0, %v4370
      %v4372 = vpop.f32.mrb[0].mxu0
      %4373 = vmatprep.mubr.f32.mxu0 0.0
      %4374 = vmatmul.mubr.f32.gmra.mrb[0].mxu0 %v4297
      %v4375 = vpop.f32.mrb[0].mxu0
      %v4376 = vadd.f32 0.0, %v4375
      %v4377 = vpop.f32.mrb[0].mxu0
      %4378 = vmatprep.mubr.f32.mxu0 0.0
      %4379 = vmatmul.mubr.f32.gmra.mrb[0].mxu0 %v4298
      %v4380 = vpop.f32.mrb[0].mxu0
      %v4381 = vadd.f32 0.0, %v4380
      %v4382 = vpop.f32.mrb[0].mxu0
      %4383 = vmatprep.mubr.f32.mxu0 0.0
      %4384 = vmatmul.mubr.f32.gmra.mrb[0].mxu0 %v4299
      %v4385 = vpop.f32.mrb[0].mxu0
      %v4386 = vadd.f32 0.0, %v4385
      %v4387 = vpop.f32.mrb[0].mxu0
      %4388 = vmatprep.mubr.f32.mxu0 0.0
      %4389 = vmatmul.mubr.f32.gmra.mrb[0].mxu0 %v4300
      %v4390 = vpop.f32.mrb[0].mxu0
      %v4391 = vadd.f32 0.0, %v4390
      %v4392 = vpop.f32.mrb[0].mxu0
      %4393 = vmatprep.mubr.f32.mxu0 0.0
      %4394 = vmatmul.mubr.f32.gmra.mrb[0].mxu0 %v4301
      %v4395 = vpop.f32.mrb[0].mxu0
      %v4396 = vadd.f32 0.0, %v4395
      %v4397 = vpop.f32.mrb[0].mxu0
      %4398 = vmatprep.mubr.f32.mxu0 0.0
      %4399 = vmatmul.mubr.f32.gmra.mrb[0].mxu0 %v4302
      %v4400 = vpop.f32.mrb[0].mxu0
      %v4401 = vadd.f32 0.0, %v4400
      %v4402 = vpop.f32.mrb[0].mxu0
      %4403 = vmatprep.mubr.f32.mxu0 0.0
      %4404 = vmatmul.mubr.f32.gmra.mrb[0].mxu0 %v4303
      %v4405 = vpop.f32.mrb[0].mxu0
      %v4406 = vadd.f32 0.0, %v4405
      %v4407 = vpop.f32.mrb[0].mxu0
      %4408 = vdwg.mxu0
      %v4409 = vmax.f32 %v4258, %v4371
      %v4410 = vmax.f32 %v4263, %v4376
      %v4411 = vmax.f32 %v4268, %v4381
      %v4412 = vmax.f32 %v4273, %v4386
      %v4413 = vmax.f32 %v4278, %v4391
      %v4414 = vmax.f32 %v4283, %v4396
      %v4415 = vmax.f32 %v4288, %v4401
      %v4416 = vmax.f32 %v4293, %v4406
      %vm4417 = vcmask 64512
      %4418 = vst.msk [vmem:[%s467] sm:$0xff] %vm4417, %v4409
      %4419 = vst.msk [vmem:[%s467 + $0x8] sm:$0xff] %vm4417, %v4410
      %4420 = vst.msk [vmem:[%s467 + $0x10] sm:$0xff] %vm4417, %v4411
      %4421 = vst.msk [vmem:[%s467 + $0x18] sm:$0xff] %vm4417, %v4412
      %4422 = vst.msk [vmem:[%s467 + $0x20] sm:$0xff] %vm4417, %v4413
      %4423 = vst.msk [vmem:[%s467 + $0x28] sm:$0xff] %vm4417, %v4414
      %4424 = vst.msk [vmem:[%s467 + $0x30] sm:$0xff] %vm4417, %v4415
      %4425 = vst.msk [vmem:[%s467 + $0x38] sm:$0xff] %vm4417, %v4416
      %p4426 = scmp.lt.s32.totalorder %s25, 1
      %s4427 = scalar_select %p4426, %s25, 1
      %s4428 = smul.addr %s4427, 8
      %s4429 = smul.addr %s4428, 8
      %s4430 = scalar_lea.vmem %s14, %s4429
      // Predicated region
      $region77: #{tpu_custom_call.1} parent=75 // pred_check
        %p4431 = pneg %p342
      $region78: #{tpu_custom_call.1} parent=75 // pred_check_branch
        %4433 = sbr.rel (%p4431) target = $region80
      $region79: #{tpu_custom_call.1} parent=75 // pred_region
        _
      $region80: #{tpu_custom_call.1} parent=75 // pred_fallthru
        _
    $region76: #{tpu_custom_call.1} parent=5 // pred_fallthru
      _
    %p4434 = scmp.le.s32.totalorder 2, %s20
    // Predicated region
    $region81: #{tpu_custom_call.1} parent=5 // pred_check
      %p4435 = pneg %p4434
    $region82: #{tpu_custom_call.1} parent=5 // pred_check_branch
      %4437 = sbr.rel (%p4435) target = $region84
    $region83: #{tpu_custom_call.1} parent=5 // pred_region
      %s4438 = ssub.s32 %s20, 2
      // Predicated region
      $region85: #{tpu_custom_call.1} parent=83 // pred_check
        %p4439 = pneg %p348
      $region86: #{tpu_custom_call.1} parent=83 // pred_check_branch
        %4441 = sbr.rel (%p4439) target = $region88
      $region87: #{tpu_custom_call.1} parent=83 // pred_region
        %p4442 = scmp.lt.s32.totalorder %s26, 1
        %s4443 = scalar_select %p4442, %s26, 1
        %s4444 = smul.addr %s4443, 8
        %s4445 = smul.addr %s4444, 8
        %s4446 = scalar_lea.vmem %s14, %s4445
      $region88: #{tpu_custom_call.1} parent=83 // pred_fallthru
        _
    $region84: #{tpu_custom_call.1} parent=5 // pred_fallthru
      _
  $region6: #{tpu_custom_call.1} parent=0 // loop_footer
    %s24 = sadd.s32 1, %s20
  $region7: #{tpu_custom_call.1} parent=0 // loop_footer_branch
    %19 = sbr.rel target = $region3
  $region8: #{tpu_custom_call.1} parent=0 // loop_exit
    _

</llo_original>
